<compile_context>
chip_gen: v7x
topology: tpu7x:2x2x1
jax: 0.10.0
libtpu: 0.0.40
codegen_flags: <defaults>
</compile_context>

<pallas_src>
import functools

import jax
import jax.numpy as jnp
import numpy as np
from jax import lax
from jax.experimental import pallas as pl
from jax.experimental.pallas import tpu as pltpu

MAXPAD = 3                 # zero padding each side for the largest kernel (7)
NTAPS = 2 * MAXPAD + 1     # 7 tap offsets shared by all three kernel sizes
KSIZES = (3, 5, 7)


# --------------------------------------------------------------- fused kernel
def _forward_kernel(f_ref, r_ref, wconv_ref, bconv_ref, whead_ref, bhead_ref,
                    out_ref, *, V, L):
    """One batch row per grid step, whole forward path.

    f_ref, r_ref : (1, V, L)        native NCW primer blocks for this batch row
    wconv_ref    : (7, 6V, 2V)      fused conv weight, one block per tap offset
    bconv_ref    : (6V, 1)          conv biases [f3|f5|f7|r3|r5|r7]
    whead_ref    : (6V, L)          collapsed dense head (wo @ wh), channels-first
    bhead_ref    : (1, 1)           collapsed dense head bias
    out_ref      : (1, 1, 1)        this batch row's scalar output
    """
    # Stack both primers on the channel (sublane) axis; keeping the PyTorch
    # channels-first orientation means no in-kernel transpose is needed.
    x = jnp.concatenate([f_ref[0], r_ref[0]], axis=0)                # (2V, L)

    # Zero-pad the sequence (lane) axis once for the largest kernel.
    zpad = jnp.zeros((2 * V, MAXPAD), jnp.float32)
    xpad = jnp.concatenate([zpad, x, zpad], axis=1)                  # (2V, L+6)

    # All six convolutions (both primers, k = 3/5/7), accumulated over the 7
    # tap offsets: 7 tiny MXU pushes, no im2col buffer, no sublane relayouts.
    acc = jnp.zeros((6 * V, L), jnp.float32)
    for k in range(NTAPS):                                           # static
        acc = acc + jnp.dot(wconv_ref[k], xpad[:, k:k + L],
                            preferred_element_type=jnp.float32,
                            precision=lax.Precision.HIGHEST)
    act = jnp.maximum(acc + bconv_ref[...], 0.0)                     # (6V, L)

    # Collapsed dense head: out[b] = sum_{c,l} act[c,l] * w_head[c,l] + b_head.
    # TODO(synk): nn.Dropout is identity (eval mode); collapsing dense_hidn ->
    # dense_out1 offline is valid only because no nonlinearity sits between
    # the two Linear layers in the PyTorch forward.
    per_ch = jnp.sum(act * whead_ref[...], axis=1, keepdims=True)    # (6V, 1)
    tot = jnp.sum(per_ch, axis=0, keepdims=True)                     # (1, 1)
    out_ref[0] = tot + bhead_ref[...]


# ------------------------------------------------------------------- wrapper
def multi_input_cnn_forward(fprimer, rprimer, kparams):
    """fprimer, rprimer: (B, V, L) float32, PyTorch NCW layout -> (B, 1)."""
    B, V, L = fprimer.shape
    out = pl.pallas_call(
        functools.partial(_forward_kernel, V=V, L=L),
        out_shape=jax.ShapeDtypeStruct((B, 1, 1), jnp.float32),
        grid_spec=pltpu.PrefetchScalarGridSpec(
            num_scalar_prefetch=0,
            grid=(B,),                                   # one batch row / step
            in_specs=[
                pl.BlockSpec((1, V, L), lambda b: (b, 0, 0)),          # fprimer
                pl.BlockSpec((1, V, L), lambda b: (b, 0, 0)),          # rprimer
                pl.BlockSpec((NTAPS, 6 * V, 2 * V), lambda b: (0, 0, 0)),
                pl.BlockSpec((6 * V, 1), lambda b: (0, 0)),
                pl.BlockSpec((6 * V, L), lambda b: (0, 0)),
                pl.BlockSpec((1, 1), lambda b: (0, 0)),
            ],
            out_specs=pl.BlockSpec((1, 1, 1), lambda b: (b, 0, 0)),
        ),
        # "parallel" batch grid: 2nd TensorCore on v7x, harmless serial loop
        # on single-core v5e/v6e.  Whole working set is a few KiB, so no VMEM
        # limit tuning is needed on any generation.
        compiler_params=pltpu.CompilerParams(
            dimension_semantics=("parallel",)),
    )(fprimer, rprimer, kparams["w_conv"], kparams["b_conv"],
      kparams["w_head"], kparams["b_head"])
    # (B, 1, 1) -> (B, 1): metadata-only reshape to match the module's output.
    return out.reshape(B, 1)


# --------------------------------------------------- offline parameter folding
def prepare_kernel_params(p):
    """Fold torch-layout parameters into the fused kernel layout (one-time)."""
    hi = lax.Precision.HIGHEST
    V = p["wf1"].shape[0]
    _, D = p["wh"].shape
    L = D // (6 * V)

    # Fused conv weight, one (6V, 2V) block per global tap offset k in [0, 7):
    #   rows = out channel [f_k3 | f_k5 | f_k7 | r_k3 | r_k5 | r_k7]  (V each)
    #   cols = in  channel [f (V) | r (V)]
    w_conv = np.zeros((NTAPS, 6 * V, 2 * V), np.float32)
    f_ws = (p["wf1"], p["wf2"], p["wf3"])
    r_ws = (p["wr1"], p["wr2"], p["wr3"])
    for j, K in enumerate(KSIZES):
        pad = (K - 1) // 2
        wf = np.asarray(f_ws[j])          # (V_out, V_in, K) torch layout
        wr = np.asarray(r_ws[j])
        for t in range(K):
            k = t - pad + MAXPAD          # global tap index
            w_conv[k, j * V:(j + 1) * V, :V] = wf[:, :, t]
            w_conv[k, (3 + j) * V:(4 + j) * V, V:] = wr[:, :, t]

    b_conv = jnp.concatenate([p["bf1"], p["bf2"], p["bf3"],
                              p["br1"], p["br2"], p["br3"]]).reshape(6 * V, 1)

    # Collapse dense_hidn -> dropout(identity) -> dense_out1 into one (6V, L)
    # channels-first weight + scalar bias (HIGHEST here is offline prep).
    w_comb = jnp.dot(p["wo"], p["wh"], precision=hi).reshape(-1)      # (D,)
    b_head = (jnp.dot(p["wo"], p["bh"], precision=hi)
              + p["bo"]).reshape(1, 1)                                # (1, 1)
    w_head = w_comb.reshape(6 * V, L)     # matches act's (channel, position)

    return {"w_conv": jnp.asarray(w_conv), "b_conv": b_conv,
            "w_head": w_head, "b_head": b_head}


# --------------------------------------------------------- pure-JAX reference
def ref_forward(fprimer, rprimer, p):
    """Reference in the original (uncollapsed) layer order, HIGHEST precision."""
    hi = lax.Precision.HIGHEST

    def conv(x, w, b, K):
        pad = (K - 1) // 2
        y = lax.conv_general_dilated(x, w, (1,), [(pad, pad)],
                                     dimension_numbers=("NCH", "OIH", "NCH"),
                                     precision=hi)
        return jax.nn.relu(y + b.reshape(1, -1, 1))

    def branch(x, w1, b1, w2, b2, w3, b3):
        y = jnp.concatenate([conv(x, w1, b1, 3), conv(x, w2, b2, 5),
                             conv(x, w3, b3, 7)], axis=1)
        return y.reshape(y.shape[0], -1)

    f = branch(fprimer, p["wf1"], p["bf1"], p["wf2"], p["bf2"], p["wf3"], p["bf3"])
    r = branch(rprimer, p["wr1"], p["br1"], p["wr2"], p["br2"], p["wr3"], p["br3"])
    feat = jnp.concatenate([f, r], axis=1)
    h = jnp.dot(feat, p["wh"].T, precision=hi) + p["bh"]     # dense_hidn
    return jnp.dot(h, p["wo"].T, precision=hi) + p["bo"]     # dense_out1


# ------------------------------------------------------------------------ main
if __name__ == "__main__":
    # Small shapes consistent with the module: seq_len == input_dim.
    B, V, L, H = 2, 4, 16, 32          # batch, vocab_size, input_dim, hidn_dim
    D = 3 * V * 2 * L                  # dense_hidn input features = 384

    key = jax.random.PRNGKey(0)
    ks = jax.random.split(key, 18)

    def init(k, shape, scale=0.1):
        return (scale * jax.random.normal(k, shape)).astype(jnp.float32)

    # Parameters in torch layout: Conv1d weight (out, in, K), Linear (out, in).
    params = {
        "wf1": init(ks[0], (V, V, 3)), "bf1": init(ks[1], (V,)),
        "wf2": init(ks[2], (V, V, 5)), "bf2": init(ks[3], (V,)),
        "wf3": init(ks[4], (V, V, 7)), "bf3": init(ks[5], (V,)),
        "wr1": init(ks[6], (V, V, 3)), "br1": init(ks[7], (V,)),
        "wr2": init(ks[8], (V, V, 5)), "br2": init(ks[9], (V,)),
        "wr3": init(ks[10], (V, V, 7)), "br3": init(ks[11], (V,)),
        "wh": init(ks[12], (H, D)), "bh": init(ks[13], (H,)),
        "wo": init(ks[14], (1, H)), "bo": init(ks[15], (1,)),
    }
    kparams = prepare_kernel_params(params)

    # One-hot primer sequences, PyTorch NCW layout (B, vocab, seq_len).
    f_ids = jax.random.randint(ks[16], (B, L), 0, V)
    r_ids = jax.random.randint(ks[17], (B, L), 0, V)
    fprimer = jnp.transpose(jax.nn.one_hot(f_ids, V, dtype=jnp.float32), (0, 2, 1))
    rprimer = jnp.transpose(jax.nn.one_hot(r_ids, V, dtype=jnp.float32), (0, 2, 1))

    fwd = jax.jit(multi_input_cnn_forward)
    out = jax.block_until_ready(fwd(fprimer, rprimer, kparams))

    ref = jax.block_until_ready(ref_forward(fprimer, rprimer, params))
    assert out.shape == (B, 1), out.shape
    np.testing.assert_allclose(np.asarray(out), np.asarray(ref),
                               rtol=2e-3, atol=2e-3)

    print("KERNEL_OK")
</pallas_src>

<mosaic_0001>
module attributes {stable_mosaic.version = 11 : i64} {
  func.func @_forward_kernel(%arg0: i32, %arg1: memref<1x4x16xf32, #tpu.memory_space<vmem>>, %arg2: memref<1x4x16xf32, #tpu.memory_space<vmem>>, %arg3: memref<7x24x8xf32, #tpu.memory_space<vmem>>, %arg4: memref<24x1xf32, #tpu.memory_space<vmem>>, %arg5: memref<24x16xf32, #tpu.memory_space<vmem>>, %arg6: memref<1x1xf32, #tpu.memory_space<vmem>>, %arg7: memref<1x1x1xf32, #tpu.memory_space<vmem>>) attributes {dimension_semantics = [#tpu.dimension_semantics<parallel>], iteration_bounds = array<i64: 2>, scalar_prefetch = 0 : i64, scratch_operands = 0 : i64, tpu.core_type = #tpu.core_type<tc>, window_params = [{transform_indices = @transform_0, window_bounds = array<i64: 1, 4, 16>}, {transform_indices = @transform_1, window_bounds = array<i64: 1, 4, 16>}, {pipeline_mode = #tpu.pipeline_mode<synchronous>, transform_indices = @transform_2, window_bounds = array<i64: 7, 24, 8>}, {pipeline_mode = #tpu.pipeline_mode<synchronous>, transform_indices = @transform_3, window_bounds = array<i64: 24, 1>}, {pipeline_mode = #tpu.pipeline_mode<synchronous>, transform_indices = @transform_4, window_bounds = array<i64: 24, 16>}, {pipeline_mode = #tpu.pipeline_mode<synchronous>, transform_indices = @transform_5, window_bounds = array<i64: 1, 1>}, {transform_indices = @transform_6, window_bounds = array<i64: 1, 1, 1>}]} {
    %c0 = arith.constant 0 : index
    %c0_0 = arith.constant 0 : index
    %c0_1 = arith.constant 0 : index
    %0 = vector.load %arg1[%c0, %c0_0, %c0_1] : memref<1x4x16xf32, #tpu.memory_space<vmem>>, vector<1x4x16xf32>
    %1 = vector.shape_cast %0 : vector<1x4x16xf32> to vector<4x16xf32>
    %c0_2 = arith.constant 0 : index
    %c0_3 = arith.constant 0 : index
    %c0_4 = arith.constant 0 : index
    %2 = vector.load %arg2[%c0_2, %c0_3, %c0_4] : memref<1x4x16xf32, #tpu.memory_space<vmem>>, vector<1x4x16xf32>
    %3 = vector.shape_cast %2 : vector<1x4x16xf32> to vector<4x16xf32>
    %4 = tpu.concatenate %1, %3 in 0 : vector<4x16xf32>, vector<4x16xf32> -> vector<8x16xf32>
    %cst = arith.constant 0.000000e+00 : f32
    %5 = vector.broadcast %cst : f32 to vector<8x3xf32>
    %6 = tpu.concatenate %5, %4, %5 in 1 : vector<8x3xf32>, vector<8x16xf32>, vector<8x3xf32> -> vector<8x22xf32>
    %cst_5 = arith.constant 0.000000e+00 : f32
    %7 = vector.broadcast %cst_5 : f32 to vector<24x16xf32>
    %c0_6 = arith.constant 0 : index
    %c0_7 = arith.constant 0 : index
    %c0_8 = arith.constant 0 : index
    %8 = vector.load %arg3[%c0_6, %c0_7, %c0_8] : memref<7x24x8xf32, #tpu.memory_space<vmem>>, vector<1x24x8xf32>
    %9 = vector.shape_cast %8 : vector<1x24x8xf32> to vector<24x8xf32>
    %10 = vector.extract_strided_slice %6 {offsets = [0, 0], sizes = [8, 16], strides = [1, 1]} : vector<8x22xf32> to vector<8x16xf32>
    %cst_9 = arith.constant dense<0.000000e+00> : vector<24x16xf32>
    %11 = tpu.matmul %9, %10, %cst_9 {dimension_numbers = #tpu.dot_dimension_numbers<[1], [0], [0], [1], [0, 0, 1, 1], [], []>, precision = #tpu.contract_precision<fp32>} : vector<24x8xf32>, vector<8x16xf32>, vector<24x16xf32> -> vector<24x16xf32>
    %12 = arith.addf %7, %11 : vector<24x16xf32>
    %c1 = arith.constant 1 : index
    %c0_10 = arith.constant 0 : index
    %c0_11 = arith.constant 0 : index
    %13 = vector.load %arg3[%c1, %c0_10, %c0_11] : memref<7x24x8xf32, #tpu.memory_space<vmem>>, vector<1x24x8xf32>
    %14 = vector.shape_cast %13 : vector<1x24x8xf32> to vector<24x8xf32>
    %15 = vector.extract_strided_slice %6 {offsets = [0, 1], sizes = [8, 16], strides = [1, 1]} : vector<8x22xf32> to vector<8x16xf32>
    %cst_12 = arith.constant dense<0.000000e+00> : vector<24x16xf32>
    %16 = tpu.matmul %14, %15, %cst_12 {dimension_numbers = #tpu.dot_dimension_numbers<[1], [0], [0], [1], [0, 0, 1, 1], [], []>, precision = #tpu.contract_precision<fp32>} : vector<24x8xf32>, vector<8x16xf32>, vector<24x16xf32> -> vector<24x16xf32>
    %17 = arith.addf %12, %16 : vector<24x16xf32>
    %c2 = arith.constant 2 : index
    %c0_13 = arith.constant 0 : index
    %c0_14 = arith.constant 0 : index
    %18 = vector.load %arg3[%c2, %c0_13, %c0_14] : memref<7x24x8xf32, #tpu.memory_space<vmem>>, vector<1x24x8xf32>
    %19 = vector.shape_cast %18 : vector<1x24x8xf32> to vector<24x8xf32>
    %20 = vector.extract_strided_slice %6 {offsets = [0, 2], sizes = [8, 16], strides = [1, 1]} : vector<8x22xf32> to vector<8x16xf32>
    %cst_15 = arith.constant dense<0.000000e+00> : vector<24x16xf32>
    %21 = tpu.matmul %19, %20, %cst_15 {dimension_numbers = #tpu.dot_dimension_numbers<[1], [0], [0], [1], [0, 0, 1, 1], [], []>, precision = #tpu.contract_precision<fp32>} : vector<24x8xf32>, vector<8x16xf32>, vector<24x16xf32> -> vector<24x16xf32>
    %22 = arith.addf %17, %21 : vector<24x16xf32>
    %c3 = arith.constant 3 : index
    %c0_16 = arith.constant 0 : index
    %c0_17 = arith.constant 0 : index
    %23 = vector.load %arg3[%c3, %c0_16, %c0_17] : memref<7x24x8xf32, #tpu.memory_space<vmem>>, vector<1x24x8xf32>
    %24 = vector.shape_cast %23 : vector<1x24x8xf32> to vector<24x8xf32>
    %25 = vector.extract_strided_slice %6 {offsets = [0, 3], sizes = [8, 16], strides = [1, 1]} : vector<8x22xf32> to vector<8x16xf32>
    %cst_18 = arith.constant dense<0.000000e+00> : vector<24x16xf32>
    %26 = tpu.matmul %24, %25, %cst_18 {dimension_numbers = #tpu.dot_dimension_numbers<[1], [0], [0], [1], [0, 0, 1, 1], [], []>, precision = #tpu.contract_precision<fp32>} : vector<24x8xf32>, vector<8x16xf32>, vector<24x16xf32> -> vector<24x16xf32>
    %27 = arith.addf %22, %26 : vector<24x16xf32>
    %c4 = arith.constant 4 : index
    %c0_19 = arith.constant 0 : index
    %c0_20 = arith.constant 0 : index
    %28 = vector.load %arg3[%c4, %c0_19, %c0_20] : memref<7x24x8xf32, #tpu.memory_space<vmem>>, vector<1x24x8xf32>
    %29 = vector.shape_cast %28 : vector<1x24x8xf32> to vector<24x8xf32>
    %30 = vector.extract_strided_slice %6 {offsets = [0, 4], sizes = [8, 16], strides = [1, 1]} : vector<8x22xf32> to vector<8x16xf32>
    %cst_21 = arith.constant dense<0.000000e+00> : vector<24x16xf32>
    %31 = tpu.matmul %29, %30, %cst_21 {dimension_numbers = #tpu.dot_dimension_numbers<[1], [0], [0], [1], [0, 0, 1, 1], [], []>, precision = #tpu.contract_precision<fp32>} : vector<24x8xf32>, vector<8x16xf32>, vector<24x16xf32> -> vector<24x16xf32>
    %32 = arith.addf %27, %31 : vector<24x16xf32>
    %c5 = arith.constant 5 : index
    %c0_22 = arith.constant 0 : index
    %c0_23 = arith.constant 0 : index
    %33 = vector.load %arg3[%c5, %c0_22, %c0_23] : memref<7x24x8xf32, #tpu.memory_space<vmem>>, vector<1x24x8xf32>
    %34 = vector.shape_cast %33 : vector<1x24x8xf32> to vector<24x8xf32>
    %35 = vector.extract_strided_slice %6 {offsets = [0, 5], sizes = [8, 16], strides = [1, 1]} : vector<8x22xf32> to vector<8x16xf32>
    %cst_24 = arith.constant dense<0.000000e+00> : vector<24x16xf32>
    %36 = tpu.matmul %34, %35, %cst_24 {dimension_numbers = #tpu.dot_dimension_numbers<[1], [0], [0], [1], [0, 0, 1, 1], [], []>, precision = #tpu.contract_precision<fp32>} : vector<24x8xf32>, vector<8x16xf32>, vector<24x16xf32> -> vector<24x16xf32>
    %37 = arith.addf %32, %36 : vector<24x16xf32>
    %c6 = arith.constant 6 : index
    %c0_25 = arith.constant 0 : index
    %c0_26 = arith.constant 0 : index
    %38 = vector.load %arg3[%c6, %c0_25, %c0_26] : memref<7x24x8xf32, #tpu.memory_space<vmem>>, vector<1x24x8xf32>
    %39 = vector.shape_cast %38 : vector<1x24x8xf32> to vector<24x8xf32>
    %40 = vector.extract_strided_slice %6 {offsets = [0, 6], sizes = [8, 16], strides = [1, 1]} : vector<8x22xf32> to vector<8x16xf32>
    %cst_27 = arith.constant dense<0.000000e+00> : vector<24x16xf32>
    %41 = tpu.matmul %39, %40, %cst_27 {dimension_numbers = #tpu.dot_dimension_numbers<[1], [0], [0], [1], [0, 0, 1, 1], [], []>, precision = #tpu.contract_precision<fp32>} : vector<24x8xf32>, vector<8x16xf32>, vector<24x16xf32> -> vector<24x16xf32>
    %42 = arith.addf %37, %41 : vector<24x16xf32>
    %c0_28 = arith.constant 0 : index
    %c0_29 = arith.constant 0 : index
    %43 = vector.load %arg4[%c0_28, %c0_29] : memref<24x1xf32, #tpu.memory_space<vmem>>, vector<24x1xf32>
    %44 = vector.broadcast %43 : vector<24x1xf32> to vector<24x16xf32>
    %45 = arith.addf %42, %44 : vector<24x16xf32>
    %cst_30 = arith.constant 0.000000e+00 : f32
    %46 = vector.broadcast %cst_30 : f32 to vector<24x16xf32>
    %47 = arith.maximumf %45, %46 : vector<24x16xf32>
    %c0_31 = arith.constant 0 : index
    %c0_32 = arith.constant 0 : index
    %48 = vector.load %arg5[%c0_31, %c0_32] : memref<24x16xf32, #tpu.memory_space<vmem>>, vector<24x16xf32>
    %49 = arith.mulf %47, %48 : vector<24x16xf32>
    %cst_33 = arith.constant dense<0.000000e+00> : vector<24xf32>
    %50 = vector.multi_reduction <add>, %49, %cst_33 [1] : vector<24x16xf32> to vector<24xf32>
    %51 = vector.shape_cast %50 : vector<24xf32> to vector<24x1xf32>
    %cst_34 = arith.constant dense<0.000000e+00> : vector<1xf32>
    %52 = vector.multi_reduction <add>, %51, %cst_34 [0] : vector<24x1xf32> to vector<1xf32>
    %53 = vector.shape_cast %52 : vector<1xf32> to vector<1x1xf32>
    %c0_35 = arith.constant 0 : index
    %c0_36 = arith.constant 0 : index
    %54 = vector.load %arg6[%c0_35, %c0_36] : memref<1x1xf32, #tpu.memory_space<vmem>>, vector<1x1xf32>
    %55 = arith.addf %53, %54 : vector<1x1xf32>
    %c0_37 = arith.constant 0 : index
    %c0_38 = arith.constant 0 : index
    %c0_39 = arith.constant 0 : index
    %56 = vector.load %arg7[%c0_37, %c0_38, %c0_39] : memref<1x1x1xf32, #tpu.memory_space<vmem>>, vector<1x1x1xf32>
    %57 = vector.shape_cast %56 : vector<1x1x1xf32> to vector<1x1xf32>
    %58 = vector.shape_cast %55 : vector<1x1xf32> to vector<1x1x1xf32>
    tpu.vector_store %arg7[%c0_37, %c0_38, %c0_39], %58 {strides = array<i32>} : memref<1x1x1xf32, #tpu.memory_space<vmem>>, vector<1x1x1xf32>,
    return
  }
  func.func @transform_0(%arg0: i32) -> (i32, i32, i32) {
    %c0_i32 = arith.constant 0 : i32
    %c0_i32_0 = arith.constant 0 : i32
    %c0_i32_1 = arith.constant 0 : i32
    return %arg0, %c0_i32, %c0_i32_0 : i32, i32, i32
  }
  func.func @transform_1(%arg0: i32) -> (i32, i32, i32) {
    %c0_i32 = arith.constant 0 : i32
    %c0_i32_0 = arith.constant 0 : i32
    %c0_i32_1 = arith.constant 0 : i32
    return %arg0, %c0_i32, %c0_i32_0 : i32, i32, i32
  }
  func.func @transform_2(%arg0: i32) -> (i32, i32, i32) {
    %c0_i32 = arith.constant 0 : i32
    %c0_i32_0 = arith.constant 0 : i32
    %c0_i32_1 = arith.constant 0 : i32
    %c0_i32_2 = arith.constant 0 : i32
    return %c0_i32, %c0_i32_0, %c0_i32_1 : i32, i32, i32
  }
  func.func @transform_3(%arg0: i32) -> (i32, i32) {
    %c0_i32 = arith.constant 0 : i32
    %c0_i32_0 = arith.constant 0 : i32
    %c0_i32_1 = arith.constant 0 : i32
    return %c0_i32, %c0_i32_0 : i32, i32
  }
  func.func @transform_4(%arg0: i32) -> (i32, i32) {
    %c0_i32 = arith.constant 0 : i32
    %c0_i32_0 = arith.constant 0 : i32
    %c0_i32_1 = arith.constant 0 : i32
    return %c0_i32, %c0_i32_0 : i32, i32
  }
  func.func @transform_5(%arg0: i32) -> (i32, i32) {
    %c0_i32 = arith.constant 0 : i32
    %c0_i32_0 = arith.constant 0 : i32
    %c0_i32_1 = arith.constant 0 : i32
    return %c0_i32, %c0_i32_0 : i32, i32
  }
  func.func @transform_6(%arg0: i32) -> (i32, i32, i32) {
    %c0_i32 = arith.constant 0 : i32
    %c0_i32_0 = arith.constant 0 : i32
    %c0_i32_1 = arith.constant 0 : i32
    return %arg0, %c0_i32, %c0_i32_0 : i32, i32, i32
  }
}

</mosaic_0001>

<llo_original>
// kernel: multi_input_cnn_forward.1
$region0: #{multi_input_cnn_forward.1}
  #allocation0 [shape = 'u32[]', space=smem, size = 0x4, offset = 0x4, fixed_abs, tag = 'smem constant byte address 0x4 - core index']
  #allocation1 [shape = 'u32[144,128]{1,0:T(1,128)}', space=vmem, size = 0x12000, scoped, tag = 'internal scratch']
  #allocation2 [shape = 'f32[1,1]{1,0:T(1,128)S(1)}', space=vmem, size = 0x200, scoped, tag = 'scoped memory for multi_input_cnn_forward.1']
  %s0 = inlined_call_operand.vmem [shape: f32[2,4,16], index: 0, kind: input, shape index: {}]
  %s1 = inlined_call_operand.vmem [shape: f32[2,4,16], index: 1, kind: input, shape index: {}]
  %s2 = inlined_call_operand.vmem [shape: f32[7,24,8], index: 2, kind: input, shape index: {}]
  %s3 = inlined_call_operand.vmem [shape: f32[24,1], index: 3, kind: input, shape index: {}]
  %s4 = inlined_call_operand.vmem [shape: f32[24,16], index: 4, kind: input, shape index: {}]
  %s5 = inlined_call_operand.<no memory space> [shape: f32[1,1], index: 5, kind: input, shape index: {}]
  %s6 = inlined_call_operand.vmem [shape: f32[2,1,1], index: 6, kind: output, shape index: {}]
  %s7 = sld [smem:[#allocation0]]
  $region57: #{multi_input_cnn_forward.1} parent=0
    _
  %s9 = ssub.s32 1, %s7
  %s10 = scalar_select 0, %s9, %s7
  %v11 = vstv %s5
  %12 = vst [vmem:[#allocation2] sm:$0x1] %v11
  loop: start=0, step=1, limit=4
  $region2: #{multi_input_cnn_forward.1} parent=0 // loop_pre_header
    _
  $region3: #{multi_input_cnn_forward.1} parent=0 // loop_header
    %s14 = sphi 0, %s18
    %p15 = scmp.ge.s32.totalorder %s14, 4
    %s24 = sphi 0, %s26
    %s27 = sphi 0, %s24
    %s28 = sphi 0, %s27
    %s44 = sphi 0, %s28
    %s50 = sphi 0, %s52
    %s53 = sphi 0, %s50
    %s54 = sphi 0, %s53
    %s70 = sphi 0, %s54
    %s74 = sphi 0, %s74
    %s76 = sphi 0, %s74
    %s77 = sphi 0, %s76
    %s91 = sphi 0, %s77
    %s95 = sphi 0, %s95
    %s97 = sphi 0, %s95
    %s98 = sphi 0, %s97
    %s112 = sphi 0, %s98
    %s116 = sphi 0, %s116
    %s118 = sphi 0, %s116
    %s119 = sphi 0, %s118
    %s133 = sphi 0, %s119
    %s137 = sphi 0, %s137
    %s139 = sphi 0, %s137
    %s140 = sphi 0, %s139
    %s154 = sphi 0, %s140
    %s160 = sphi 0, %s162
    %s163 = sphi 0, %s160
    %s164 = sphi 0, %s163
    %s180 = sphi 0, %s164
  $region4: #{multi_input_cnn_forward.1} parent=0 // loop_header_branch
    %17 = sbr.rel (%p15) target = $region8
  $region5: #{multi_input_cnn_forward.1} parent=0 // loop_body
    %s19 = ssub.s32 %s14, 1
    %s20 = ssub.s32 %s14, 2
    %s21 = sadd.s32 %s14, 1
    %s22 = ssub.s32 %s14, %s21
    %p23 = scmp.eq.s32.totalorder %s22, 0
    %s25 = sadd.s32 %s24, 1
    %s26 = scalar_select %p23, %s24, %s25
    %p29 = pneg %p23
    %p30 = scmp.eq.s32.totalorder %s14, 1
    %p31 = por %p29, %p30
    %p32 = scmp.ne.s32.totalorder %s24, %s27
    %p33 = scmp.eq.s32.totalorder %s14, 0
    %p34 = por %p32, %p33
    %p35 = scmp.ne.s32.totalorder %s24, %s27
    %p36 = scmp.eq.s32.totalorder %s19, 1
    %p37 = por %p35, %p36
    %p38 = scmp.ne.s32.totalorder %s27, %s28
    %p39 = scmp.eq.s32.totalorder %s19, 0
    %p40 = por %p38, %p39
    %p41 = scmp.ne.s32.totalorder %s27, %s28
    %p42 = scmp.eq.s32.totalorder %s20, 1
    %p43 = por %p41, %p42
    %p45 = scmp.ne.s32.totalorder %s28, %s44
    %p46 = scmp.eq.s32.totalorder %s20, 0
    %p47 = por %p45, %p46
    %s48 = ssub.s32 %s14, %s21
    %p49 = scmp.eq.s32.totalorder %s48, 0
    %s51 = sadd.s32 %s50, 1
    %s52 = scalar_select %p49, %s50, %s51
    %p55 = pneg %p49
    %p56 = scmp.eq.s32.totalorder %s14, 1
    %p57 = por %p55, %p56
    %p58 = scmp.ne.s32.totalorder %s50, %s53
    %p59 = scmp.eq.s32.totalorder %s14, 0
    %p60 = por %p58, %p59
    %p61 = scmp.ne.s32.totalorder %s50, %s53
    %p62 = scmp.eq.s32.totalorder %s19, 1
    %p63 = por %p61, %p62
    %p64 = scmp.ne.s32.totalorder %s53, %s54
    %p65 = scmp.eq.s32.totalorder %s19, 0
    %p66 = por %p64, %p65
    %p67 = scmp.ne.s32.totalorder %s53, %s54
    %p68 = scmp.eq.s32.totalorder %s20, 1
    %p69 = por %p67, %p68
    %p71 = scmp.ne.s32.totalorder %s54, %s70
    %p72 = scmp.eq.s32.totalorder %s20, 0
    %p73 = por %p71, %p72
    %s75 = sadd.s32 %s74, 1
    %p78 = scmp.eq.s32.totalorder %s14, 1
    %p79 = scmp.ne.s32.totalorder %s74, %s76
    %p80 = scmp.eq.s32.totalorder %s14, 0
    %p81 = por %p79, %p80
    %p82 = scmp.ne.s32.totalorder %s74, %s76
    %p83 = scmp.eq.s32.totalorder %s19, 1
    %p84 = por %p82, %p83
    %p85 = scmp.ne.s32.totalorder %s76, %s77
    %p86 = scmp.eq.s32.totalorder %s19, 0
    %p87 = por %p85, %p86
    %p88 = scmp.ne.s32.totalorder %s76, %s77
    %p89 = scmp.eq.s32.totalorder %s20, 1
    %p90 = por %p88, %p89
    %p92 = scmp.ne.s32.totalorder %s77, %s91
    %p93 = scmp.eq.s32.totalorder %s20, 0
    %p94 = por %p92, %p93
    %s96 = sadd.s32 %s95, 1
    %p99 = scmp.eq.s32.totalorder %s14, 1
    %p100 = scmp.ne.s32.totalorder %s95, %s97
    %p101 = scmp.eq.s32.totalorder %s14, 0
    %p102 = por %p100, %p101
    %p103 = scmp.ne.s32.totalorder %s95, %s97
    %p104 = scmp.eq.s32.totalorder %s19, 1
    %p105 = por %p103, %p104
    %p106 = scmp.ne.s32.totalorder %s97, %s98
    %p107 = scmp.eq.s32.totalorder %s19, 0
    %p108 = por %p106, %p107
    %p109 = scmp.ne.s32.totalorder %s97, %s98
    %p110 = scmp.eq.s32.totalorder %s20, 1
    %p111 = por %p109, %p110
    %p113 = scmp.ne.s32.totalorder %s98, %s112
    %p114 = scmp.eq.s32.totalorder %s20, 0
    %p115 = por %p113, %p114
    %s117 = sadd.s32 %s116, 1
    %p120 = scmp.eq.s32.totalorder %s14, 1
    %p121 = scmp.ne.s32.totalorder %s116, %s118
    %p122 = scmp.eq.s32.totalorder %s14, 0
    %p123 = por %p121, %p122
    %p124 = scmp.ne.s32.totalorder %s116, %s118
    %p125 = scmp.eq.s32.totalorder %s19, 1
    %p126 = por %p124, %p125
    %p127 = scmp.ne.s32.totalorder %s118, %s119
    %p128 = scmp.eq.s32.totalorder %s19, 0
    %p129 = por %p127, %p128
    %p130 = scmp.ne.s32.totalorder %s118, %s119
    %p131 = scmp.eq.s32.totalorder %s20, 1
    %p132 = por %p130, %p131
    %p134 = scmp.ne.s32.totalorder %s119, %s133
    %p135 = scmp.eq.s32.totalorder %s20, 0
    %p136 = por %p134, %p135
    %s138 = sadd.s32 %s137, 1
    %p141 = scmp.eq.s32.totalorder %s14, 1
    %p142 = scmp.ne.s32.totalorder %s137, %s139
    %p143 = scmp.eq.s32.totalorder %s14, 0
    %p144 = por %p142, %p143
    %p145 = scmp.ne.s32.totalorder %s137, %s139
    %p146 = scmp.eq.s32.totalorder %s19, 1
    %p147 = por %p145, %p146
    %p148 = scmp.ne.s32.totalorder %s139, %s140
    %p149 = scmp.eq.s32.totalorder %s19, 0
    %p150 = por %p148, %p149
    %p151 = scmp.ne.s32.totalorder %s139, %s140
    %p152 = scmp.eq.s32.totalorder %s20, 1
    %p153 = por %p151, %p152
    %p155 = scmp.ne.s32.totalorder %s140, %s154
    %p156 = scmp.eq.s32.totalorder %s20, 0
    %p157 = por %p155, %p156
    %s158 = ssub.s32 %s14, %s21
    %p159 = scmp.eq.s32.totalorder %s158, 0
    %s161 = sadd.s32 %s160, 1
    %s162 = scalar_select %p159, %s160, %s161
    %p165 = pneg %p159
    %p166 = scmp.eq.s32.totalorder %s14, 1
    %p167 = por %p165, %p166
    %p168 = scmp.ne.s32.totalorder %s160, %s163
    %p169 = scmp.eq.s32.totalorder %s14, 0
    %p170 = por %p168, %p169
    %p171 = scmp.ne.s32.totalorder %s160, %s163
    %p172 = scmp.eq.s32.totalorder %s19, 1
    %p173 = por %p171, %p172
    %p174 = scmp.ne.s32.totalorder %s163, %s164
    %p175 = scmp.eq.s32.totalorder %s19, 0
    %p176 = por %p174, %p175
    %p177 = scmp.ne.s32.totalorder %s163, %s164
    %p178 = scmp.eq.s32.totalorder %s20, 1
    %p179 = por %p177, %p178
    %p181 = scmp.ne.s32.totalorder %s164, %s180
    %p182 = scmp.eq.s32.totalorder %s20, 0
    %p183 = por %p181, %p182
    %p184 = scmp.le.s32.totalorder 1, %s14
    %p185 = scmp.lt.s32.totalorder %s14, 3
    %p186 = pnand %p184, %p185
    %p187 = pneg %p186
    // Predicated region
    $region9: #{multi_input_cnn_forward.1} parent=5 // pred_check
      _
    $region10: #{multi_input_cnn_forward.1} parent=5 // pred_check_branch
      %189 = sbr.rel (%p186) target = $region12
    $region11: #{multi_input_cnn_forward.1} parent=5 // pred_region
      %s190 = ssub.s32 %s14, 1
      // Predicated region
      $region13: #{multi_input_cnn_forward.1} parent=11 // pred_check
        %p191 = pneg %p87
      $region14: #{multi_input_cnn_forward.1} parent=11 // pred_check_branch
        %193 = sbr.rel (%p191) target = $region16
      $region15: #{multi_input_cnn_forward.1} parent=11 // pred_region
        _
      $region16: #{multi_input_cnn_forward.1} parent=11 // pred_fallthru
        _
      // Predicated region
      $region17: #{multi_input_cnn_forward.1} parent=11 // pred_check
        %p194 = pneg %p108
      $region18: #{multi_input_cnn_forward.1} parent=11 // pred_check_branch
        %196 = sbr.rel (%p194) target = $region20
      $region19: #{multi_input_cnn_forward.1} parent=11 // pred_region
        _
      $region20: #{multi_input_cnn_forward.1} parent=11 // pred_fallthru
        _
      // Predicated region
      $region21: #{multi_input_cnn_forward.1} parent=11 // pred_check
        %p197 = pneg %p129
      $region22: #{multi_input_cnn_forward.1} parent=11 // pred_check_branch
        %199 = sbr.rel (%p197) target = $region24
      $region23: #{multi_input_cnn_forward.1} parent=11 // pred_region
        _
      $region24: #{multi_input_cnn_forward.1} parent=11 // pred_fallthru
        _
      // Predicated region
      $region25: #{multi_input_cnn_forward.1} parent=11 // pred_check
        %p200 = pneg %p150
      $region26: #{multi_input_cnn_forward.1} parent=11 // pred_check_branch
        %202 = sbr.rel (%p200) target = $region28
      $region27: #{multi_input_cnn_forward.1} parent=11 // pred_region
        _
      $region28: #{multi_input_cnn_forward.1} parent=11 // pred_fallthru
        _
    $region12: #{multi_input_cnn_forward.1} parent=5 // pred_fallthru
      _
    %p203 = scmp.lt.s32.totalorder %s14, 2
    // Predicated region
    $region29: #{multi_input_cnn_forward.1} parent=5 // pred_check
      %p204 = pneg %p203
    $region30: #{multi_input_cnn_forward.1} parent=5 // pred_check_branch
      %206 = sbr.rel (%p204) target = $region32
    $region31: #{multi_input_cnn_forward.1} parent=5 // pred_region
      // Predicated region
      $region33: #{multi_input_cnn_forward.1} parent=31 // pred_check
        %p207 = pneg %p34
      $region34: #{multi_input_cnn_forward.1} parent=31 // pred_check_branch
        %209 = sbr.rel (%p207) target = $region36
      $region35: #{multi_input_cnn_forward.1} parent=31 // pred_region
        %p210 = scmp.lt.s32.totalorder %s14, 1
        %s211 = scalar_select %p210, %s14, 1
        %s212 = smul.addr %s211, 4
        %s213 = scalar_lea.vmem %s0, %s212
      $region36: #{multi_input_cnn_forward.1} parent=31 // pred_fallthru
        _
      // Predicated region
      $region37: #{multi_input_cnn_forward.1} parent=31 // pred_check
        %p214 = pneg %p60
      $region38: #{multi_input_cnn_forward.1} parent=31 // pred_check_branch
        %216 = sbr.rel (%p214) target = $region40
      $region39: #{multi_input_cnn_forward.1} parent=31 // pred_region
        %p217 = scmp.lt.s32.totalorder %s14, 1
        %s218 = scalar_select %p217, %s14, 1
        %s219 = smul.addr %s218, 4
        %s220 = scalar_lea.vmem %s1, %s219
      $region40: #{multi_input_cnn_forward.1} parent=31 // pred_fallthru
        _
    $region32: #{multi_input_cnn_forward.1} parent=5 // pred_fallthru
      _
    %p221 = scmp.le.s32.totalorder 1, %s14
    %p222 = scmp.lt.s32.totalorder %s14, 3
    %p223 = pnand %p221, %p222
    %p224 = pneg %p223
    // Predicated region
    $region41: #{multi_input_cnn_forward.1} parent=5 // pred_check
      _
    $region42: #{multi_input_cnn_forward.1} parent=5 // pred_check_branch
      %226 = sbr.rel (%p223) target = $region44
    $region43: #{multi_input_cnn_forward.1} parent=5 // pred_region
      %s227 = ssub.s32 %s14, 1
      %p228 = scmp.lt.s32.totalorder %s19, 1
      %s229 = scalar_select %p228, %s19, 1
      %s230 = smul.addr %s229, 4
      %s231 = scalar_lea.vmem %s0, %s230
      %p232 = pneg %p40
      %p233 = pneg %p37
      %p234 = scmp.lt.s32.totalorder %s19, 1
      %s235 = scalar_select %p234, %s19, 1
      %s236 = smul.addr %s235, 4
      %s237 = scalar_lea.vmem %s1, %s236
      %p238 = pneg %p66
      %p239 = pneg %p63
      %p240 = pneg %p87
      %p241 = pneg %p84
      %p242 = pneg %p108
      %p243 = pneg %p105
      %p244 = pneg %p129
      %p245 = pneg %p126
      %p246 = pneg %p150
      %p247 = pneg %p147
      %p248 = pneg %p176
      %p249 = pneg %p173
      %p250 = scmp.lt.s32.totalorder %s19, 1
      %s251 = scalar_select %p250, %s19, 1
      %s252 = scalar_lea.vmem %s6, %s251
      %p253 = scmp.lt.s32.totalorder %s19, 1
      %s254 = scalar_select %p253, %s19, 1
      %s255 = smul.addr %s254, 4
      %s256 = scalar_lea.vmem %s0, %s255
      %p257 = scmp.lt.s32.totalorder %s19, 1
      %s258 = scalar_select %p257, %s19, 1
      %s259 = smul.addr %s258, 4
      %s260 = scalar_lea.vmem %s1, %s259
      %p261 = scmp.lt.s32.totalorder %s19, 1
      %s262 = scalar_select %p261, %s19, 1
      %s263 = scalar_lea.vmem %s6, %s262
      %v264 = vld [vmem:[%s256] sm:$0xf]
      %v265 = vld [vmem:[%s260] sm:$0xf]
      %v267 = vrot.slane %v265, 4
      %vm269 = vcmask 1043456
      %v270 = vsel %vm269, %v264, %v267
      %272 = vrot.lane.b32.xlu0 %v270, 3
      %v273 = vpop.permute.xlu0 %272
      %vm275 = vcmask 23552
      %v276 = vsel %vm275, 0.0, %v273
      %vm277 = vcmask 154624
      %v278 = vsel %vm277, %v276, 0.0
      %v279 = vld [vmem:[%s2] sm:$0xff]
      %v280 = vld [vmem:[%s2 + $0x8] sm:$0xff]
      %v281 = vld [vmem:[%s2 + $0x10] sm:$0xff]
      %s282 = scalar_lea.vmem %s2, 24
      %v283 = vld [vmem:[%s282] sm:$0xff]
      %v284 = vld [vmem:[%s282 + $0x8] sm:$0xff]
      %v285 = vld [vmem:[%s282 + $0x10] sm:$0xff]
      %287 = vrot.lane.b32.xlu0 %v278, 127
      %v288 = vpop.permute.xlu0 %287
      %vm290 = vcmask 64512
      %v292 = vsel %vm290, %v283, 0
      %v295 = vsel %vm290, %v284, 0
      %v298 = vsel %vm290, %v285, 0
      %300 = vmatprep.subr.mxu0 0.0
      %v301 = vand.u32 %v288, 4294901760
      %302 = vmatpush1.msra.mxu0 %v301
      %303 = vmatprep.subr.mxu0 0.0
      %304 = vmatpush1.msra.mxu0 0.0
      %305 = vmatprep.subr.mxu0 0.0
      %306 = vmatpush1.msra.mxu0 0.0
      %307 = vmatprep.subr.mxu0 0.0
      %308 = vmatpush1.msra.mxu0 0.0
      %309 = vmatprep.subr.mxu0 0.0
      %310 = vmatpush1.msra.mxu0 0.0
      %311 = vmatprep.subr.mxu0 0.0
      %312 = vmatpush1.msra.mxu0 0.0
      %313 = vmatprep.subr.mxu0 0.0
      %314 = vmatpush1.msra.mxu0 0.0
      %315 = vmatprep.subr.mxu0 0.0
      %316 = vmatpush1.msra.mxu0 0.0
      %317 = vmatprep.subr.mxu0 0.0
      %318 = vmatpush1.msra.mxu0 0.0
      %319 = vmatprep.subr.mxu0 0.0
      %320 = vmatpush1.msra.mxu0 0.0
      %321 = vmatprep.subr.mxu0 0.0
      %322 = vmatpush1.msra.mxu0 0.0
      %323 = vmatprep.subr.mxu0 0.0
      %324 = vmatpush1.msra.mxu0 0.0
      %325 = vmatprep.subr.mxu0 0.0
      %326 = vmatpush1.msra.mxu0 0.0
      %327 = vmatprep.subr.mxu0 0.0
      %328 = vmatpush1.msra.mxu0 0.0
      %329 = vmatprep.subr.mxu0 0.0
      %330 = vmatpush1.msra.mxu0 0.0
      %331 = vmatprep.subr.mxu0 0.0
      %332 = vmatpush1.msra.mxu0 0.0
      %333 = vmatprep.subr.mxu0 0.0
      %334 = vmatpush1.msra.mxu0 0.0
      %335 = vmatprep.subr.mxu0 0.0
      %336 = vmatpush1.msra.mxu0 0.0
      %337 = vmatprep.subr.mxu0 0.0
      %338 = vmatpush1.msra.mxu0 0.0
      %339 = vmatprep.subr.mxu0 0.0
      %340 = vmatpush1.msra.mxu0 0.0
      %341 = vmatprep.subr.mxu0 0.0
      %342 = vmatpush1.msra.mxu0 0.0
      %343 = vmatprep.subr.mxu0 0.0
      %344 = vmatpush1.msra.mxu0 0.0
      %345 = vmatprep.subr.mxu0 0.0
      %346 = vmatpush1.msra.mxu0 0.0
      %347 = vmatprep.subr.mxu0 0.0
      %348 = vmatpush1.msra.mxu0 0.0
      %349 = vmatprep.subr.mxu0 0.0
      %350 = vmatpush1.msra.mxu0 0.0
      %351 = vmatprep.subr.mxu0 0.0
      %352 = vmatpush1.msra.mxu0 0.0
      %353 = vmatprep.subr.mxu0 0.0
      %354 = vmatpush1.msra.mxu0 0.0
      %355 = vmatprep.subr.mxu0 0.0
      %356 = vmatpush1.msra.mxu0 0.0
      %357 = vmatprep.subr.mxu0 0.0
      %358 = vmatpush1.msra.mxu0 0.0
      %359 = vmatprep.subr.mxu0 0.0
      %360 = vmatpush1.msra.mxu0 0.0
      %361 = vmatprep.subr.mxu0 0.0
      %362 = vmatpush1.msra.mxu0 0.0
      %363 = vmatprep.subr.mxu0 0.0
      %364 = vmatpush1.msra.mxu0 0.0
      %365 = vmatprep.mubr.f32.mxu0 0.0
      %v366 = vand.u32 %v292, 4294901760
      %v367 = vsub.f32 %v292, %v366
      %v368 = vand.u32 %v367, 4294901760
      %v369 = vsub.f32 %v367, %v368
      %v370 = vand.u32 %v369, 4294901760
      %371 = vmatmul.mubr.f32.gmra.mrb[0].mxu0 %v370
      %v372 = vpop.f32.mrb[0].mxu0
      %v373 = vadd.f32 0.0, %v372
      %v374 = vpop.f32.mrb[0].mxu0
      %375 = vmatprep.mubr.f32.mxu0 0.0
      %v376 = vand.u32 %v295, 4294901760
      %v377 = vsub.f32 %v295, %v376
      %v378 = vand.u32 %v377, 4294901760
      %v379 = vsub.f32 %v377, %v378
      %v380 = vand.u32 %v379, 4294901760
      %381 = vmatmul.mubr.f32.gmra.mrb[0].mxu0 %v380
      %v382 = vpop.f32.mrb[0].mxu0
      %v383 = vadd.f32 0.0, %v382
      %v384 = vpop.f32.mrb[0].mxu0
      %385 = vmatprep.mubr.f32.mxu0 0.0
      %v386 = vand.u32 %v298, 4294901760
      %v387 = vsub.f32 %v298, %v386
      %v388 = vand.u32 %v387, 4294901760
      %v389 = vsub.f32 %v387, %v388
      %v390 = vand.u32 %v389, 4294901760
      %391 = vmatmul.mubr.f32.gmra.mrb[0].mxu0 %v390
      %v392 = vpop.f32.mrb[0].mxu0
      %v393 = vadd.f32 0.0, %v392
      %v394 = vpop.f32.mrb[0].mxu0
      %395 = vdwg.mxu0
      %396 = vmatprep.subr.mxu0 0.0
      %v397 = vand.u32 %v288, 4294901760
      %v398 = vsub.f32 %v288, %v397
      %v399 = vand.u32 %v398, 4294901760
      %v400 = vsub.f32 %v398, %v399
      %v401 = vand.u32 %v400, 4294901760
      %402 = vmatpush1.msra.mxu0 %v401
      %403 = vmatprep.subr.mxu0 0.0
      %404 = vmatpush1.msra.mxu0 0.0
      %405 = vmatprep.subr.mxu0 0.0
      %406 = vmatpush1.msra.mxu0 0.0
      %407 = vmatprep.subr.mxu0 0.0
      %408 = vmatpush1.msra.mxu0 0.0
      %409 = vmatprep.subr.mxu0 0.0
      %410 = vmatpush1.msra.mxu0 0.0
      %411 = vmatprep.subr.mxu0 0.0
      %412 = vmatpush1.msra.mxu0 0.0
      %413 = vmatprep.subr.mxu0 0.0
      %414 = vmatpush1.msra.mxu0 0.0
      %415 = vmatprep.subr.mxu0 0.0
      %416 = vmatpush1.msra.mxu0 0.0
      %417 = vmatprep.subr.mxu0 0.0
      %418 = vmatpush1.msra.mxu0 0.0
      %419 = vmatprep.subr.mxu0 0.0
      %420 = vmatpush1.msra.mxu0 0.0
      %421 = vmatprep.subr.mxu0 0.0
      %422 = vmatpush1.msra.mxu0 0.0
      %423 = vmatprep.subr.mxu0 0.0
      %424 = vmatpush1.msra.mxu0 0.0
      %425 = vmatprep.subr.mxu0 0.0
      %426 = vmatpush1.msra.mxu0 0.0
      %427 = vmatprep.subr.mxu0 0.0
      %428 = vmatpush1.msra.mxu0 0.0
      %429 = vmatprep.subr.mxu0 0.0
      %430 = vmatpush1.msra.mxu0 0.0
      %431 = vmatprep.subr.mxu0 0.0
      %432 = vmatpush1.msra.mxu0 0.0
      %433 = vmatprep.subr.mxu0 0.0
      %434 = vmatpush1.msra.mxu0 0.0
      %435 = vmatprep.subr.mxu0 0.0
      %436 = vmatpush1.msra.mxu0 0.0
      %437 = vmatprep.subr.mxu0 0.0
      %438 = vmatpush1.msra.mxu0 0.0
      %439 = vmatprep.subr.mxu0 0.0
      %440 = vmatpush1.msra.mxu0 0.0
      %441 = vmatprep.subr.mxu0 0.0
      %442 = vmatpush1.msra.mxu0 0.0
      %443 = vmatprep.subr.mxu0 0.0
      %444 = vmatpush1.msra.mxu0 0.0
      %445 = vmatprep.subr.mxu0 0.0
      %446 = vmatpush1.msra.mxu0 0.0
      %447 = vmatprep.subr.mxu0 0.0
      %448 = vmatpush1.msra.mxu0 0.0
      %449 = vmatprep.subr.mxu0 0.0
      %450 = vmatpush1.msra.mxu0 0.0
      %451 = vmatprep.subr.mxu0 0.0
      %452 = vmatpush1.msra.mxu0 0.0
      %453 = vmatprep.subr.mxu0 0.0
      %454 = vmatpush1.msra.mxu0 0.0
      %455 = vmatprep.subr.mxu0 0.0
      %456 = vmatpush1.msra.mxu0 0.0
      %457 = vmatprep.subr.mxu0 0.0
      %458 = vmatpush1.msra.mxu0 0.0
      %459 = vmatprep.subr.mxu0 0.0
      %460 = vmatpush1.msra.mxu0 0.0
      %461 = vmatprep.subr.mxu0 0.0
      %462 = vmatpush1.msra.mxu0 0.0
      %463 = vmatprep.subr.mxu0 0.0
      %464 = vmatpush1.msra.mxu0 0.0
      %465 = vmatprep.mubr.f32.mxu0 0.0
      %v466 = vand.u32 %v292, 4294901760
      %467 = vmatmul.mubr.f32.gmra.mrb[0].mxu0 %v466
      %v468 = vpop.f32.mrb[0].mxu0
      %v469 = vadd.f32 %v373, %v468
      %v470 = vpop.f32.mrb[0].mxu0
      %471 = vmatprep.mubr.f32.mxu0 0.0
      %v472 = vand.u32 %v295, 4294901760
      %473 = vmatmul.mubr.f32.gmra.mrb[0].mxu0 %v472
      %v474 = vpop.f32.mrb[0].mxu0
      %v475 = vadd.f32 %v383, %v474
      %v476 = vpop.f32.mrb[0].mxu0
      %477 = vmatprep.mubr.f32.mxu0 0.0
      %v478 = vand.u32 %v298, 4294901760
      %479 = vmatmul.mubr.f32.gmra.mrb[0].mxu0 %v478
      %v480 = vpop.f32.mrb[0].mxu0
      %v481 = vadd.f32 %v393, %v480
      %v482 = vpop.f32.mrb[0].mxu0
      %483 = vdwg.mxu0
      %484 = vmatprep.subr.mxu0 0.0
      %v485 = vand.u32 %v288, 4294901760
      %v486 = vsub.f32 %v288, %v485
      %487 = vmatpush1.msra.mxu0 %v486
      %488 = vmatprep.subr.mxu0 0.0
      %489 = vmatpush1.msra.mxu0 0.0
      %490 = vmatprep.subr.mxu0 0.0
      %491 = vmatpush1.msra.mxu0 0.0
      %492 = vmatprep.subr.mxu0 0.0
      %493 = vmatpush1.msra.mxu0 0.0
      %494 = vmatprep.subr.mxu0 0.0
      %495 = vmatpush1.msra.mxu0 0.0
      %496 = vmatprep.subr.mxu0 0.0
      %497 = vmatpush1.msra.mxu0 0.0
      %498 = vmatprep.subr.mxu0 0.0
      %499 = vmatpush1.msra.mxu0 0.0
      %500 = vmatprep.subr.mxu0 0.0
      %501 = vmatpush1.msra.mxu0 0.0
      %502 = vmatprep.subr.mxu0 0.0
      %503 = vmatpush1.msra.mxu0 0.0
      %504 = vmatprep.subr.mxu0 0.0
      %505 = vmatpush1.msra.mxu0 0.0
      %506 = vmatprep.subr.mxu0 0.0
      %507 = vmatpush1.msra.mxu0 0.0
      %508 = vmatprep.subr.mxu0 0.0
      %509 = vmatpush1.msra.mxu0 0.0
      %510 = vmatprep.subr.mxu0 0.0
      %511 = vmatpush1.msra.mxu0 0.0
      %512 = vmatprep.subr.mxu0 0.0
      %513 = vmatpush1.msra.mxu0 0.0
      %514 = vmatprep.subr.mxu0 0.0
      %515 = vmatpush1.msra.mxu0 0.0
      %516 = vmatprep.subr.mxu0 0.0
      %517 = vmatpush1.msra.mxu0 0.0
      %518 = vmatprep.subr.mxu0 0.0
      %519 = vmatpush1.msra.mxu0 0.0
      %520 = vmatprep.subr.mxu0 0.0
      %521 = vmatpush1.msra.mxu0 0.0
      %522 = vmatprep.subr.mxu0 0.0
      %523 = vmatpush1.msra.mxu0 0.0
      %524 = vmatprep.subr.mxu0 0.0
      %525 = vmatpush1.msra.mxu0 0.0
      %526 = vmatprep.subr.mxu0 0.0
      %527 = vmatpush1.msra.mxu0 0.0
      %528 = vmatprep.subr.mxu0 0.0
      %529 = vmatpush1.msra.mxu0 0.0
      %530 = vmatprep.subr.mxu0 0.0
      %531 = vmatpush1.msra.mxu0 0.0
      %532 = vmatprep.subr.mxu0 0.0
      %533 = vmatpush1.msra.mxu0 0.0
      %534 = vmatprep.subr.mxu0 0.0
      %535 = vmatpush1.msra.mxu0 0.0
      %536 = vmatprep.subr.mxu0 0.0
      %537 = vmatpush1.msra.mxu0 0.0
      %538 = vmatprep.subr.mxu0 0.0
      %539 = vmatpush1.msra.mxu0 0.0
      %540 = vmatprep.subr.mxu0 0.0
      %541 = vmatpush1.msra.mxu0 0.0
      %542 = vmatprep.subr.mxu0 0.0
      %543 = vmatpush1.msra.mxu0 0.0
      %544 = vmatprep.subr.mxu0 0.0
      %545 = vmatpush1.msra.mxu0 0.0
      %546 = vmatprep.subr.mxu0 0.0
      %547 = vmatpush1.msra.mxu0 0.0
      %548 = vmatprep.subr.mxu0 0.0
      %549 = vmatpush1.msra.mxu0 0.0
      %550 = vmatprep.mubr.f32.mxu0 0.0
      %v551 = vand.u32 %v292, 4294901760
      %v552 = vsub.f32 %v292, %v551
      %553 = vmatmul.mubr.f32.gmra.mrb[0].mxu0 %v552
      %v554 = vpop.f32.mrb[0].mxu0
      %v555 = vadd.f32 %v469, %v554
      %v556 = vpop.f32.mrb[0].mxu0
      %557 = vmatprep.mubr.f32.mxu0 0.0
      %v558 = vand.u32 %v295, 4294901760
      %v559 = vsub.f32 %v295, %v558
      %560 = vmatmul.mubr.f32.gmra.mrb[0].mxu0 %v559
      %v561 = vpop.f32.mrb[0].mxu0
      %v562 = vadd.f32 %v475, %v561
      %v563 = vpop.f32.mrb[0].mxu0
      %564 = vmatprep.mubr.f32.mxu0 0.0
      %v565 = vand.u32 %v298, 4294901760
      %v566 = vsub.f32 %v298, %v565
      %567 = vmatmul.mubr.f32.gmra.mrb[0].mxu0 %v566
      %v568 = vpop.f32.mrb[0].mxu0
      %v569 = vadd.f32 %v481, %v568
      %v570 = vpop.f32.mrb[0].mxu0
      %571 = vdwg.mxu0
      %572 = vmatprep.subr.mxu0 0.0
      %v573 = vand.u32 %v288, 4294901760
      %574 = vmatpush1.msra.mxu0 %v573
      %575 = vmatprep.subr.mxu0 0.0
      %576 = vmatpush1.msra.mxu0 0.0
      %577 = vmatprep.subr.mxu0 0.0
      %578 = vmatpush1.msra.mxu0 0.0
      %579 = vmatprep.subr.mxu0 0.0
      %580 = vmatpush1.msra.mxu0 0.0
      %581 = vmatprep.subr.mxu0 0.0
      %582 = vmatpush1.msra.mxu0 0.0
      %583 = vmatprep.subr.mxu0 0.0
      %584 = vmatpush1.msra.mxu0 0.0
      %585 = vmatprep.subr.mxu0 0.0
      %586 = vmatpush1.msra.mxu0 0.0
      %587 = vmatprep.subr.mxu0 0.0
      %588 = vmatpush1.msra.mxu0 0.0
      %589 = vmatprep.subr.mxu0 0.0
      %590 = vmatpush1.msra.mxu0 0.0
      %591 = vmatprep.subr.mxu0 0.0
      %592 = vmatpush1.msra.mxu0 0.0
      %593 = vmatprep.subr.mxu0 0.0
      %594 = vmatpush1.msra.mxu0 0.0
      %595 = vmatprep.subr.mxu0 0.0
      %596 = vmatpush1.msra.mxu0 0.0
      %597 = vmatprep.subr.mxu0 0.0
      %598 = vmatpush1.msra.mxu0 0.0
      %599 = vmatprep.subr.mxu0 0.0
      %600 = vmatpush1.msra.mxu0 0.0
      %601 = vmatprep.subr.mxu0 0.0
      %602 = vmatpush1.msra.mxu0 0.0
      %603 = vmatprep.subr.mxu0 0.0
      %604 = vmatpush1.msra.mxu0 0.0
      %605 = vmatprep.subr.mxu0 0.0
      %606 = vmatpush1.msra.mxu0 0.0
      %607 = vmatprep.subr.mxu0 0.0
      %608 = vmatpush1.msra.mxu0 0.0
      %609 = vmatprep.subr.mxu0 0.0
      %610 = vmatpush1.msra.mxu0 0.0
      %611 = vmatprep.subr.mxu0 0.0
      %612 = vmatpush1.msra.mxu0 0.0
      %613 = vmatprep.subr.mxu0 0.0
      %614 = vmatpush1.msra.mxu0 0.0
      %615 = vmatprep.subr.mxu0 0.0
      %616 = vmatpush1.msra.mxu0 0.0
      %617 = vmatprep.subr.mxu0 0.0
      %618 = vmatpush1.msra.mxu0 0.0
      %619 = vmatprep.subr.mxu0 0.0
      %620 = vmatpush1.msra.mxu0 0.0
      %621 = vmatprep.subr.mxu0 0.0
      %622 = vmatpush1.msra.mxu0 0.0
      %623 = vmatprep.subr.mxu0 0.0
      %624 = vmatpush1.msra.mxu0 0.0
      %625 = vmatprep.subr.mxu0 0.0
      %626 = vmatpush1.msra.mxu0 0.0
      %627 = vmatprep.subr.mxu0 0.0
      %628 = vmatpush1.msra.mxu0 0.0
      %629 = vmatprep.subr.mxu0 0.0
      %630 = vmatpush1.msra.mxu0 0.0
      %631 = vmatprep.subr.mxu0 0.0
      %632 = vmatpush1.msra.mxu0 0.0
      %633 = vmatprep.subr.mxu0 0.0
      %634 = vmatpush1.msra.mxu0 0.0
      %635 = vmatprep.subr.mxu0 0.0
      %636 = vmatpush1.msra.mxu0 0.0
      %637 = vmatprep.mubr.f32.mxu0 0.0
      %v638 = vand.u32 %v292, 4294901760
      %v639 = vsub.f32 %v292, %v638
      %v640 = vand.u32 %v639, 4294901760
      %641 = vmatmul.mubr.f32.gmra.mrb[0].mxu0 %v640
      %v642 = vpop.f32.mrb[0].mxu0
      %v643 = vadd.f32 %v555, %v642
      %v644 = vpop.f32.mrb[0].mxu0
      %645 = vmatprep.mubr.f32.mxu0 0.0
      %v646 = vand.u32 %v295, 4294901760
      %v647 = vsub.f32 %v295, %v646
      %v648 = vand.u32 %v647, 4294901760
      %649 = vmatmul.mubr.f32.gmra.mrb[0].mxu0 %v648
      %v650 = vpop.f32.mrb[0].mxu0
      %v651 = vadd.f32 %v562, %v650
      %v652 = vpop.f32.mrb[0].mxu0
      %653 = vmatprep.mubr.f32.mxu0 0.0
      %v654 = vand.u32 %v298, 4294901760
      %v655 = vsub.f32 %v298, %v654
      %v656 = vand.u32 %v655, 4294901760
      %657 = vmatmul.mubr.f32.gmra.mrb[0].mxu0 %v656
      %v658 = vpop.f32.mrb[0].mxu0
      %v659 = vadd.f32 %v569, %v658
      %v660 = vpop.f32.mrb[0].mxu0
      %661 = vdwg.mxu0
      %662 = vmatprep.subr.mxu0 0.0
      %v663 = vand.u32 %v288, 4294901760
      %v664 = vsub.f32 %v288, %v663
      %v665 = vand.u32 %v664, 4294901760
      %666 = vmatpush1.msra.mxu0 %v665
      %667 = vmatprep.subr.mxu0 0.0
      %668 = vmatpush1.msra.mxu0 0.0
      %669 = vmatprep.subr.mxu0 0.0
      %670 = vmatpush1.msra.mxu0 0.0
      %671 = vmatprep.subr.mxu0 0.0
      %672 = vmatpush1.msra.mxu0 0.0
      %673 = vmatprep.subr.mxu0 0.0
      %674 = vmatpush1.msra.mxu0 0.0
      %675 = vmatprep.subr.mxu0 0.0
      %676 = vmatpush1.msra.mxu0 0.0
      %677 = vmatprep.subr.mxu0 0.0
      %678 = vmatpush1.msra.mxu0 0.0
      %679 = vmatprep.subr.mxu0 0.0
      %680 = vmatpush1.msra.mxu0 0.0
      %681 = vmatprep.subr.mxu0 0.0
      %682 = vmatpush1.msra.mxu0 0.0
      %683 = vmatprep.subr.mxu0 0.0
      %684 = vmatpush1.msra.mxu0 0.0
      %685 = vmatprep.subr.mxu0 0.0
      %686 = vmatpush1.msra.mxu0 0.0
      %687 = vmatprep.subr.mxu0 0.0
      %688 = vmatpush1.msra.mxu0 0.0
      %689 = vmatprep.subr.mxu0 0.0
      %690 = vmatpush1.msra.mxu0 0.0
      %691 = vmatprep.subr.mxu0 0.0
      %692 = vmatpush1.msra.mxu0 0.0
      %693 = vmatprep.subr.mxu0 0.0
      %694 = vmatpush1.msra.mxu0 0.0
      %695 = vmatprep.subr.mxu0 0.0
      %696 = vmatpush1.msra.mxu0 0.0
      %697 = vmatprep.subr.mxu0 0.0
      %698 = vmatpush1.msra.mxu0 0.0
      %699 = vmatprep.subr.mxu0 0.0
      %700 = vmatpush1.msra.mxu0 0.0
      %701 = vmatprep.subr.mxu0 0.0
      %702 = vmatpush1.msra.mxu0 0.0
      %703 = vmatprep.subr.mxu0 0.0
      %704 = vmatpush1.msra.mxu0 0.0
      %705 = vmatprep.subr.mxu0 0.0
      %706 = vmatpush1.msra.mxu0 0.0
      %707 = vmatprep.subr.mxu0 0.0
      %708 = vmatpush1.msra.mxu0 0.0
      %709 = vmatprep.subr.mxu0 0.0
      %710 = vmatpush1.msra.mxu0 0.0
      %711 = vmatprep.subr.mxu0 0.0
      %712 = vmatpush1.msra.mxu0 0.0
      %713 = vmatprep.subr.mxu0 0.0
      %714 = vmatpush1.msra.mxu0 0.0
      %715 = vmatprep.subr.mxu0 0.0
      %716 = vmatpush1.msra.mxu0 0.0
      %717 = vmatprep.subr.mxu0 0.0
      %718 = vmatpush1.msra.mxu0 0.0
      %719 = vmatprep.subr.mxu0 0.0
      %720 = vmatpush1.msra.mxu0 0.0
      %721 = vmatprep.subr.mxu0 0.0
      %722 = vmatpush1.msra.mxu0 0.0
      %723 = vmatprep.subr.mxu0 0.0
      %724 = vmatpush1.msra.mxu0 0.0
      %725 = vmatprep.subr.mxu0 0.0
      %726 = vmatpush1.msra.mxu0 0.0
      %727 = vmatprep.subr.mxu0 0.0
      %728 = vmatpush1.msra.mxu0 0.0
      %729 = vmatprep.mubr.f32.mxu0 0.0
      %v730 = vand.u32 %v292, 4294901760
      %731 = vmatmul.mubr.f32.gmra.mrb[0].mxu0 %v730
      %v732 = vpop.f32.mrb[0].mxu0
      %v733 = vadd.f32 %v643, %v732
      %v734 = vpop.f32.mrb[0].mxu0
      %735 = vmatprep.mubr.f32.mxu0 0.0
      %v736 = vand.u32 %v295, 4294901760
      %737 = vmatmul.mubr.f32.gmra.mrb[0].mxu0 %v736
      %v738 = vpop.f32.mrb[0].mxu0
      %v739 = vadd.f32 %v651, %v738
      %v740 = vpop.f32.mrb[0].mxu0
      %741 = vmatprep.mubr.f32.mxu0 0.0
      %v742 = vand.u32 %v298, 4294901760
      %743 = vmatmul.mubr.f32.gmra.mrb[0].mxu0 %v742
      %v744 = vpop.f32.mrb[0].mxu0
      %v745 = vadd.f32 %v659, %v744
      %v746 = vpop.f32.mrb[0].mxu0
      %747 = vdwg.mxu0
      %748 = vmatprep.subr.mxu0 0.0
      %v749 = vand.u32 %v288, 4294901760
      %750 = vmatpush1.msra.mxu0 %v749
      %751 = vmatprep.subr.mxu0 0.0
      %752 = vmatpush1.msra.mxu0 0.0
      %753 = vmatprep.subr.mxu0 0.0
      %754 = vmatpush1.msra.mxu0 0.0
      %755 = vmatprep.subr.mxu0 0.0
      %756 = vmatpush1.msra.mxu0 0.0
      %757 = vmatprep.subr.mxu0 0.0
      %758 = vmatpush1.msra.mxu0 0.0
      %759 = vmatprep.subr.mxu0 0.0
      %760 = vmatpush1.msra.mxu0 0.0
      %761 = vmatprep.subr.mxu0 0.0
      %762 = vmatpush1.msra.mxu0 0.0
      %763 = vmatprep.subr.mxu0 0.0
      %764 = vmatpush1.msra.mxu0 0.0
      %765 = vmatprep.subr.mxu0 0.0
      %766 = vmatpush1.msra.mxu0 0.0
      %767 = vmatprep.subr.mxu0 0.0
      %768 = vmatpush1.msra.mxu0 0.0
      %769 = vmatprep.subr.mxu0 0.0
      %770 = vmatpush1.msra.mxu0 0.0
      %771 = vmatprep.subr.mxu0 0.0
      %772 = vmatpush1.msra.mxu0 0.0
      %773 = vmatprep.subr.mxu0 0.0
      %774 = vmatpush1.msra.mxu0 0.0
      %775 = vmatprep.subr.mxu0 0.0
      %776 = vmatpush1.msra.mxu0 0.0
      %777 = vmatprep.subr.mxu0 0.0
      %778 = vmatpush1.msra.mxu0 0.0
      %779 = vmatprep.subr.mxu0 0.0
      %780 = vmatpush1.msra.mxu0 0.0
      %781 = vmatprep.subr.mxu0 0.0
      %782 = vmatpush1.msra.mxu0 0.0
      %783 = vmatprep.subr.mxu0 0.0
      %784 = vmatpush1.msra.mxu0 0.0
      %785 = vmatprep.subr.mxu0 0.0
      %786 = vmatpush1.msra.mxu0 0.0
      %787 = vmatprep.subr.mxu0 0.0
      %788 = vmatpush1.msra.mxu0 0.0
      %789 = vmatprep.subr.mxu0 0.0
      %790 = vmatpush1.msra.mxu0 0.0
      %791 = vmatprep.subr.mxu0 0.0
      %792 = vmatpush1.msra.mxu0 0.0
      %793 = vmatprep.subr.mxu0 0.0
      %794 = vmatpush1.msra.mxu0 0.0
      %795 = vmatprep.subr.mxu0 0.0
      %796 = vmatpush1.msra.mxu0 0.0
      %797 = vmatprep.subr.mxu0 0.0
      %798 = vmatpush1.msra.mxu0 0.0
      %799 = vmatprep.subr.mxu0 0.0
      %800 = vmatpush1.msra.mxu0 0.0
      %801 = vmatprep.subr.mxu0 0.0
      %802 = vmatpush1.msra.mxu0 0.0
      %803 = vmatprep.subr.mxu0 0.0
      %804 = vmatpush1.msra.mxu0 0.0
      %805 = vmatprep.subr.mxu0 0.0
      %806 = vmatpush1.msra.mxu0 0.0
      %807 = vmatprep.subr.mxu0 0.0
      %808 = vmatpush1.msra.mxu0 0.0
      %809 = vmatprep.subr.mxu0 0.0
      %810 = vmatpush1.msra.mxu0 0.0
      %811 = vmatprep.subr.mxu0 0.0
      %812 = vmatpush1.msra.mxu0 0.0
      %813 = vmatprep.mubr.f32.mxu0 0.0
      %v814 = vand.u32 %v292, 4294901760
      %815 = vmatmul.mubr.f32.gmra.mrb[0].mxu0 %v814
      %v816 = vpop.f32.mrb[0].mxu0
      %v817 = vadd.f32 %v733, %v816
      %v818 = vpop.f32.mrb[0].mxu0
      %819 = vmatprep.mubr.f32.mxu0 0.0
      %v820 = vand.u32 %v295, 4294901760
      %821 = vmatmul.mubr.f32.gmra.mrb[0].mxu0 %v820
      %v822 = vpop.f32.mrb[0].mxu0
      %v823 = vadd.f32 %v739, %v822
      %v824 = vpop.f32.mrb[0].mxu0
      %825 = vmatprep.mubr.f32.mxu0 0.0
      %v826 = vand.u32 %v298, 4294901760
      %827 = vmatmul.mubr.f32.gmra.mrb[0].mxu0 %v826
      %v828 = vpop.f32.mrb[0].mxu0
      %v829 = vadd.f32 %v745, %v828
      %v830 = vpop.f32.mrb[0].mxu0
      %831 = vdwg.mxu0
      %v833 = vsel %vm290, %v279, 0
      %v836 = vsel %vm290, %v280, 0
      %v839 = vsel %vm290, %v281, 0
      %841 = vmatprep.subr.mxu0 0.0
      %v842 = vand.u32 %v278, 4294901760
      %843 = vmatpush1.msra.mxu0 %v842
      %844 = vmatprep.subr.mxu0 0.0
      %845 = vmatpush1.msra.mxu0 0.0
      %846 = vmatprep.subr.mxu0 0.0
      %847 = vmatpush1.msra.mxu0 0.0
      %848 = vmatprep.subr.mxu0 0.0
      %849 = vmatpush1.msra.mxu0 0.0
      %850 = vmatprep.subr.mxu0 0.0
      %851 = vmatpush1.msra.mxu0 0.0
      %852 = vmatprep.subr.mxu0 0.0
      %853 = vmatpush1.msra.mxu0 0.0
      %854 = vmatprep.subr.mxu0 0.0
      %855 = vmatpush1.msra.mxu0 0.0
      %856 = vmatprep.subr.mxu0 0.0
      %857 = vmatpush1.msra.mxu0 0.0
      %858 = vmatprep.subr.mxu0 0.0
      %859 = vmatpush1.msra.mxu0 0.0
      %860 = vmatprep.subr.mxu0 0.0
      %861 = vmatpush1.msra.mxu0 0.0
      %862 = vmatprep.subr.mxu0 0.0
      %863 = vmatpush1.msra.mxu0 0.0
      %864 = vmatprep.subr.mxu0 0.0
      %865 = vmatpush1.msra.mxu0 0.0
      %866 = vmatprep.subr.mxu0 0.0
      %867 = vmatpush1.msra.mxu0 0.0
      %868 = vmatprep.subr.mxu0 0.0
      %869 = vmatpush1.msra.mxu0 0.0
      %870 = vmatprep.subr.mxu0 0.0
      %871 = vmatpush1.msra.mxu0 0.0
      %872 = vmatprep.subr.mxu0 0.0
      %873 = vmatpush1.msra.mxu0 0.0
      %874 = vmatprep.subr.mxu0 0.0
      %875 = vmatpush1.msra.mxu0 0.0
      %876 = vmatprep.subr.mxu0 0.0
      %877 = vmatpush1.msra.mxu0 0.0
      %878 = vmatprep.subr.mxu0 0.0
      %879 = vmatpush1.msra.mxu0 0.0
      %880 = vmatprep.subr.mxu0 0.0
      %881 = vmatpush1.msra.mxu0 0.0
      %882 = vmatprep.subr.mxu0 0.0
      %883 = vmatpush1.msra.mxu0 0.0
      %884 = vmatprep.subr.mxu0 0.0
      %885 = vmatpush1.msra.mxu0 0.0
      %886 = vmatprep.subr.mxu0 0.0
      %887 = vmatpush1.msra.mxu0 0.0
      %888 = vmatprep.subr.mxu0 0.0
      %889 = vmatpush1.msra.mxu0 0.0
      %890 = vmatprep.subr.mxu0 0.0
      %891 = vmatpush1.msra.mxu0 0.0
      %892 = vmatprep.subr.mxu0 0.0
      %893 = vmatpush1.msra.mxu0 0.0
      %894 = vmatprep.subr.mxu0 0.0
      %895 = vmatpush1.msra.mxu0 0.0
      %896 = vmatprep.subr.mxu0 0.0
      %897 = vmatpush1.msra.mxu0 0.0
      %898 = vmatprep.subr.mxu0 0.0
      %899 = vmatpush1.msra.mxu0 0.0
      %900 = vmatprep.subr.mxu0 0.0
      %901 = vmatpush1.msra.mxu0 0.0
      %902 = vmatprep.subr.mxu0 0.0
      %903 = vmatpush1.msra.mxu0 0.0
      %904 = vmatprep.subr.mxu0 0.0
      %905 = vmatpush1.msra.mxu0 0.0
      %906 = vmatprep.mubr.f32.mxu0 0.0
      %v907 = vand.u32 %v833, 4294901760
      %v908 = vsub.f32 %v833, %v907
      %v909 = vand.u32 %v908, 4294901760
      %v910 = vsub.f32 %v908, %v909
      %v911 = vand.u32 %v910, 4294901760
      %912 = vmatmul.mubr.f32.gmra.mrb[0].mxu0 %v911
      %v913 = vpop.f32.mrb[0].mxu0
      %v914 = vadd.f32 %v817, %v913
      %v915 = vpop.f32.mrb[0].mxu0
      %916 = vmatprep.mubr.f32.mxu0 0.0
      %v917 = vand.u32 %v836, 4294901760
      %v918 = vsub.f32 %v836, %v917
      %v919 = vand.u32 %v918, 4294901760
      %v920 = vsub.f32 %v918, %v919
      %v921 = vand.u32 %v920, 4294901760
      %922 = vmatmul.mubr.f32.gmra.mrb[0].mxu0 %v921
      %v923 = vpop.f32.mrb[0].mxu0
      %v924 = vadd.f32 %v823, %v923
      %v925 = vpop.f32.mrb[0].mxu0
      %926 = vmatprep.mubr.f32.mxu0 0.0
      %v927 = vand.u32 %v839, 4294901760
      %v928 = vsub.f32 %v839, %v927
      %v929 = vand.u32 %v928, 4294901760
      %v930 = vsub.f32 %v928, %v929
      %v931 = vand.u32 %v930, 4294901760
      %932 = vmatmul.mubr.f32.gmra.mrb[0].mxu0 %v931
      %v933 = vpop.f32.mrb[0].mxu0
      %v934 = vadd.f32 %v829, %v933
      %v935 = vpop.f32.mrb[0].mxu0
      %936 = vdwg.mxu0
      %937 = vmatprep.subr.mxu0 0.0
      %v938 = vand.u32 %v278, 4294901760
      %v939 = vsub.f32 %v278, %v938
      %v940 = vand.u32 %v939, 4294901760
      %v941 = vsub.f32 %v939, %v940
      %v942 = vand.u32 %v941, 4294901760
      %943 = vmatpush1.msra.mxu0 %v942
      %944 = vmatprep.subr.mxu0 0.0
      %945 = vmatpush1.msra.mxu0 0.0
      %946 = vmatprep.subr.mxu0 0.0
      %947 = vmatpush1.msra.mxu0 0.0
      %948 = vmatprep.subr.mxu0 0.0
      %949 = vmatpush1.msra.mxu0 0.0
      %950 = vmatprep.subr.mxu0 0.0
      %951 = vmatpush1.msra.mxu0 0.0
      %952 = vmatprep.subr.mxu0 0.0
      %953 = vmatpush1.msra.mxu0 0.0
      %954 = vmatprep.subr.mxu0 0.0
      %955 = vmatpush1.msra.mxu0 0.0
      %956 = vmatprep.subr.mxu0 0.0
      %957 = vmatpush1.msra.mxu0 0.0
      %958 = vmatprep.subr.mxu0 0.0
      %959 = vmatpush1.msra.mxu0 0.0
      %960 = vmatprep.subr.mxu0 0.0
      %961 = vmatpush1.msra.mxu0 0.0
      %962 = vmatprep.subr.mxu0 0.0
      %963 = vmatpush1.msra.mxu0 0.0
      %964 = vmatprep.subr.mxu0 0.0
      %965 = vmatpush1.msra.mxu0 0.0
      %966 = vmatprep.subr.mxu0 0.0
      %967 = vmatpush1.msra.mxu0 0.0
      %968 = vmatprep.subr.mxu0 0.0
      %969 = vmatpush1.msra.mxu0 0.0
      %970 = vmatprep.subr.mxu0 0.0
      %971 = vmatpush1.msra.mxu0 0.0
      %972 = vmatprep.subr.mxu0 0.0
      %973 = vmatpush1.msra.mxu0 0.0
      %974 = vmatprep.subr.mxu0 0.0
      %975 = vmatpush1.msra.mxu0 0.0
      %976 = vmatprep.subr.mxu0 0.0
      %977 = vmatpush1.msra.mxu0 0.0
      %978 = vmatprep.subr.mxu0 0.0
      %979 = vmatpush1.msra.mxu0 0.0
      %980 = vmatprep.subr.mxu0 0.0
      %981 = vmatpush1.msra.mxu0 0.0
      %982 = vmatprep.subr.mxu0 0.0
      %983 = vmatpush1.msra.mxu0 0.0
      %984 = vmatprep.subr.mxu0 0.0
      %985 = vmatpush1.msra.mxu0 0.0
      %986 = vmatprep.subr.mxu0 0.0
      %987 = vmatpush1.msra.mxu0 0.0
      %988 = vmatprep.subr.mxu0 0.0
      %989 = vmatpush1.msra.mxu0 0.0
      %990 = vmatprep.subr.mxu0 0.0
      %991 = vmatpush1.msra.mxu0 0.0
      %992 = vmatprep.subr.mxu0 0.0
      %993 = vmatpush1.msra.mxu0 0.0
      %994 = vmatprep.subr.mxu0 0.0
      %995 = vmatpush1.msra.mxu0 0.0
      %996 = vmatprep.subr.mxu0 0.0
      %997 = vmatpush1.msra.mxu0 0.0
      %998 = vmatprep.subr.mxu0 0.0
      %999 = vmatpush1.msra.mxu0 0.0
      %1000 = vmatprep.subr.mxu0 0.0
      %1001 = vmatpush1.msra.mxu0 0.0
      %1002 = vmatprep.subr.mxu0 0.0
      %1003 = vmatpush1.msra.mxu0 0.0
      %1004 = vmatprep.subr.mxu0 0.0
      %1005 = vmatpush1.msra.mxu0 0.0
      %1006 = vmatprep.mubr.f32.mxu0 0.0
      %v1007 = vand.u32 %v833, 4294901760
      %1008 = vmatmul.mubr.f32.gmra.mrb[0].mxu0 %v1007
      %v1009 = vpop.f32.mrb[0].mxu0
      %v1010 = vadd.f32 %v914, %v1009
      %v1011 = vpop.f32.mrb[0].mxu0
      %1012 = vmatprep.mubr.f32.mxu0 0.0
      %v1013 = vand.u32 %v836, 4294901760
      %1014 = vmatmul.mubr.f32.gmra.mrb[0].mxu0 %v1013
      %v1015 = vpop.f32.mrb[0].mxu0
      %v1016 = vadd.f32 %v924, %v1015
      %v1017 = vpop.f32.mrb[0].mxu0
      %1018 = vmatprep.mubr.f32.mxu0 0.0
      %v1019 = vand.u32 %v839, 4294901760
      %1020 = vmatmul.mubr.f32.gmra.mrb[0].mxu0 %v1019
      %v1021 = vpop.f32.mrb[0].mxu0
      %v1022 = vadd.f32 %v934, %v1021
      %v1023 = vpop.f32.mrb[0].mxu0
      %1024 = vdwg.mxu0
      %1025 = vmatprep.subr.mxu0 0.0
      %v1026 = vand.u32 %v278, 4294901760
      %v1027 = vsub.f32 %v278, %v1026
      %1028 = vmatpush1.msra.mxu0 %v1027
      %1029 = vmatprep.subr.mxu0 0.0
      %1030 = vmatpush1.msra.mxu0 0.0
      %1031 = vmatprep.subr.mxu0 0.0
      %1032 = vmatpush1.msra.mxu0 0.0
      %1033 = vmatprep.subr.mxu0 0.0
      %1034 = vmatpush1.msra.mxu0 0.0
      %1035 = vmatprep.subr.mxu0 0.0
      %1036 = vmatpush1.msra.mxu0 0.0
      %1037 = vmatprep.subr.mxu0 0.0
      %1038 = vmatpush1.msra.mxu0 0.0
      %1039 = vmatprep.subr.mxu0 0.0
      %1040 = vmatpush1.msra.mxu0 0.0
      %1041 = vmatprep.subr.mxu0 0.0
      %1042 = vmatpush1.msra.mxu0 0.0
      %1043 = vmatprep.subr.mxu0 0.0
      %1044 = vmatpush1.msra.mxu0 0.0
      %1045 = vmatprep.subr.mxu0 0.0
      %1046 = vmatpush1.msra.mxu0 0.0
      %1047 = vmatprep.subr.mxu0 0.0
      %1048 = vmatpush1.msra.mxu0 0.0
      %1049 = vmatprep.subr.mxu0 0.0
      %1050 = vmatpush1.msra.mxu0 0.0
      %1051 = vmatprep.subr.mxu0 0.0
      %1052 = vmatpush1.msra.mxu0 0.0
      %1053 = vmatprep.subr.mxu0 0.0
      %1054 = vmatpush1.msra.mxu0 0.0
      %1055 = vmatprep.subr.mxu0 0.0
      %1056 = vmatpush1.msra.mxu0 0.0
      %1057 = vmatprep.subr.mxu0 0.0
      %1058 = vmatpush1.msra.mxu0 0.0
      %1059 = vmatprep.subr.mxu0 0.0
      %1060 = vmatpush1.msra.mxu0 0.0
      %1061 = vmatprep.subr.mxu0 0.0
      %1062 = vmatpush1.msra.mxu0 0.0
      %1063 = vmatprep.subr.mxu0 0.0
      %1064 = vmatpush1.msra.mxu0 0.0
      %1065 = vmatprep.subr.mxu0 0.0
      %1066 = vmatpush1.msra.mxu0 0.0
      %1067 = vmatprep.subr.mxu0 0.0
      %1068 = vmatpush1.msra.mxu0 0.0
      %1069 = vmatprep.subr.mxu0 0.0
      %1070 = vmatpush1.msra.mxu0 0.0
      %1071 = vmatprep.subr.mxu0 0.0
      %1072 = vmatpush1.msra.mxu0 0.0
      %1073 = vmatprep.subr.mxu0 0.0
      %1074 = vmatpush1.msra.mxu0 0.0
      %1075 = vmatprep.subr.mxu0 0.0
      %1076 = vmatpush1.msra.mxu0 0.0
      %1077 = vmatprep.subr.mxu0 0.0
      %1078 = vmatpush1.msra.mxu0 0.0
      %1079 = vmatprep.subr.mxu0 0.0
      %1080 = vmatpush1.msra.mxu0 0.0
      %1081 = vmatprep.subr.mxu0 0.0
      %1082 = vmatpush1.msra.mxu0 0.0
      %1083 = vmatprep.subr.mxu0 0.0
      %1084 = vmatpush1.msra.mxu0 0.0
      %1085 = vmatprep.subr.mxu0 0.0
      %1086 = vmatpush1.msra.mxu0 0.0
      %1087 = vmatprep.subr.mxu0 0.0
      %1088 = vmatpush1.msra.mxu0 0.0
      %1089 = vmatprep.subr.mxu0 0.0
      %1090 = vmatpush1.msra.mxu0 0.0
      %1091 = vmatprep.mubr.f32.mxu0 0.0
      %v1092 = vand.u32 %v833, 4294901760
      %v1093 = vsub.f32 %v833, %v1092
      %1094 = vmatmul.mubr.f32.gmra.mrb[0].mxu0 %v1093
      %v1095 = vpop.f32.mrb[0].mxu0
      %v1096 = vadd.f32 %v1010, %v1095
      %v1097 = vpop.f32.mrb[0].mxu0
      %1098 = vmatprep.mubr.f32.mxu0 0.0
      %v1099 = vand.u32 %v836, 4294901760
      %v1100 = vsub.f32 %v836, %v1099
      %1101 = vmatmul.mubr.f32.gmra.mrb[0].mxu0 %v1100
      %v1102 = vpop.f32.mrb[0].mxu0
      %v1103 = vadd.f32 %v1016, %v1102
      %v1104 = vpop.f32.mrb[0].mxu0
      %1105 = vmatprep.mubr.f32.mxu0 0.0
      %v1106 = vand.u32 %v839, 4294901760
      %v1107 = vsub.f32 %v839, %v1106
      %1108 = vmatmul.mubr.f32.gmra.mrb[0].mxu0 %v1107
      %v1109 = vpop.f32.mrb[0].mxu0
      %v1110 = vadd.f32 %v1022, %v1109
      %v1111 = vpop.f32.mrb[0].mxu0
      %1112 = vdwg.mxu0
      %1113 = vmatprep.subr.mxu0 0.0
      %v1114 = vand.u32 %v278, 4294901760
      %1115 = vmatpush1.msra.mxu0 %v1114
      %1116 = vmatprep.subr.mxu0 0.0
      %1117 = vmatpush1.msra.mxu0 0.0
      %1118 = vmatprep.subr.mxu0 0.0
      %1119 = vmatpush1.msra.mxu0 0.0
      %1120 = vmatprep.subr.mxu0 0.0
      %1121 = vmatpush1.msra.mxu0 0.0
      %1122 = vmatprep.subr.mxu0 0.0
      %1123 = vmatpush1.msra.mxu0 0.0
      %1124 = vmatprep.subr.mxu0 0.0
      %1125 = vmatpush1.msra.mxu0 0.0
      %1126 = vmatprep.subr.mxu0 0.0
      %1127 = vmatpush1.msra.mxu0 0.0
      %1128 = vmatprep.subr.mxu0 0.0
      %1129 = vmatpush1.msra.mxu0 0.0
      %1130 = vmatprep.subr.mxu0 0.0
      %1131 = vmatpush1.msra.mxu0 0.0
      %1132 = vmatprep.subr.mxu0 0.0
      %1133 = vmatpush1.msra.mxu0 0.0
      %1134 = vmatprep.subr.mxu0 0.0
      %1135 = vmatpush1.msra.mxu0 0.0
      %1136 = vmatprep.subr.mxu0 0.0
      %1137 = vmatpush1.msra.mxu0 0.0
      %1138 = vmatprep.subr.mxu0 0.0
      %1139 = vmatpush1.msra.mxu0 0.0
      %1140 = vmatprep.subr.mxu0 0.0
      %1141 = vmatpush1.msra.mxu0 0.0
      %1142 = vmatprep.subr.mxu0 0.0
      %1143 = vmatpush1.msra.mxu0 0.0
      %1144 = vmatprep.subr.mxu0 0.0
      %1145 = vmatpush1.msra.mxu0 0.0
      %1146 = vmatprep.subr.mxu0 0.0
      %1147 = vmatpush1.msra.mxu0 0.0
      %1148 = vmatprep.subr.mxu0 0.0
      %1149 = vmatpush1.msra.mxu0 0.0
      %1150 = vmatprep.subr.mxu0 0.0
      %1151 = vmatpush1.msra.mxu0 0.0
      %1152 = vmatprep.subr.mxu0 0.0
      %1153 = vmatpush1.msra.mxu0 0.0
      %1154 = vmatprep.subr.mxu0 0.0
      %1155 = vmatpush1.msra.mxu0 0.0
      %1156 = vmatprep.subr.mxu0 0.0
      %1157 = vmatpush1.msra.mxu0 0.0
      %1158 = vmatprep.subr.mxu0 0.0
      %1159 = vmatpush1.msra.mxu0 0.0
      %1160 = vmatprep.subr.mxu0 0.0
      %1161 = vmatpush1.msra.mxu0 0.0
      %1162 = vmatprep.subr.mxu0 0.0
      %1163 = vmatpush1.msra.mxu0 0.0
      %1164 = vmatprep.subr.mxu0 0.0
      %1165 = vmatpush1.msra.mxu0 0.0
      %1166 = vmatprep.subr.mxu0 0.0
      %1167 = vmatpush1.msra.mxu0 0.0
      %1168 = vmatprep.subr.mxu0 0.0
      %1169 = vmatpush1.msra.mxu0 0.0
      %1170 = vmatprep.subr.mxu0 0.0
      %1171 = vmatpush1.msra.mxu0 0.0
      %1172 = vmatprep.subr.mxu0 0.0
      %1173 = vmatpush1.msra.mxu0 0.0
      %1174 = vmatprep.subr.mxu0 0.0
      %1175 = vmatpush1.msra.mxu0 0.0
      %1176 = vmatprep.subr.mxu0 0.0
      %1177 = vmatpush1.msra.mxu0 0.0
      %1178 = vmatprep.mubr.f32.mxu0 0.0
      %v1179 = vand.u32 %v833, 4294901760
      %v1180 = vsub.f32 %v833, %v1179
      %v1181 = vand.u32 %v1180, 4294901760
      %1182 = vmatmul.mubr.f32.gmra.mrb[0].mxu0 %v1181
      %v1183 = vpop.f32.mrb[0].mxu0
      %v1184 = vadd.f32 %v1096, %v1183
      %v1185 = vpop.f32.mrb[0].mxu0
      %1186 = vmatprep.mubr.f32.mxu0 0.0
      %v1187 = vand.u32 %v836, 4294901760
      %v1188 = vsub.f32 %v836, %v1187
      %v1189 = vand.u32 %v1188, 4294901760
      %1190 = vmatmul.mubr.f32.gmra.mrb[0].mxu0 %v1189
      %v1191 = vpop.f32.mrb[0].mxu0
      %v1192 = vadd.f32 %v1103, %v1191
      %v1193 = vpop.f32.mrb[0].mxu0
      %1194 = vmatprep.mubr.f32.mxu0 0.0
      %v1195 = vand.u32 %v839, 4294901760
      %v1196 = vsub.f32 %v839, %v1195
      %v1197 = vand.u32 %v1196, 4294901760
      %1198 = vmatmul.mubr.f32.gmra.mrb[0].mxu0 %v1197
      %v1199 = vpop.f32.mrb[0].mxu0
      %v1200 = vadd.f32 %v1110, %v1199
      %v1201 = vpop.f32.mrb[0].mxu0
      %1202 = vdwg.mxu0
      %1203 = vmatprep.subr.mxu0 0.0
      %v1204 = vand.u32 %v278, 4294901760
      %v1205 = vsub.f32 %v278, %v1204
      %v1206 = vand.u32 %v1205, 4294901760
      %1207 = vmatpush1.msra.mxu0 %v1206
      %1208 = vmatprep.subr.mxu0 0.0
      %1209 = vmatpush1.msra.mxu0 0.0
      %1210 = vmatprep.subr.mxu0 0.0
      %1211 = vmatpush1.msra.mxu0 0.0
      %1212 = vmatprep.subr.mxu0 0.0
      %1213 = vmatpush1.msra.mxu0 0.0
      %1214 = vmatprep.subr.mxu0 0.0
      %1215 = vmatpush1.msra.mxu0 0.0
      %1216 = vmatprep.subr.mxu0 0.0
      %1217 = vmatpush1.msra.mxu0 0.0
      %1218 = vmatprep.subr.mxu0 0.0
      %1219 = vmatpush1.msra.mxu0 0.0
      %1220 = vmatprep.subr.mxu0 0.0
      %1221 = vmatpush1.msra.mxu0 0.0
      %1222 = vmatprep.subr.mxu0 0.0
      %1223 = vmatpush1.msra.mxu0 0.0
      %1224 = vmatprep.subr.mxu0 0.0
      %1225 = vmatpush1.msra.mxu0 0.0
      %1226 = vmatprep.subr.mxu0 0.0
      %1227 = vmatpush1.msra.mxu0 0.0
      %1228 = vmatprep.subr.mxu0 0.0
      %1229 = vmatpush1.msra.mxu0 0.0
      %1230 = vmatprep.subr.mxu0 0.0
      %1231 = vmatpush1.msra.mxu0 0.0
      %1232 = vmatprep.subr.mxu0 0.0
      %1233 = vmatpush1.msra.mxu0 0.0
      %1234 = vmatprep.subr.mxu0 0.0
      %1235 = vmatpush1.msra.mxu0 0.0
      %1236 = vmatprep.subr.mxu0 0.0
      %1237 = vmatpush1.msra.mxu0 0.0
      %1238 = vmatprep.subr.mxu0 0.0
      %1239 = vmatpush1.msra.mxu0 0.0
      %1240 = vmatprep.subr.mxu0 0.0
      %1241 = vmatpush1.msra.mxu0 0.0
      %1242 = vmatprep.subr.mxu0 0.0
      %1243 = vmatpush1.msra.mxu0 0.0
      %1244 = vmatprep.subr.mxu0 0.0
      %1245 = vmatpush1.msra.mxu0 0.0
      %1246 = vmatprep.subr.mxu0 0.0
      %1247 = vmatpush1.msra.mxu0 0.0
      %1248 = vmatprep.subr.mxu0 0.0
      %1249 = vmatpush1.msra.mxu0 0.0
      %1250 = vmatprep.subr.mxu0 0.0
      %1251 = vmatpush1.msra.mxu0 0.0
      %1252 = vmatprep.subr.mxu0 0.0
      %1253 = vmatpush1.msra.mxu0 0.0
      %1254 = vmatprep.subr.mxu0 0.0
      %1255 = vmatpush1.msra.mxu0 0.0
      %1256 = vmatprep.subr.mxu0 0.0
      %1257 = vmatpush1.msra.mxu0 0.0
      %1258 = vmatprep.subr.mxu0 0.0
      %1259 = vmatpush1.msra.mxu0 0.0
      %1260 = vmatprep.subr.mxu0 0.0
      %1261 = vmatpush1.msra.mxu0 0.0
      %1262 = vmatprep.subr.mxu0 0.0
      %1263 = vmatpush1.msra.mxu0 0.0
      %1264 = vmatprep.subr.mxu0 0.0
      %1265 = vmatpush1.msra.mxu0 0.0
      %1266 = vmatprep.subr.mxu0 0.0
      %1267 = vmatpush1.msra.mxu0 0.0
      %1268 = vmatprep.subr.mxu0 0.0
      %1269 = vmatpush1.msra.mxu0 0.0
      %1270 = vmatprep.mubr.f32.mxu0 0.0
      %v1271 = vand.u32 %v833, 4294901760
      %1272 = vmatmul.mubr.f32.gmra.mrb[0].mxu0 %v1271
      %v1273 = vpop.f32.mrb[0].mxu0
      %v1274 = vadd.f32 %v1184, %v1273
      %v1275 = vpop.f32.mrb[0].mxu0
      %1276 = vmatprep.mubr.f32.mxu0 0.0
      %v1277 = vand.u32 %v836, 4294901760
      %1278 = vmatmul.mubr.f32.gmra.mrb[0].mxu0 %v1277
      %v1279 = vpop.f32.mrb[0].mxu0
      %v1280 = vadd.f32 %v1192, %v1279
      %v1281 = vpop.f32.mrb[0].mxu0
      %1282 = vmatprep.mubr.f32.mxu0 0.0
      %v1283 = vand.u32 %v839, 4294901760
      %1284 = vmatmul.mubr.f32.gmra.mrb[0].mxu0 %v1283
      %v1285 = vpop.f32.mrb[0].mxu0
      %v1286 = vadd.f32 %v1200, %v1285
      %v1287 = vpop.f32.mrb[0].mxu0
      %1288 = vdwg.mxu0
      %1289 = vmatprep.subr.mxu0 0.0
      %v1290 = vand.u32 %v278, 4294901760
      %1291 = vmatpush1.msra.mxu0 %v1290
      %1292 = vmatprep.subr.mxu0 0.0
      %1293 = vmatpush1.msra.mxu0 0.0
      %1294 = vmatprep.subr.mxu0 0.0
      %1295 = vmatpush1.msra.mxu0 0.0
      %1296 = vmatprep.subr.mxu0 0.0
      %1297 = vmatpush1.msra.mxu0 0.0
      %1298 = vmatprep.subr.mxu0 0.0
      %1299 = vmatpush1.msra.mxu0 0.0
      %1300 = vmatprep.subr.mxu0 0.0
      %1301 = vmatpush1.msra.mxu0 0.0
      %1302 = vmatprep.subr.mxu0 0.0
      %1303 = vmatpush1.msra.mxu0 0.0
      %1304 = vmatprep.subr.mxu0 0.0
      %1305 = vmatpush1.msra.mxu0 0.0
      %1306 = vmatprep.subr.mxu0 0.0
      %1307 = vmatpush1.msra.mxu0 0.0
      %1308 = vmatprep.subr.mxu0 0.0
      %1309 = vmatpush1.msra.mxu0 0.0
      %1310 = vmatprep.subr.mxu0 0.0
      %1311 = vmatpush1.msra.mxu0 0.0
      %1312 = vmatprep.subr.mxu0 0.0
      %1313 = vmatpush1.msra.mxu0 0.0
      %1314 = vmatprep.subr.mxu0 0.0
      %1315 = vmatpush1.msra.mxu0 0.0
      %1316 = vmatprep.subr.mxu0 0.0
      %1317 = vmatpush1.msra.mxu0 0.0
      %1318 = vmatprep.subr.mxu0 0.0
      %1319 = vmatpush1.msra.mxu0 0.0
      %1320 = vmatprep.subr.mxu0 0.0
      %1321 = vmatpush1.msra.mxu0 0.0
      %1322 = vmatprep.subr.mxu0 0.0
      %1323 = vmatpush1.msra.mxu0 0.0
      %1324 = vmatprep.subr.mxu0 0.0
      %1325 = vmatpush1.msra.mxu0 0.0
      %1326 = vmatprep.subr.mxu0 0.0
      %1327 = vmatpush1.msra.mxu0 0.0
      %1328 = vmatprep.subr.mxu0 0.0
      %1329 = vmatpush1.msra.mxu0 0.0
      %1330 = vmatprep.subr.mxu0 0.0
      %1331 = vmatpush1.msra.mxu0 0.0
      %1332 = vmatprep.subr.mxu0 0.0
      %1333 = vmatpush1.msra.mxu0 0.0
      %1334 = vmatprep.subr.mxu0 0.0
      %1335 = vmatpush1.msra.mxu0 0.0
      %1336 = vmatprep.subr.mxu0 0.0
      %1337 = vmatpush1.msra.mxu0 0.0
      %1338 = vmatprep.subr.mxu0 0.0
      %1339 = vmatpush1.msra.mxu0 0.0
      %1340 = vmatprep.subr.mxu0 0.0
      %1341 = vmatpush1.msra.mxu0 0.0
      %1342 = vmatprep.subr.mxu0 0.0
      %1343 = vmatpush1.msra.mxu0 0.0
      %1344 = vmatprep.subr.mxu0 0.0
      %1345 = vmatpush1.msra.mxu0 0.0
      %1346 = vmatprep.subr.mxu0 0.0
      %1347 = vmatpush1.msra.mxu0 0.0
      %1348 = vmatprep.subr.mxu0 0.0
      %1349 = vmatpush1.msra.mxu0 0.0
      %1350 = vmatprep.subr.mxu0 0.0
      %1351 = vmatpush1.msra.mxu0 0.0
      %1352 = vmatprep.subr.mxu0 0.0
      %1353 = vmatpush1.msra.mxu0 0.0
      %1354 = vmatprep.mubr.f32.mxu0 0.0
      %v1355 = vand.u32 %v833, 4294901760
      %1356 = vmatmul.mubr.f32.gmra.mrb[0].mxu0 %v1355
      %v1357 = vpop.f32.mrb[0].mxu0
      %v1358 = vadd.f32 %v1274, %v1357
      %v1359 = vpop.f32.mrb[0].mxu0
      %1360 = vmatprep.mubr.f32.mxu0 0.0
      %v1361 = vand.u32 %v836, 4294901760
      %1362 = vmatmul.mubr.f32.gmra.mrb[0].mxu0 %v1361
      %v1363 = vpop.f32.mrb[0].mxu0
      %v1364 = vadd.f32 %v1280, %v1363
      %v1365 = vpop.f32.mrb[0].mxu0
      %1366 = vmatprep.mubr.f32.mxu0 0.0
      %v1367 = vand.u32 %v839, 4294901760
      %1368 = vmatmul.mubr.f32.gmra.mrb[0].mxu0 %v1367
      %v1369 = vpop.f32.mrb[0].mxu0
      %v1370 = vadd.f32 %v1286, %v1369
      %v1371 = vpop.f32.mrb[0].mxu0
      %1372 = vdwg.mxu0
      %s1373 = scalar_lea.vmem %s2, 48
      %v1374 = vld [vmem:[%s1373] sm:$0xff]
      %v1375 = vld [vmem:[%s1373 + $0x8] sm:$0xff]
      %v1376 = vld [vmem:[%s1373 + $0x10] sm:$0xff]
      %1377 = vrot.lane.b32.xlu0 %v278, 126
      %v1378 = vpop.permute.xlu0 %1377
      %v1381 = vsel %vm290, %v1374, 0
      %v1384 = vsel %vm290, %v1375, 0
      %v1387 = vsel %vm290, %v1376, 0
      %1389 = vmatprep.subr.mxu0 0.0
      %v1390 = vand.u32 %v1378, 4294901760
      %1391 = vmatpush1.msra.mxu0 %v1390
      %1392 = vmatprep.subr.mxu0 0.0
      %1393 = vmatpush1.msra.mxu0 0.0
      %1394 = vmatprep.subr.mxu0 0.0
      %1395 = vmatpush1.msra.mxu0 0.0
      %1396 = vmatprep.subr.mxu0 0.0
      %1397 = vmatpush1.msra.mxu0 0.0
      %1398 = vmatprep.subr.mxu0 0.0
      %1399 = vmatpush1.msra.mxu0 0.0
      %1400 = vmatprep.subr.mxu0 0.0
      %1401 = vmatpush1.msra.mxu0 0.0
      %1402 = vmatprep.subr.mxu0 0.0
      %1403 = vmatpush1.msra.mxu0 0.0
      %1404 = vmatprep.subr.mxu0 0.0
      %1405 = vmatpush1.msra.mxu0 0.0
      %1406 = vmatprep.subr.mxu0 0.0
      %1407 = vmatpush1.msra.mxu0 0.0
      %1408 = vmatprep.subr.mxu0 0.0
      %1409 = vmatpush1.msra.mxu0 0.0
      %1410 = vmatprep.subr.mxu0 0.0
      %1411 = vmatpush1.msra.mxu0 0.0
      %1412 = vmatprep.subr.mxu0 0.0
      %1413 = vmatpush1.msra.mxu0 0.0
      %1414 = vmatprep.subr.mxu0 0.0
      %1415 = vmatpush1.msra.mxu0 0.0
      %1416 = vmatprep.subr.mxu0 0.0
      %1417 = vmatpush1.msra.mxu0 0.0
      %1418 = vmatprep.subr.mxu0 0.0
      %1419 = vmatpush1.msra.mxu0 0.0
      %1420 = vmatprep.subr.mxu0 0.0
      %1421 = vmatpush1.msra.mxu0 0.0
      %1422 = vmatprep.subr.mxu0 0.0
      %1423 = vmatpush1.msra.mxu0 0.0
      %1424 = vmatprep.subr.mxu0 0.0
      %1425 = vmatpush1.msra.mxu0 0.0
      %1426 = vmatprep.subr.mxu0 0.0
      %1427 = vmatpush1.msra.mxu0 0.0
      %1428 = vmatprep.subr.mxu0 0.0
      %1429 = vmatpush1.msra.mxu0 0.0
      %1430 = vmatprep.subr.mxu0 0.0
      %1431 = vmatpush1.msra.mxu0 0.0
      %1432 = vmatprep.subr.mxu0 0.0
      %1433 = vmatpush1.msra.mxu0 0.0
      %1434 = vmatprep.subr.mxu0 0.0
      %1435 = vmatpush1.msra.mxu0 0.0
      %1436 = vmatprep.subr.mxu0 0.0
      %1437 = vmatpush1.msra.mxu0 0.0
      %1438 = vmatprep.subr.mxu0 0.0
      %1439 = vmatpush1.msra.mxu0 0.0
      %1440 = vmatprep.subr.mxu0 0.0
      %1441 = vmatpush1.msra.mxu0 0.0
      %1442 = vmatprep.subr.mxu0 0.0
      %1443 = vmatpush1.msra.mxu0 0.0
      %1444 = vmatprep.subr.mxu0 0.0
      %1445 = vmatpush1.msra.mxu0 0.0
      %1446 = vmatprep.subr.mxu0 0.0
      %1447 = vmatpush1.msra.mxu0 0.0
      %1448 = vmatprep.subr.mxu0 0.0
      %1449 = vmatpush1.msra.mxu0 0.0
      %1450 = vmatprep.subr.mxu0 0.0
      %1451 = vmatpush1.msra.mxu0 0.0
      %1452 = vmatprep.subr.mxu0 0.0
      %1453 = vmatpush1.msra.mxu0 0.0
      %1454 = vmatprep.mubr.f32.mxu0 0.0
      %v1455 = vand.u32 %v1381, 4294901760
      %v1456 = vsub.f32 %v1381, %v1455
      %v1457 = vand.u32 %v1456, 4294901760
      %v1458 = vsub.f32 %v1456, %v1457
      %v1459 = vand.u32 %v1458, 4294901760
      %1460 = vmatmul.mubr.f32.gmra.mrb[0].mxu0 %v1459
      %v1461 = vpop.f32.mrb[0].mxu0
      %v1462 = vadd.f32 0.0, %v1461
      %v1463 = vpop.f32.mrb[0].mxu0
      %1464 = vmatprep.mubr.f32.mxu0 0.0
      %v1465 = vand.u32 %v1384, 4294901760
      %v1466 = vsub.f32 %v1384, %v1465
      %v1467 = vand.u32 %v1466, 4294901760
      %v1468 = vsub.f32 %v1466, %v1467
      %v1469 = vand.u32 %v1468, 4294901760
      %1470 = vmatmul.mubr.f32.gmra.mrb[0].mxu0 %v1469
      %v1471 = vpop.f32.mrb[0].mxu0
      %v1472 = vadd.f32 0.0, %v1471
      %v1473 = vpop.f32.mrb[0].mxu0
      %1474 = vmatprep.mubr.f32.mxu0 0.0
      %v1475 = vand.u32 %v1387, 4294901760
      %v1476 = vsub.f32 %v1387, %v1475
      %v1477 = vand.u32 %v1476, 4294901760
      %v1478 = vsub.f32 %v1476, %v1477
      %v1479 = vand.u32 %v1478, 4294901760
      %1480 = vmatmul.mubr.f32.gmra.mrb[0].mxu0 %v1479
      %v1481 = vpop.f32.mrb[0].mxu0
      %v1482 = vadd.f32 0.0, %v1481
      %v1483 = vpop.f32.mrb[0].mxu0
      %1484 = vdwg.mxu0
      %1485 = vmatprep.subr.mxu0 0.0
      %v1486 = vand.u32 %v1378, 4294901760
      %v1487 = vsub.f32 %v1378, %v1486
      %v1488 = vand.u32 %v1487, 4294901760
      %v1489 = vsub.f32 %v1487, %v1488
      %v1490 = vand.u32 %v1489, 4294901760
      %1491 = vmatpush1.msra.mxu0 %v1490
      %1492 = vmatprep.subr.mxu0 0.0
      %1493 = vmatpush1.msra.mxu0 0.0
      %1494 = vmatprep.subr.mxu0 0.0
      %1495 = vmatpush1.msra.mxu0 0.0
      %1496 = vmatprep.subr.mxu0 0.0
      %1497 = vmatpush1.msra.mxu0 0.0
      %1498 = vmatprep.subr.mxu0 0.0
      %1499 = vmatpush1.msra.mxu0 0.0
      %1500 = vmatprep.subr.mxu0 0.0
      %1501 = vmatpush1.msra.mxu0 0.0
      %1502 = vmatprep.subr.mxu0 0.0
      %1503 = vmatpush1.msra.mxu0 0.0
      %1504 = vmatprep.subr.mxu0 0.0
      %1505 = vmatpush1.msra.mxu0 0.0
      %1506 = vmatprep.subr.mxu0 0.0
      %1507 = vmatpush1.msra.mxu0 0.0
      %1508 = vmatprep.subr.mxu0 0.0
      %1509 = vmatpush1.msra.mxu0 0.0
      %1510 = vmatprep.subr.mxu0 0.0
      %1511 = vmatpush1.msra.mxu0 0.0
      %1512 = vmatprep.subr.mxu0 0.0
      %1513 = vmatpush1.msra.mxu0 0.0
      %1514 = vmatprep.subr.mxu0 0.0
      %1515 = vmatpush1.msra.mxu0 0.0
      %1516 = vmatprep.subr.mxu0 0.0
      %1517 = vmatpush1.msra.mxu0 0.0
      %1518 = vmatprep.subr.mxu0 0.0
      %1519 = vmatpush1.msra.mxu0 0.0
      %1520 = vmatprep.subr.mxu0 0.0
      %1521 = vmatpush1.msra.mxu0 0.0
      %1522 = vmatprep.subr.mxu0 0.0
      %1523 = vmatpush1.msra.mxu0 0.0
      %1524 = vmatprep.subr.mxu0 0.0
      %1525 = vmatpush1.msra.mxu0 0.0
      %1526 = vmatprep.subr.mxu0 0.0
      %1527 = vmatpush1.msra.mxu0 0.0
      %1528 = vmatprep.subr.mxu0 0.0
      %1529 = vmatpush1.msra.mxu0 0.0
      %1530 = vmatprep.subr.mxu0 0.0
      %1531 = vmatpush1.msra.mxu0 0.0
      %1532 = vmatprep.subr.mxu0 0.0
      %1533 = vmatpush1.msra.mxu0 0.0
      %1534 = vmatprep.subr.mxu0 0.0
      %1535 = vmatpush1.msra.mxu0 0.0
      %1536 = vmatprep.subr.mxu0 0.0
      %1537 = vmatpush1.msra.mxu0 0.0
      %1538 = vmatprep.subr.mxu0 0.0
      %1539 = vmatpush1.msra.mxu0 0.0
      %1540 = vmatprep.subr.mxu0 0.0
      %1541 = vmatpush1.msra.mxu0 0.0
      %1542 = vmatprep.subr.mxu0 0.0
      %1543 = vmatpush1.msra.mxu0 0.0
      %1544 = vmatprep.subr.mxu0 0.0
      %1545 = vmatpush1.msra.mxu0 0.0
      %1546 = vmatprep.subr.mxu0 0.0
      %1547 = vmatpush1.msra.mxu0 0.0
      %1548 = vmatprep.subr.mxu0 0.0
      %1549 = vmatpush1.msra.mxu0 0.0
      %1550 = vmatprep.subr.mxu0 0.0
      %1551 = vmatpush1.msra.mxu0 0.0
      %1552 = vmatprep.subr.mxu0 0.0
      %1553 = vmatpush1.msra.mxu0 0.0
      %1554 = vmatprep.mubr.f32.mxu0 0.0
      %v1555 = vand.u32 %v1381, 4294901760
      %1556 = vmatmul.mubr.f32.gmra.mrb[0].mxu0 %v1555
      %v1557 = vpop.f32.mrb[0].mxu0
      %v1558 = vadd.f32 %v1462, %v1557
      %v1559 = vpop.f32.mrb[0].mxu0
      %1560 = vmatprep.mubr.f32.mxu0 0.0
      %v1561 = vand.u32 %v1384, 4294901760
      %1562 = vmatmul.mubr.f32.gmra.mrb[0].mxu0 %v1561
      %v1563 = vpop.f32.mrb[0].mxu0
      %v1564 = vadd.f32 %v1472, %v1563
      %v1565 = vpop.f32.mrb[0].mxu0
      %1566 = vmatprep.mubr.f32.mxu0 0.0
      %v1567 = vand.u32 %v1387, 4294901760
      %1568 = vmatmul.mubr.f32.gmra.mrb[0].mxu0 %v1567
      %v1569 = vpop.f32.mrb[0].mxu0
      %v1570 = vadd.f32 %v1482, %v1569
      %v1571 = vpop.f32.mrb[0].mxu0
      %1572 = vdwg.mxu0
      %1573 = vmatprep.subr.mxu0 0.0
      %v1574 = vand.u32 %v1378, 4294901760
      %v1575 = vsub.f32 %v1378, %v1574
      %1576 = vmatpush1.msra.mxu0 %v1575
      %1577 = vmatprep.subr.mxu0 0.0
      %1578 = vmatpush1.msra.mxu0 0.0
      %1579 = vmatprep.subr.mxu0 0.0
      %1580 = vmatpush1.msra.mxu0 0.0
      %1581 = vmatprep.subr.mxu0 0.0
      %1582 = vmatpush1.msra.mxu0 0.0
      %1583 = vmatprep.subr.mxu0 0.0
      %1584 = vmatpush1.msra.mxu0 0.0
      %1585 = vmatprep.subr.mxu0 0.0
      %1586 = vmatpush1.msra.mxu0 0.0
      %1587 = vmatprep.subr.mxu0 0.0
      %1588 = vmatpush1.msra.mxu0 0.0
      %1589 = vmatprep.subr.mxu0 0.0
      %1590 = vmatpush1.msra.mxu0 0.0
      %1591 = vmatprep.subr.mxu0 0.0
      %1592 = vmatpush1.msra.mxu0 0.0
      %1593 = vmatprep.subr.mxu0 0.0
      %1594 = vmatpush1.msra.mxu0 0.0
      %1595 = vmatprep.subr.mxu0 0.0
      %1596 = vmatpush1.msra.mxu0 0.0
      %1597 = vmatprep.subr.mxu0 0.0
      %1598 = vmatpush1.msra.mxu0 0.0
      %1599 = vmatprep.subr.mxu0 0.0
      %1600 = vmatpush1.msra.mxu0 0.0
      %1601 = vmatprep.subr.mxu0 0.0
      %1602 = vmatpush1.msra.mxu0 0.0
      %1603 = vmatprep.subr.mxu0 0.0
      %1604 = vmatpush1.msra.mxu0 0.0
      %1605 = vmatprep.subr.mxu0 0.0
      %1606 = vmatpush1.msra.mxu0 0.0
      %1607 = vmatprep.subr.mxu0 0.0
      %1608 = vmatpush1.msra.mxu0 0.0
      %1609 = vmatprep.subr.mxu0 0.0
      %1610 = vmatpush1.msra.mxu0 0.0
      %1611 = vmatprep.subr.mxu0 0.0
      %1612 = vmatpush1.msra.mxu0 0.0
      %1613 = vmatprep.subr.mxu0 0.0
      %1614 = vmatpush1.msra.mxu0 0.0
      %1615 = vmatprep.subr.mxu0 0.0
      %1616 = vmatpush1.msra.mxu0 0.0
      %1617 = vmatprep.subr.mxu0 0.0
      %1618 = vmatpush1.msra.mxu0 0.0
      %1619 = vmatprep.subr.mxu0 0.0
      %1620 = vmatpush1.msra.mxu0 0.0
      %1621 = vmatprep.subr.mxu0 0.0
      %1622 = vmatpush1.msra.mxu0 0.0
      %1623 = vmatprep.subr.mxu0 0.0
      %1624 = vmatpush1.msra.mxu0 0.0
      %1625 = vmatprep.subr.mxu0 0.0
      %1626 = vmatpush1.msra.mxu0 0.0
      %1627 = vmatprep.subr.mxu0 0.0
      %1628 = vmatpush1.msra.mxu0 0.0
      %1629 = vmatprep.subr.mxu0 0.0
      %1630 = vmatpush1.msra.mxu0 0.0
      %1631 = vmatprep.subr.mxu0 0.0
      %1632 = vmatpush1.msra.mxu0 0.0
      %1633 = vmatprep.subr.mxu0 0.0
      %1634 = vmatpush1.msra.mxu0 0.0
      %1635 = vmatprep.subr.mxu0 0.0
      %1636 = vmatpush1.msra.mxu0 0.0
      %1637 = vmatprep.subr.mxu0 0.0
      %1638 = vmatpush1.msra.mxu0 0.0
      %1639 = vmatprep.mubr.f32.mxu0 0.0
      %v1640 = vand.u32 %v1381, 4294901760
      %v1641 = vsub.f32 %v1381, %v1640
      %1642 = vmatmul.mubr.f32.gmra.mrb[0].mxu0 %v1641
      %v1643 = vpop.f32.mrb[0].mxu0
      %v1644 = vadd.f32 %v1558, %v1643
      %v1645 = vpop.f32.mrb[0].mxu0
      %1646 = vmatprep.mubr.f32.mxu0 0.0
      %v1647 = vand.u32 %v1384, 4294901760
      %v1648 = vsub.f32 %v1384, %v1647
      %1649 = vmatmul.mubr.f32.gmra.mrb[0].mxu0 %v1648
      %v1650 = vpop.f32.mrb[0].mxu0
      %v1651 = vadd.f32 %v1564, %v1650
      %v1652 = vpop.f32.mrb[0].mxu0
      %1653 = vmatprep.mubr.f32.mxu0 0.0
      %v1654 = vand.u32 %v1387, 4294901760
      %v1655 = vsub.f32 %v1387, %v1654
      %1656 = vmatmul.mubr.f32.gmra.mrb[0].mxu0 %v1655
      %v1657 = vpop.f32.mrb[0].mxu0
      %v1658 = vadd.f32 %v1570, %v1657
      %v1659 = vpop.f32.mrb[0].mxu0
      %1660 = vdwg.mxu0
      %1661 = vmatprep.subr.mxu0 0.0
      %v1662 = vand.u32 %v1378, 4294901760
      %1663 = vmatpush1.msra.mxu0 %v1662
      %1664 = vmatprep.subr.mxu0 0.0
      %1665 = vmatpush1.msra.mxu0 0.0
      %1666 = vmatprep.subr.mxu0 0.0
      %1667 = vmatpush1.msra.mxu0 0.0
      %1668 = vmatprep.subr.mxu0 0.0
      %1669 = vmatpush1.msra.mxu0 0.0
      %1670 = vmatprep.subr.mxu0 0.0
      %1671 = vmatpush1.msra.mxu0 0.0
      %1672 = vmatprep.subr.mxu0 0.0
      %1673 = vmatpush1.msra.mxu0 0.0
      %1674 = vmatprep.subr.mxu0 0.0
      %1675 = vmatpush1.msra.mxu0 0.0
      %1676 = vmatprep.subr.mxu0 0.0
      %1677 = vmatpush1.msra.mxu0 0.0
      %1678 = vmatprep.subr.mxu0 0.0
      %1679 = vmatpush1.msra.mxu0 0.0
      %1680 = vmatprep.subr.mxu0 0.0
      %1681 = vmatpush1.msra.mxu0 0.0
      %1682 = vmatprep.subr.mxu0 0.0
      %1683 = vmatpush1.msra.mxu0 0.0
      %1684 = vmatprep.subr.mxu0 0.0
      %1685 = vmatpush1.msra.mxu0 0.0
      %1686 = vmatprep.subr.mxu0 0.0
      %1687 = vmatpush1.msra.mxu0 0.0
      %1688 = vmatprep.subr.mxu0 0.0
      %1689 = vmatpush1.msra.mxu0 0.0
      %1690 = vmatprep.subr.mxu0 0.0
      %1691 = vmatpush1.msra.mxu0 0.0
      %1692 = vmatprep.subr.mxu0 0.0
      %1693 = vmatpush1.msra.mxu0 0.0
      %1694 = vmatprep.subr.mxu0 0.0
      %1695 = vmatpush1.msra.mxu0 0.0
      %1696 = vmatprep.subr.mxu0 0.0
      %1697 = vmatpush1.msra.mxu0 0.0
      %1698 = vmatprep.subr.mxu0 0.0
      %1699 = vmatpush1.msra.mxu0 0.0
      %1700 = vmatprep.subr.mxu0 0.0
      %1701 = vmatpush1.msra.mxu0 0.0
      %1702 = vmatprep.subr.mxu0 0.0
      %1703 = vmatpush1.msra.mxu0 0.0
      %1704 = vmatprep.subr.mxu0 0.0
      %1705 = vmatpush1.msra.mxu0 0.0
      %1706 = vmatprep.subr.mxu0 0.0
      %1707 = vmatpush1.msra.mxu0 0.0
      %1708 = vmatprep.subr.mxu0 0.0
      %1709 = vmatpush1.msra.mxu0 0.0
      %1710 = vmatprep.subr.mxu0 0.0
      %1711 = vmatpush1.msra.mxu0 0.0
      %1712 = vmatprep.subr.mxu0 0.0
      %1713 = vmatpush1.msra.mxu0 0.0
      %1714 = vmatprep.subr.mxu0 0.0
      %1715 = vmatpush1.msra.mxu0 0.0
      %1716 = vmatprep.subr.mxu0 0.0
      %1717 = vmatpush1.msra.mxu0 0.0
      %1718 = vmatprep.subr.mxu0 0.0
      %1719 = vmatpush1.msra.mxu0 0.0
      %1720 = vmatprep.subr.mxu0 0.0
      %1721 = vmatpush1.msra.mxu0 0.0
      %1722 = vmatprep.subr.mxu0 0.0
      %1723 = vmatpush1.msra.mxu0 0.0
      %1724 = vmatprep.subr.mxu0 0.0
      %1725 = vmatpush1.msra.mxu0 0.0
      %1726 = vmatprep.mubr.f32.mxu0 0.0
      %v1727 = vand.u32 %v1381, 4294901760
      %v1728 = vsub.f32 %v1381, %v1727
      %v1729 = vand.u32 %v1728, 4294901760
      %1730 = vmatmul.mubr.f32.gmra.mrb[0].mxu0 %v1729
      %v1731 = vpop.f32.mrb[0].mxu0
      %v1732 = vadd.f32 %v1644, %v1731
      %v1733 = vpop.f32.mrb[0].mxu0
      %1734 = vmatprep.mubr.f32.mxu0 0.0
      %v1735 = vand.u32 %v1384, 4294901760
      %v1736 = vsub.f32 %v1384, %v1735
      %v1737 = vand.u32 %v1736, 4294901760
      %1738 = vmatmul.mubr.f32.gmra.mrb[0].mxu0 %v1737
      %v1739 = vpop.f32.mrb[0].mxu0
      %v1740 = vadd.f32 %v1651, %v1739
      %v1741 = vpop.f32.mrb[0].mxu0
      %1742 = vmatprep.mubr.f32.mxu0 0.0
      %v1743 = vand.u32 %v1387, 4294901760
      %v1744 = vsub.f32 %v1387, %v1743
      %v1745 = vand.u32 %v1744, 4294901760
      %1746 = vmatmul.mubr.f32.gmra.mrb[0].mxu0 %v1745
      %v1747 = vpop.f32.mrb[0].mxu0
      %v1748 = vadd.f32 %v1658, %v1747
      %v1749 = vpop.f32.mrb[0].mxu0
      %1750 = vdwg.mxu0
      %1751 = vmatprep.subr.mxu0 0.0
      %v1752 = vand.u32 %v1378, 4294901760
      %v1753 = vsub.f32 %v1378, %v1752
      %v1754 = vand.u32 %v1753, 4294901760
      %1755 = vmatpush1.msra.mxu0 %v1754
      %1756 = vmatprep.subr.mxu0 0.0
      %1757 = vmatpush1.msra.mxu0 0.0
      %1758 = vmatprep.subr.mxu0 0.0
      %1759 = vmatpush1.msra.mxu0 0.0
      %1760 = vmatprep.subr.mxu0 0.0
      %1761 = vmatpush1.msra.mxu0 0.0
      %1762 = vmatprep.subr.mxu0 0.0
      %1763 = vmatpush1.msra.mxu0 0.0
      %1764 = vmatprep.subr.mxu0 0.0
      %1765 = vmatpush1.msra.mxu0 0.0
      %1766 = vmatprep.subr.mxu0 0.0
      %1767 = vmatpush1.msra.mxu0 0.0
      %1768 = vmatprep.subr.mxu0 0.0
      %1769 = vmatpush1.msra.mxu0 0.0
      %1770 = vmatprep.subr.mxu0 0.0
      %1771 = vmatpush1.msra.mxu0 0.0
      %1772 = vmatprep.subr.mxu0 0.0
      %1773 = vmatpush1.msra.mxu0 0.0
      %1774 = vmatprep.subr.mxu0 0.0
      %1775 = vmatpush1.msra.mxu0 0.0
      %1776 = vmatprep.subr.mxu0 0.0
      %1777 = vmatpush1.msra.mxu0 0.0
      %1778 = vmatprep.subr.mxu0 0.0
      %1779 = vmatpush1.msra.mxu0 0.0
      %1780 = vmatprep.subr.mxu0 0.0
      %1781 = vmatpush1.msra.mxu0 0.0
      %1782 = vmatprep.subr.mxu0 0.0
      %1783 = vmatpush1.msra.mxu0 0.0
      %1784 = vmatprep.subr.mxu0 0.0
      %1785 = vmatpush1.msra.mxu0 0.0
      %1786 = vmatprep.subr.mxu0 0.0
      %1787 = vmatpush1.msra.mxu0 0.0
      %1788 = vmatprep.subr.mxu0 0.0
      %1789 = vmatpush1.msra.mxu0 0.0
      %1790 = vmatprep.subr.mxu0 0.0
      %1791 = vmatpush1.msra.mxu0 0.0
      %1792 = vmatprep.subr.mxu0 0.0
      %1793 = vmatpush1.msra.mxu0 0.0
      %1794 = vmatprep.subr.mxu0 0.0
      %1795 = vmatpush1.msra.mxu0 0.0
      %1796 = vmatprep.subr.mxu0 0.0
      %1797 = vmatpush1.msra.mxu0 0.0
      %1798 = vmatprep.subr.mxu0 0.0
      %1799 = vmatpush1.msra.mxu0 0.0
      %1800 = vmatprep.subr.mxu0 0.0
      %1801 = vmatpush1.msra.mxu0 0.0
      %1802 = vmatprep.subr.mxu0 0.0
      %1803 = vmatpush1.msra.mxu0 0.0
      %1804 = vmatprep.subr.mxu0 0.0
      %1805 = vmatpush1.msra.mxu0 0.0
      %1806 = vmatprep.subr.mxu0 0.0
      %1807 = vmatpush1.msra.mxu0 0.0
      %1808 = vmatprep.subr.mxu0 0.0
      %1809 = vmatpush1.msra.mxu0 0.0
      %1810 = vmatprep.subr.mxu0 0.0
      %1811 = vmatpush1.msra.mxu0 0.0
      %1812 = vmatprep.subr.mxu0 0.0
      %1813 = vmatpush1.msra.mxu0 0.0
      %1814 = vmatprep.subr.mxu0 0.0
      %1815 = vmatpush1.msra.mxu0 0.0
      %1816 = vmatprep.subr.mxu0 0.0
      %1817 = vmatpush1.msra.mxu0 0.0
      %1818 = vmatprep.mubr.f32.mxu0 0.0
      %v1819 = vand.u32 %v1381, 4294901760
      %1820 = vmatmul.mubr.f32.gmra.mrb[0].mxu0 %v1819
      %v1821 = vpop.f32.mrb[0].mxu0
      %v1822 = vadd.f32 %v1732, %v1821
      %v1823 = vpop.f32.mrb[0].mxu0
      %1824 = vmatprep.mubr.f32.mxu0 0.0
      %v1825 = vand.u32 %v1384, 4294901760
      %1826 = vmatmul.mubr.f32.gmra.mrb[0].mxu0 %v1825
      %v1827 = vpop.f32.mrb[0].mxu0
      %v1828 = vadd.f32 %v1740, %v1827
      %v1829 = vpop.f32.mrb[0].mxu0
      %1830 = vmatprep.mubr.f32.mxu0 0.0
      %v1831 = vand.u32 %v1387, 4294901760
      %1832 = vmatmul.mubr.f32.gmra.mrb[0].mxu0 %v1831
      %v1833 = vpop.f32.mrb[0].mxu0
      %v1834 = vadd.f32 %v1748, %v1833
      %v1835 = vpop.f32.mrb[0].mxu0
      %1836 = vdwg.mxu0
      %1837 = vmatprep.subr.mxu0 0.0
      %v1838 = vand.u32 %v1378, 4294901760
      %1839 = vmatpush1.msra.mxu0 %v1838
      %1840 = vmatprep.subr.mxu0 0.0
      %1841 = vmatpush1.msra.mxu0 0.0
      %1842 = vmatprep.subr.mxu0 0.0
      %1843 = vmatpush1.msra.mxu0 0.0
      %1844 = vmatprep.subr.mxu0 0.0
      %1845 = vmatpush1.msra.mxu0 0.0
      %1846 = vmatprep.subr.mxu0 0.0
      %1847 = vmatpush1.msra.mxu0 0.0
      %1848 = vmatprep.subr.mxu0 0.0
      %1849 = vmatpush1.msra.mxu0 0.0
      %1850 = vmatprep.subr.mxu0 0.0
      %1851 = vmatpush1.msra.mxu0 0.0
      %1852 = vmatprep.subr.mxu0 0.0
      %1853 = vmatpush1.msra.mxu0 0.0
      %1854 = vmatprep.subr.mxu0 0.0
      %1855 = vmatpush1.msra.mxu0 0.0
      %1856 = vmatprep.subr.mxu0 0.0
      %1857 = vmatpush1.msra.mxu0 0.0
      %1858 = vmatprep.subr.mxu0 0.0
      %1859 = vmatpush1.msra.mxu0 0.0
      %1860 = vmatprep.subr.mxu0 0.0
      %1861 = vmatpush1.msra.mxu0 0.0
      %1862 = vmatprep.subr.mxu0 0.0
      %1863 = vmatpush1.msra.mxu0 0.0
      %1864 = vmatprep.subr.mxu0 0.0
      %1865 = vmatpush1.msra.mxu0 0.0
      %1866 = vmatprep.subr.mxu0 0.0
      %1867 = vmatpush1.msra.mxu0 0.0
      %1868 = vmatprep.subr.mxu0 0.0
      %1869 = vmatpush1.msra.mxu0 0.0
      %1870 = vmatprep.subr.mxu0 0.0
      %1871 = vmatpush1.msra.mxu0 0.0
      %1872 = vmatprep.subr.mxu0 0.0
      %1873 = vmatpush1.msra.mxu0 0.0
      %1874 = vmatprep.subr.mxu0 0.0
      %1875 = vmatpush1.msra.mxu0 0.0
      %1876 = vmatprep.subr.mxu0 0.0
      %1877 = vmatpush1.msra.mxu0 0.0
      %1878 = vmatprep.subr.mxu0 0.0
      %1879 = vmatpush1.msra.mxu0 0.0
      %1880 = vmatprep.subr.mxu0 0.0
      %1881 = vmatpush1.msra.mxu0 0.0
      %1882 = vmatprep.subr.mxu0 0.0
      %1883 = vmatpush1.msra.mxu0 0.0
      %1884 = vmatprep.subr.mxu0 0.0
      %1885 = vmatpush1.msra.mxu0 0.0
      %1886 = vmatprep.subr.mxu0 0.0
      %1887 = vmatpush1.msra.mxu0 0.0
      %1888 = vmatprep.subr.mxu0 0.0
      %1889 = vmatpush1.msra.mxu0 0.0
      %1890 = vmatprep.subr.mxu0 0.0
      %1891 = vmatpush1.msra.mxu0 0.0
      %1892 = vmatprep.subr.mxu0 0.0
      %1893 = vmatpush1.msra.mxu0 0.0
      %1894 = vmatprep.subr.mxu0 0.0
      %1895 = vmatpush1.msra.mxu0 0.0
      %1896 = vmatprep.subr.mxu0 0.0
      %1897 = vmatpush1.msra.mxu0 0.0
      %1898 = vmatprep.subr.mxu0 0.0
      %1899 = vmatpush1.msra.mxu0 0.0
      %1900 = vmatprep.subr.mxu0 0.0
      %1901 = vmatpush1.msra.mxu0 0.0
      %1902 = vmatprep.mubr.f32.mxu0 0.0
      %v1903 = vand.u32 %v1381, 4294901760
      %1904 = vmatmul.mubr.f32.gmra.mrb[0].mxu0 %v1903
      %v1905 = vpop.f32.mrb[0].mxu0
      %v1906 = vadd.f32 %v1822, %v1905
      %v1907 = vpop.f32.mrb[0].mxu0
      %1908 = vmatprep.mubr.f32.mxu0 0.0
      %v1909 = vand.u32 %v1384, 4294901760
      %1910 = vmatmul.mubr.f32.gmra.mrb[0].mxu0 %v1909
      %v1911 = vpop.f32.mrb[0].mxu0
      %v1912 = vadd.f32 %v1828, %v1911
      %v1913 = vpop.f32.mrb[0].mxu0
      %1914 = vmatprep.mubr.f32.mxu0 0.0
      %v1915 = vand.u32 %v1387, 4294901760
      %1916 = vmatmul.mubr.f32.gmra.mrb[0].mxu0 %v1915
      %v1917 = vpop.f32.mrb[0].mxu0
      %v1918 = vadd.f32 %v1834, %v1917
      %v1919 = vpop.f32.mrb[0].mxu0
      %1920 = vdwg.mxu0
      %v1921 = vadd.f32 %v1358, %v1906
      %v1922 = vadd.f32 %v1364, %v1912
      %v1923 = vadd.f32 %v1370, %v1918
      %s1924 = scalar_lea.vmem %s2, 72
      %v1925 = vld [vmem:[%s1924] sm:$0xff]
      %v1926 = vld [vmem:[%s1924 + $0x8] sm:$0xff]
      %v1927 = vld [vmem:[%s1924 + $0x10] sm:$0xff]
      %1928 = vrot.lane.b32.xlu0 %v278, 125
      %v1929 = vpop.permute.xlu0 %1928
      %v1932 = vsel %vm290, %v1925, 0
      %v1935 = vsel %vm290, %v1926, 0
      %v1938 = vsel %vm290, %v1927, 0
      %1940 = vmatprep.subr.mxu0 0.0
      %v1941 = vand.u32 %v1929, 4294901760
      %1942 = vmatpush1.msra.mxu0 %v1941
      %1943 = vmatprep.subr.mxu0 0.0
      %1944 = vmatpush1.msra.mxu0 0.0
      %1945 = vmatprep.subr.mxu0 0.0
      %1946 = vmatpush1.msra.mxu0 0.0
      %1947 = vmatprep.subr.mxu0 0.0
      %1948 = vmatpush1.msra.mxu0 0.0
      %1949 = vmatprep.subr.mxu0 0.0
      %1950 = vmatpush1.msra.mxu0 0.0
      %1951 = vmatprep.subr.mxu0 0.0
      %1952 = vmatpush1.msra.mxu0 0.0
      %1953 = vmatprep.subr.mxu0 0.0
      %1954 = vmatpush1.msra.mxu0 0.0
      %1955 = vmatprep.subr.mxu0 0.0
      %1956 = vmatpush1.msra.mxu0 0.0
      %1957 = vmatprep.subr.mxu0 0.0
      %1958 = vmatpush1.msra.mxu0 0.0
      %1959 = vmatprep.subr.mxu0 0.0
      %1960 = vmatpush1.msra.mxu0 0.0
      %1961 = vmatprep.subr.mxu0 0.0
      %1962 = vmatpush1.msra.mxu0 0.0
      %1963 = vmatprep.subr.mxu0 0.0
      %1964 = vmatpush1.msra.mxu0 0.0
      %1965 = vmatprep.subr.mxu0 0.0
      %1966 = vmatpush1.msra.mxu0 0.0
      %1967 = vmatprep.subr.mxu0 0.0
      %1968 = vmatpush1.msra.mxu0 0.0
      %1969 = vmatprep.subr.mxu0 0.0
      %1970 = vmatpush1.msra.mxu0 0.0
      %1971 = vmatprep.subr.mxu0 0.0
      %1972 = vmatpush1.msra.mxu0 0.0
      %1973 = vmatprep.subr.mxu0 0.0
      %1974 = vmatpush1.msra.mxu0 0.0
      %1975 = vmatprep.subr.mxu0 0.0
      %1976 = vmatpush1.msra.mxu0 0.0
      %1977 = vmatprep.subr.mxu0 0.0
      %1978 = vmatpush1.msra.mxu0 0.0
      %1979 = vmatprep.subr.mxu0 0.0
      %1980 = vmatpush1.msra.mxu0 0.0
      %1981 = vmatprep.subr.mxu0 0.0
      %1982 = vmatpush1.msra.mxu0 0.0
      %1983 = vmatprep.subr.mxu0 0.0
      %1984 = vmatpush1.msra.mxu0 0.0
      %1985 = vmatprep.subr.mxu0 0.0
      %1986 = vmatpush1.msra.mxu0 0.0
      %1987 = vmatprep.subr.mxu0 0.0
      %1988 = vmatpush1.msra.mxu0 0.0
      %1989 = vmatprep.subr.mxu0 0.0
      %1990 = vmatpush1.msra.mxu0 0.0
      %1991 = vmatprep.subr.mxu0 0.0
      %1992 = vmatpush1.msra.mxu0 0.0
      %1993 = vmatprep.subr.mxu0 0.0
      %1994 = vmatpush1.msra.mxu0 0.0
      %1995 = vmatprep.subr.mxu0 0.0
      %1996 = vmatpush1.msra.mxu0 0.0
      %1997 = vmatprep.subr.mxu0 0.0
      %1998 = vmatpush1.msra.mxu0 0.0
      %1999 = vmatprep.subr.mxu0 0.0
      %2000 = vmatpush1.msra.mxu0 0.0
      %2001 = vmatprep.subr.mxu0 0.0
      %2002 = vmatpush1.msra.mxu0 0.0
      %2003 = vmatprep.subr.mxu0 0.0
      %2004 = vmatpush1.msra.mxu0 0.0
      %2005 = vmatprep.mubr.f32.mxu0 0.0
      %v2006 = vand.u32 %v1932, 4294901760
      %v2007 = vsub.f32 %v1932, %v2006
      %v2008 = vand.u32 %v2007, 4294901760
      %v2009 = vsub.f32 %v2007, %v2008
      %v2010 = vand.u32 %v2009, 4294901760
      %2011 = vmatmul.mubr.f32.gmra.mrb[0].mxu0 %v2010
      %v2012 = vpop.f32.mrb[0].mxu0
      %v2013 = vadd.f32 0.0, %v2012
      %v2014 = vpop.f32.mrb[0].mxu0
      %2015 = vmatprep.mubr.f32.mxu0 0.0
      %v2016 = vand.u32 %v1935, 4294901760
      %v2017 = vsub.f32 %v1935, %v2016
      %v2018 = vand.u32 %v2017, 4294901760
      %v2019 = vsub.f32 %v2017, %v2018
      %v2020 = vand.u32 %v2019, 4294901760
      %2021 = vmatmul.mubr.f32.gmra.mrb[0].mxu0 %v2020
      %v2022 = vpop.f32.mrb[0].mxu0
      %v2023 = vadd.f32 0.0, %v2022
      %v2024 = vpop.f32.mrb[0].mxu0
      %2025 = vmatprep.mubr.f32.mxu0 0.0
      %v2026 = vand.u32 %v1938, 4294901760
      %v2027 = vsub.f32 %v1938, %v2026
      %v2028 = vand.u32 %v2027, 4294901760
      %v2029 = vsub.f32 %v2027, %v2028
      %v2030 = vand.u32 %v2029, 4294901760
      %2031 = vmatmul.mubr.f32.gmra.mrb[0].mxu0 %v2030
      %v2032 = vpop.f32.mrb[0].mxu0
      %v2033 = vadd.f32 0.0, %v2032
      %v2034 = vpop.f32.mrb[0].mxu0
      %2035 = vdwg.mxu0
      %2036 = vmatprep.subr.mxu0 0.0
      %v2037 = vand.u32 %v1929, 4294901760
      %v2038 = vsub.f32 %v1929, %v2037
      %v2039 = vand.u32 %v2038, 4294901760
      %v2040 = vsub.f32 %v2038, %v2039
      %v2041 = vand.u32 %v2040, 4294901760
      %2042 = vmatpush1.msra.mxu0 %v2041
      %2043 = vmatprep.subr.mxu0 0.0
      %2044 = vmatpush1.msra.mxu0 0.0
      %2045 = vmatprep.subr.mxu0 0.0
      %2046 = vmatpush1.msra.mxu0 0.0
      %2047 = vmatprep.subr.mxu0 0.0
      %2048 = vmatpush1.msra.mxu0 0.0
      %2049 = vmatprep.subr.mxu0 0.0
      %2050 = vmatpush1.msra.mxu0 0.0
      %2051 = vmatprep.subr.mxu0 0.0
      %2052 = vmatpush1.msra.mxu0 0.0
      %2053 = vmatprep.subr.mxu0 0.0
      %2054 = vmatpush1.msra.mxu0 0.0
      %2055 = vmatprep.subr.mxu0 0.0
      %2056 = vmatpush1.msra.mxu0 0.0
      %2057 = vmatprep.subr.mxu0 0.0
      %2058 = vmatpush1.msra.mxu0 0.0
      %2059 = vmatprep.subr.mxu0 0.0
      %2060 = vmatpush1.msra.mxu0 0.0
      %2061 = vmatprep.subr.mxu0 0.0
      %2062 = vmatpush1.msra.mxu0 0.0
      %2063 = vmatprep.subr.mxu0 0.0
      %2064 = vmatpush1.msra.mxu0 0.0
      %2065 = vmatprep.subr.mxu0 0.0
      %2066 = vmatpush1.msra.mxu0 0.0
      %2067 = vmatprep.subr.mxu0 0.0
      %2068 = vmatpush1.msra.mxu0 0.0
      %2069 = vmatprep.subr.mxu0 0.0
      %2070 = vmatpush1.msra.mxu0 0.0
      %2071 = vmatprep.subr.mxu0 0.0
      %2072 = vmatpush1.msra.mxu0 0.0
      %2073 = vmatprep.subr.mxu0 0.0
      %2074 = vmatpush1.msra.mxu0 0.0
      %2075 = vmatprep.subr.mxu0 0.0
      %2076 = vmatpush1.msra.mxu0 0.0
      %2077 = vmatprep.subr.mxu0 0.0
      %2078 = vmatpush1.msra.mxu0 0.0
      %2079 = vmatprep.subr.mxu0 0.0
      %2080 = vmatpush1.msra.mxu0 0.0
      %2081 = vmatprep.subr.mxu0 0.0
      %2082 = vmatpush1.msra.mxu0 0.0
      %2083 = vmatprep.subr.mxu0 0.0
      %2084 = vmatpush1.msra.mxu0 0.0
      %2085 = vmatprep.subr.mxu0 0.0
      %2086 = vmatpush1.msra.mxu0 0.0
      %2087 = vmatprep.subr.mxu0 0.0
      %2088 = vmatpush1.msra.mxu0 0.0
      %2089 = vmatprep.subr.mxu0 0.0
      %2090 = vmatpush1.msra.mxu0 0.0
      %2091 = vmatprep.subr.mxu0 0.0
      %2092 = vmatpush1.msra.mxu0 0.0
      %2093 = vmatprep.subr.mxu0 0.0
      %2094 = vmatpush1.msra.mxu0 0.0
      %2095 = vmatprep.subr.mxu0 0.0
      %2096 = vmatpush1.msra.mxu0 0.0
      %2097 = vmatprep.subr.mxu0 0.0
      %2098 = vmatpush1.msra.mxu0 0.0
      %2099 = vmatprep.subr.mxu0 0.0
      %2100 = vmatpush1.msra.mxu0 0.0
      %2101 = vmatprep.subr.mxu0 0.0
      %2102 = vmatpush1.msra.mxu0 0.0
      %2103 = vmatprep.subr.mxu0 0.0
      %2104 = vmatpush1.msra.mxu0 0.0
      %2105 = vmatprep.mubr.f32.mxu0 0.0
      %v2106 = vand.u32 %v1932, 4294901760
      %2107 = vmatmul.mubr.f32.gmra.mrb[0].mxu0 %v2106
      %v2108 = vpop.f32.mrb[0].mxu0
      %v2109 = vadd.f32 %v2013, %v2108
      %v2110 = vpop.f32.mrb[0].mxu0
      %2111 = vmatprep.mubr.f32.mxu0 0.0
      %v2112 = vand.u32 %v1935, 4294901760
      %2113 = vmatmul.mubr.f32.gmra.mrb[0].mxu0 %v2112
      %v2114 = vpop.f32.mrb[0].mxu0
      %v2115 = vadd.f32 %v2023, %v2114
      %v2116 = vpop.f32.mrb[0].mxu0
      %2117 = vmatprep.mubr.f32.mxu0 0.0
      %v2118 = vand.u32 %v1938, 4294901760
      %2119 = vmatmul.mubr.f32.gmra.mrb[0].mxu0 %v2118
      %v2120 = vpop.f32.mrb[0].mxu0
      %v2121 = vadd.f32 %v2033, %v2120
      %v2122 = vpop.f32.mrb[0].mxu0
      %2123 = vdwg.mxu0
      %2124 = vmatprep.subr.mxu0 0.0
      %v2125 = vand.u32 %v1929, 4294901760
      %v2126 = vsub.f32 %v1929, %v2125
      %2127 = vmatpush1.msra.mxu0 %v2126
      %2128 = vmatprep.subr.mxu0 0.0
      %2129 = vmatpush1.msra.mxu0 0.0
      %2130 = vmatprep.subr.mxu0 0.0
      %2131 = vmatpush1.msra.mxu0 0.0
      %2132 = vmatprep.subr.mxu0 0.0
      %2133 = vmatpush1.msra.mxu0 0.0
      %2134 = vmatprep.subr.mxu0 0.0
      %2135 = vmatpush1.msra.mxu0 0.0
      %2136 = vmatprep.subr.mxu0 0.0
      %2137 = vmatpush1.msra.mxu0 0.0
      %2138 = vmatprep.subr.mxu0 0.0
      %2139 = vmatpush1.msra.mxu0 0.0
      %2140 = vmatprep.subr.mxu0 0.0
      %2141 = vmatpush1.msra.mxu0 0.0
      %2142 = vmatprep.subr.mxu0 0.0
      %2143 = vmatpush1.msra.mxu0 0.0
      %2144 = vmatprep.subr.mxu0 0.0
      %2145 = vmatpush1.msra.mxu0 0.0
      %2146 = vmatprep.subr.mxu0 0.0
      %2147 = vmatpush1.msra.mxu0 0.0
      %2148 = vmatprep.subr.mxu0 0.0
      %2149 = vmatpush1.msra.mxu0 0.0
      %2150 = vmatprep.subr.mxu0 0.0
      %2151 = vmatpush1.msra.mxu0 0.0
      %2152 = vmatprep.subr.mxu0 0.0
      %2153 = vmatpush1.msra.mxu0 0.0
      %2154 = vmatprep.subr.mxu0 0.0
      %2155 = vmatpush1.msra.mxu0 0.0
      %2156 = vmatprep.subr.mxu0 0.0
      %2157 = vmatpush1.msra.mxu0 0.0
      %2158 = vmatprep.subr.mxu0 0.0
      %2159 = vmatpush1.msra.mxu0 0.0
      %2160 = vmatprep.subr.mxu0 0.0
      %2161 = vmatpush1.msra.mxu0 0.0
      %2162 = vmatprep.subr.mxu0 0.0
      %2163 = vmatpush1.msra.mxu0 0.0
      %2164 = vmatprep.subr.mxu0 0.0
      %2165 = vmatpush1.msra.mxu0 0.0
      %2166 = vmatprep.subr.mxu0 0.0
      %2167 = vmatpush1.msra.mxu0 0.0
      %2168 = vmatprep.subr.mxu0 0.0
      %2169 = vmatpush1.msra.mxu0 0.0
      %2170 = vmatprep.subr.mxu0 0.0
      %2171 = vmatpush1.msra.mxu0 0.0
      %2172 = vmatprep.subr.mxu0 0.0
      %2173 = vmatpush1.msra.mxu0 0.0
      %2174 = vmatprep.subr.mxu0 0.0
      %2175 = vmatpush1.msra.mxu0 0.0
      %2176 = vmatprep.subr.mxu0 0.0
      %2177 = vmatpush1.msra.mxu0 0.0
      %2178 = vmatprep.subr.mxu0 0.0
      %2179 = vmatpush1.msra.mxu0 0.0
      %2180 = vmatprep.subr.mxu0 0.0
      %2181 = vmatpush1.msra.mxu0 0.0
      %2182 = vmatprep.subr.mxu0 0.0
      %2183 = vmatpush1.msra.mxu0 0.0
      %2184 = vmatprep.subr.mxu0 0.0
      %2185 = vmatpush1.msra.mxu0 0.0
      %2186 = vmatprep.subr.mxu0 0.0
      %2187 = vmatpush1.msra.mxu0 0.0
      %2188 = vmatprep.subr.mxu0 0.0
      %2189 = vmatpush1.msra.mxu0 0.0
      %2190 = vmatprep.mubr.f32.mxu0 0.0
      %v2191 = vand.u32 %v1932, 4294901760
      %v2192 = vsub.f32 %v1932, %v2191
      %2193 = vmatmul.mubr.f32.gmra.mrb[0].mxu0 %v2192
      %v2194 = vpop.f32.mrb[0].mxu0
      %v2195 = vadd.f32 %v2109, %v2194
      %v2196 = vpop.f32.mrb[0].mxu0
      %2197 = vmatprep.mubr.f32.mxu0 0.0
      %v2198 = vand.u32 %v1935, 4294901760
      %v2199 = vsub.f32 %v1935, %v2198
      %2200 = vmatmul.mubr.f32.gmra.mrb[0].mxu0 %v2199
      %v2201 = vpop.f32.mrb[0].mxu0
      %v2202 = vadd.f32 %v2115, %v2201
      %v2203 = vpop.f32.mrb[0].mxu0
      %2204 = vmatprep.mubr.f32.mxu0 0.0
      %v2205 = vand.u32 %v1938, 4294901760
      %v2206 = vsub.f32 %v1938, %v2205
      %2207 = vmatmul.mubr.f32.gmra.mrb[0].mxu0 %v2206
      %v2208 = vpop.f32.mrb[0].mxu0
      %v2209 = vadd.f32 %v2121, %v2208
      %v2210 = vpop.f32.mrb[0].mxu0
      %2211 = vdwg.mxu0
      %2212 = vmatprep.subr.mxu0 0.0
      %v2213 = vand.u32 %v1929, 4294901760
      %2214 = vmatpush1.msra.mxu0 %v2213
      %2215 = vmatprep.subr.mxu0 0.0
      %2216 = vmatpush1.msra.mxu0 0.0
      %2217 = vmatprep.subr.mxu0 0.0
      %2218 = vmatpush1.msra.mxu0 0.0
      %2219 = vmatprep.subr.mxu0 0.0
      %2220 = vmatpush1.msra.mxu0 0.0
      %2221 = vmatprep.subr.mxu0 0.0
      %2222 = vmatpush1.msra.mxu0 0.0
      %2223 = vmatprep.subr.mxu0 0.0
      %2224 = vmatpush1.msra.mxu0 0.0
      %2225 = vmatprep.subr.mxu0 0.0
      %2226 = vmatpush1.msra.mxu0 0.0
      %2227 = vmatprep.subr.mxu0 0.0
      %2228 = vmatpush1.msra.mxu0 0.0
      %2229 = vmatprep.subr.mxu0 0.0
      %2230 = vmatpush1.msra.mxu0 0.0
      %2231 = vmatprep.subr.mxu0 0.0
      %2232 = vmatpush1.msra.mxu0 0.0
      %2233 = vmatprep.subr.mxu0 0.0
      %2234 = vmatpush1.msra.mxu0 0.0
      %2235 = vmatprep.subr.mxu0 0.0
      %2236 = vmatpush1.msra.mxu0 0.0
      %2237 = vmatprep.subr.mxu0 0.0
      %2238 = vmatpush1.msra.mxu0 0.0
      %2239 = vmatprep.subr.mxu0 0.0
      %2240 = vmatpush1.msra.mxu0 0.0
      %2241 = vmatprep.subr.mxu0 0.0
      %2242 = vmatpush1.msra.mxu0 0.0
      %2243 = vmatprep.subr.mxu0 0.0
      %2244 = vmatpush1.msra.mxu0 0.0
      %2245 = vmatprep.subr.mxu0 0.0
      %2246 = vmatpush1.msra.mxu0 0.0
      %2247 = vmatprep.subr.mxu0 0.0
      %2248 = vmatpush1.msra.mxu0 0.0
      %2249 = vmatprep.subr.mxu0 0.0
      %2250 = vmatpush1.msra.mxu0 0.0
      %2251 = vmatprep.subr.mxu0 0.0
      %2252 = vmatpush1.msra.mxu0 0.0
      %2253 = vmatprep.subr.mxu0 0.0
      %2254 = vmatpush1.msra.mxu0 0.0
      %2255 = vmatprep.subr.mxu0 0.0
      %2256 = vmatpush1.msra.mxu0 0.0
      %2257 = vmatprep.subr.mxu0 0.0
      %2258 = vmatpush1.msra.mxu0 0.0
      %2259 = vmatprep.subr.mxu0 0.0
      %2260 = vmatpush1.msra.mxu0 0.0
      %2261 = vmatprep.subr.mxu0 0.0
      %2262 = vmatpush1.msra.mxu0 0.0
      %2263 = vmatprep.subr.mxu0 0.0
      %2264 = vmatpush1.msra.mxu0 0.0
      %2265 = vmatprep.subr.mxu0 0.0
      %2266 = vmatpush1.msra.mxu0 0.0
      %2267 = vmatprep.subr.mxu0 0.0
      %2268 = vmatpush1.msra.mxu0 0.0
      %2269 = vmatprep.subr.mxu0 0.0
      %2270 = vmatpush1.msra.mxu0 0.0
      %2271 = vmatprep.subr.mxu0 0.0
      %2272 = vmatpush1.msra.mxu0 0.0
      %2273 = vmatprep.subr.mxu0 0.0
      %2274 = vmatpush1.msra.mxu0 0.0
      %2275 = vmatprep.subr.mxu0 0.0
      %2276 = vmatpush1.msra.mxu0 0.0
      %2277 = vmatprep.mubr.f32.mxu0 0.0
      %v2278 = vand.u32 %v1932, 4294901760
      %v2279 = vsub.f32 %v1932, %v2278
      %v2280 = vand.u32 %v2279, 4294901760
      %2281 = vmatmul.mubr.f32.gmra.mrb[0].mxu0 %v2280
      %v2282 = vpop.f32.mrb[0].mxu0
      %v2283 = vadd.f32 %v2195, %v2282
      %v2284 = vpop.f32.mrb[0].mxu0
      %2285 = vmatprep.mubr.f32.mxu0 0.0
      %v2286 = vand.u32 %v1935, 4294901760
      %v2287 = vsub.f32 %v1935, %v2286
      %v2288 = vand.u32 %v2287, 4294901760
      %2289 = vmatmul.mubr.f32.gmra.mrb[0].mxu0 %v2288
      %v2290 = vpop.f32.mrb[0].mxu0
      %v2291 = vadd.f32 %v2202, %v2290
      %v2292 = vpop.f32.mrb[0].mxu0
      %2293 = vmatprep.mubr.f32.mxu0 0.0
      %v2294 = vand.u32 %v1938, 4294901760
      %v2295 = vsub.f32 %v1938, %v2294
      %v2296 = vand.u32 %v2295, 4294901760
      %2297 = vmatmul.mubr.f32.gmra.mrb[0].mxu0 %v2296
      %v2298 = vpop.f32.mrb[0].mxu0
      %v2299 = vadd.f32 %v2209, %v2298
      %v2300 = vpop.f32.mrb[0].mxu0
      %2301 = vdwg.mxu0
      %2302 = vmatprep.subr.mxu0 0.0
      %v2303 = vand.u32 %v1929, 4294901760
      %v2304 = vsub.f32 %v1929, %v2303
      %v2305 = vand.u32 %v2304, 4294901760
      %2306 = vmatpush1.msra.mxu0 %v2305
      %2307 = vmatprep.subr.mxu0 0.0
      %2308 = vmatpush1.msra.mxu0 0.0
      %2309 = vmatprep.subr.mxu0 0.0
      %2310 = vmatpush1.msra.mxu0 0.0
      %2311 = vmatprep.subr.mxu0 0.0
      %2312 = vmatpush1.msra.mxu0 0.0
      %2313 = vmatprep.subr.mxu0 0.0
      %2314 = vmatpush1.msra.mxu0 0.0
      %2315 = vmatprep.subr.mxu0 0.0
      %2316 = vmatpush1.msra.mxu0 0.0
      %2317 = vmatprep.subr.mxu0 0.0
      %2318 = vmatpush1.msra.mxu0 0.0
      %2319 = vmatprep.subr.mxu0 0.0
      %2320 = vmatpush1.msra.mxu0 0.0
      %2321 = vmatprep.subr.mxu0 0.0
      %2322 = vmatpush1.msra.mxu0 0.0
      %2323 = vmatprep.subr.mxu0 0.0
      %2324 = vmatpush1.msra.mxu0 0.0
      %2325 = vmatprep.subr.mxu0 0.0
      %2326 = vmatpush1.msra.mxu0 0.0
      %2327 = vmatprep.subr.mxu0 0.0
      %2328 = vmatpush1.msra.mxu0 0.0
      %2329 = vmatprep.subr.mxu0 0.0
      %2330 = vmatpush1.msra.mxu0 0.0
      %2331 = vmatprep.subr.mxu0 0.0
      %2332 = vmatpush1.msra.mxu0 0.0
      %2333 = vmatprep.subr.mxu0 0.0
      %2334 = vmatpush1.msra.mxu0 0.0
      %2335 = vmatprep.subr.mxu0 0.0
      %2336 = vmatpush1.msra.mxu0 0.0
      %2337 = vmatprep.subr.mxu0 0.0
      %2338 = vmatpush1.msra.mxu0 0.0
      %2339 = vmatprep.subr.mxu0 0.0
      %2340 = vmatpush1.msra.mxu0 0.0
      %2341 = vmatprep.subr.mxu0 0.0
      %2342 = vmatpush1.msra.mxu0 0.0
      %2343 = vmatprep.subr.mxu0 0.0
      %2344 = vmatpush1.msra.mxu0 0.0
      %2345 = vmatprep.subr.mxu0 0.0
      %2346 = vmatpush1.msra.mxu0 0.0
      %2347 = vmatprep.subr.mxu0 0.0
      %2348 = vmatpush1.msra.mxu0 0.0
      %2349 = vmatprep.subr.mxu0 0.0
      %2350 = vmatpush1.msra.mxu0 0.0
      %2351 = vmatprep.subr.mxu0 0.0
      %2352 = vmatpush1.msra.mxu0 0.0
      %2353 = vmatprep.subr.mxu0 0.0
      %2354 = vmatpush1.msra.mxu0 0.0
      %2355 = vmatprep.subr.mxu0 0.0
      %2356 = vmatpush1.msra.mxu0 0.0
      %2357 = vmatprep.subr.mxu0 0.0
      %2358 = vmatpush1.msra.mxu0 0.0
      %2359 = vmatprep.subr.mxu0 0.0
      %2360 = vmatpush1.msra.mxu0 0.0
      %2361 = vmatprep.subr.mxu0 0.0
      %2362 = vmatpush1.msra.mxu0 0.0
      %2363 = vmatprep.subr.mxu0 0.0
      %2364 = vmatpush1.msra.mxu0 0.0
      %2365 = vmatprep.subr.mxu0 0.0
      %2366 = vmatpush1.msra.mxu0 0.0
      %2367 = vmatprep.subr.mxu0 0.0
      %2368 = vmatpush1.msra.mxu0 0.0
      %2369 = vmatprep.mubr.f32.mxu0 0.0
      %v2370 = vand.u32 %v1932, 4294901760
      %2371 = vmatmul.mubr.f32.gmra.mrb[0].mxu0 %v2370
      %v2372 = vpop.f32.mrb[0].mxu0
      %v2373 = vadd.f32 %v2283, %v2372
      %v2374 = vpop.f32.mrb[0].mxu0
      %2375 = vmatprep.mubr.f32.mxu0 0.0
      %v2376 = vand.u32 %v1935, 4294901760
      %2377 = vmatmul.mubr.f32.gmra.mrb[0].mxu0 %v2376
      %v2378 = vpop.f32.mrb[0].mxu0
      %v2379 = vadd.f32 %v2291, %v2378
      %v2380 = vpop.f32.mrb[0].mxu0
      %2381 = vmatprep.mubr.f32.mxu0 0.0
      %v2382 = vand.u32 %v1938, 4294901760
      %2383 = vmatmul.mubr.f32.gmra.mrb[0].mxu0 %v2382
      %v2384 = vpop.f32.mrb[0].mxu0
      %v2385 = vadd.f32 %v2299, %v2384
      %v2386 = vpop.f32.mrb[0].mxu0
      %2387 = vdwg.mxu0
      %2388 = vmatprep.subr.mxu0 0.0
      %v2389 = vand.u32 %v1929, 4294901760
      %2390 = vmatpush1.msra.mxu0 %v2389
      %2391 = vmatprep.subr.mxu0 0.0
      %2392 = vmatpush1.msra.mxu0 0.0
      %2393 = vmatprep.subr.mxu0 0.0
      %2394 = vmatpush1.msra.mxu0 0.0
      %2395 = vmatprep.subr.mxu0 0.0
      %2396 = vmatpush1.msra.mxu0 0.0
      %2397 = vmatprep.subr.mxu0 0.0
      %2398 = vmatpush1.msra.mxu0 0.0
      %2399 = vmatprep.subr.mxu0 0.0
      %2400 = vmatpush1.msra.mxu0 0.0
      %2401 = vmatprep.subr.mxu0 0.0
      %2402 = vmatpush1.msra.mxu0 0.0
      %2403 = vmatprep.subr.mxu0 0.0
      %2404 = vmatpush1.msra.mxu0 0.0
      %2405 = vmatprep.subr.mxu0 0.0
      %2406 = vmatpush1.msra.mxu0 0.0
      %2407 = vmatprep.subr.mxu0 0.0
      %2408 = vmatpush1.msra.mxu0 0.0
      %2409 = vmatprep.subr.mxu0 0.0
      %2410 = vmatpush1.msra.mxu0 0.0
      %2411 = vmatprep.subr.mxu0 0.0
      %2412 = vmatpush1.msra.mxu0 0.0
      %2413 = vmatprep.subr.mxu0 0.0
      %2414 = vmatpush1.msra.mxu0 0.0
      %2415 = vmatprep.subr.mxu0 0.0
      %2416 = vmatpush1.msra.mxu0 0.0
      %2417 = vmatprep.subr.mxu0 0.0
      %2418 = vmatpush1.msra.mxu0 0.0
      %2419 = vmatprep.subr.mxu0 0.0
      %2420 = vmatpush1.msra.mxu0 0.0
      %2421 = vmatprep.subr.mxu0 0.0
      %2422 = vmatpush1.msra.mxu0 0.0
      %2423 = vmatprep.subr.mxu0 0.0
      %2424 = vmatpush1.msra.mxu0 0.0
      %2425 = vmatprep.subr.mxu0 0.0
      %2426 = vmatpush1.msra.mxu0 0.0
      %2427 = vmatprep.subr.mxu0 0.0
      %2428 = vmatpush1.msra.mxu0 0.0
      %2429 = vmatprep.subr.mxu0 0.0
      %2430 = vmatpush1.msra.mxu0 0.0
      %2431 = vmatprep.subr.mxu0 0.0
      %2432 = vmatpush1.msra.mxu0 0.0
      %2433 = vmatprep.subr.mxu0 0.0
      %2434 = vmatpush1.msra.mxu0 0.0
      %2435 = vmatprep.subr.mxu0 0.0
      %2436 = vmatpush1.msra.mxu0 0.0
      %2437 = vmatprep.subr.mxu0 0.0
      %2438 = vmatpush1.msra.mxu0 0.0
      %2439 = vmatprep.subr.mxu0 0.0
      %2440 = vmatpush1.msra.mxu0 0.0
      %2441 = vmatprep.subr.mxu0 0.0
      %2442 = vmatpush1.msra.mxu0 0.0
      %2443 = vmatprep.subr.mxu0 0.0
      %2444 = vmatpush1.msra.mxu0 0.0
      %2445 = vmatprep.subr.mxu0 0.0
      %2446 = vmatpush1.msra.mxu0 0.0
      %2447 = vmatprep.subr.mxu0 0.0
      %2448 = vmatpush1.msra.mxu0 0.0
      %2449 = vmatprep.subr.mxu0 0.0
      %2450 = vmatpush1.msra.mxu0 0.0
      %2451 = vmatprep.subr.mxu0 0.0
      %2452 = vmatpush1.msra.mxu0 0.0
      %2453 = vmatprep.mubr.f32.mxu0 0.0
      %v2454 = vand.u32 %v1932, 4294901760
      %2455 = vmatmul.mubr.f32.gmra.mrb[0].mxu0 %v2454
      %v2456 = vpop.f32.mrb[0].mxu0
      %v2457 = vadd.f32 %v2373, %v2456
      %v2458 = vpop.f32.mrb[0].mxu0
      %2459 = vmatprep.mubr.f32.mxu0 0.0
      %v2460 = vand.u32 %v1935, 4294901760
      %2461 = vmatmul.mubr.f32.gmra.mrb[0].mxu0 %v2460
      %v2462 = vpop.f32.mrb[0].mxu0
      %v2463 = vadd.f32 %v2379, %v2462
      %v2464 = vpop.f32.mrb[0].mxu0
      %2465 = vmatprep.mubr.f32.mxu0 0.0
      %v2466 = vand.u32 %v1938, 4294901760
      %2467 = vmatmul.mubr.f32.gmra.mrb[0].mxu0 %v2466
      %v2468 = vpop.f32.mrb[0].mxu0
      %v2469 = vadd.f32 %v2385, %v2468
      %v2470 = vpop.f32.mrb[0].mxu0
      %2471 = vdwg.mxu0
      %v2472 = vadd.f32 %v1921, %v2457
      %v2473 = vadd.f32 %v1922, %v2463
      %v2474 = vadd.f32 %v1923, %v2469
      %s2475 = scalar_lea.vmem %s2, 96
      %v2476 = vld [vmem:[%s2475] sm:$0xff]
      %v2477 = vld [vmem:[%s2475 + $0x8] sm:$0xff]
      %v2478 = vld [vmem:[%s2475 + $0x10] sm:$0xff]
      %2479 = vrot.lane.b32.xlu0 %v278, 124
      %v2480 = vpop.permute.xlu0 %2479
      %v2483 = vsel %vm290, %v2476, 0
      %v2486 = vsel %vm290, %v2477, 0
      %v2489 = vsel %vm290, %v2478, 0
      %2491 = vmatprep.subr.mxu0 0.0
      %v2492 = vand.u32 %v2480, 4294901760
      %2493 = vmatpush1.msra.mxu0 %v2492
      %2494 = vmatprep.subr.mxu0 0.0
      %2495 = vmatpush1.msra.mxu0 0.0
      %2496 = vmatprep.subr.mxu0 0.0
      %2497 = vmatpush1.msra.mxu0 0.0
      %2498 = vmatprep.subr.mxu0 0.0
      %2499 = vmatpush1.msra.mxu0 0.0
      %2500 = vmatprep.subr.mxu0 0.0
      %2501 = vmatpush1.msra.mxu0 0.0
      %2502 = vmatprep.subr.mxu0 0.0
      %2503 = vmatpush1.msra.mxu0 0.0
      %2504 = vmatprep.subr.mxu0 0.0
      %2505 = vmatpush1.msra.mxu0 0.0
      %2506 = vmatprep.subr.mxu0 0.0
      %2507 = vmatpush1.msra.mxu0 0.0
      %2508 = vmatprep.subr.mxu0 0.0
      %2509 = vmatpush1.msra.mxu0 0.0
      %2510 = vmatprep.subr.mxu0 0.0
      %2511 = vmatpush1.msra.mxu0 0.0
      %2512 = vmatprep.subr.mxu0 0.0
      %2513 = vmatpush1.msra.mxu0 0.0
      %2514 = vmatprep.subr.mxu0 0.0
      %2515 = vmatpush1.msra.mxu0 0.0
      %2516 = vmatprep.subr.mxu0 0.0
      %2517 = vmatpush1.msra.mxu0 0.0
      %2518 = vmatprep.subr.mxu0 0.0
      %2519 = vmatpush1.msra.mxu0 0.0
      %2520 = vmatprep.subr.mxu0 0.0
      %2521 = vmatpush1.msra.mxu0 0.0
      %2522 = vmatprep.subr.mxu0 0.0
      %2523 = vmatpush1.msra.mxu0 0.0
      %2524 = vmatprep.subr.mxu0 0.0
      %2525 = vmatpush1.msra.mxu0 0.0
      %2526 = vmatprep.subr.mxu0 0.0
      %2527 = vmatpush1.msra.mxu0 0.0
      %2528 = vmatprep.subr.mxu0 0.0
      %2529 = vmatpush1.msra.mxu0 0.0
      %2530 = vmatprep.subr.mxu0 0.0
      %2531 = vmatpush1.msra.mxu0 0.0
      %2532 = vmatprep.subr.mxu0 0.0
      %2533 = vmatpush1.msra.mxu0 0.0
      %2534 = vmatprep.subr.mxu0 0.0
      %2535 = vmatpush1.msra.mxu0 0.0
      %2536 = vmatprep.subr.mxu0 0.0
      %2537 = vmatpush1.msra.mxu0 0.0
      %2538 = vmatprep.subr.mxu0 0.0
      %2539 = vmatpush1.msra.mxu0 0.0
      %2540 = vmatprep.subr.mxu0 0.0
      %2541 = vmatpush1.msra.mxu0 0.0
      %2542 = vmatprep.subr.mxu0 0.0
      %2543 = vmatpush1.msra.mxu0 0.0
      %2544 = vmatprep.subr.mxu0 0.0
      %2545 = vmatpush1.msra.mxu0 0.0
      %2546 = vmatprep.subr.mxu0 0.0
      %2547 = vmatpush1.msra.mxu0 0.0
      %2548 = vmatprep.subr.mxu0 0.0
      %2549 = vmatpush1.msra.mxu0 0.0
      %2550 = vmatprep.subr.mxu0 0.0
      %2551 = vmatpush1.msra.mxu0 0.0
      %2552 = vmatprep.subr.mxu0 0.0
      %2553 = vmatpush1.msra.mxu0 0.0
      %2554 = vmatprep.subr.mxu0 0.0
      %2555 = vmatpush1.msra.mxu0 0.0
      %2556 = vmatprep.mubr.f32.mxu0 0.0
      %v2557 = vand.u32 %v2483, 4294901760
      %v2558 = vsub.f32 %v2483, %v2557
      %v2559 = vand.u32 %v2558, 4294901760
      %v2560 = vsub.f32 %v2558, %v2559
      %v2561 = vand.u32 %v2560, 4294901760
      %2562 = vmatmul.mubr.f32.gmra.mrb[0].mxu0 %v2561
      %v2563 = vpop.f32.mrb[0].mxu0
      %v2564 = vadd.f32 0.0, %v2563
      %v2565 = vpop.f32.mrb[0].mxu0
      %2566 = vmatprep.mubr.f32.mxu0 0.0
      %v2567 = vand.u32 %v2486, 4294901760
      %v2568 = vsub.f32 %v2486, %v2567
      %v2569 = vand.u32 %v2568, 4294901760
      %v2570 = vsub.f32 %v2568, %v2569
      %v2571 = vand.u32 %v2570, 4294901760
      %2572 = vmatmul.mubr.f32.gmra.mrb[0].mxu0 %v2571
      %v2573 = vpop.f32.mrb[0].mxu0
      %v2574 = vadd.f32 0.0, %v2573
      %v2575 = vpop.f32.mrb[0].mxu0
      %2576 = vmatprep.mubr.f32.mxu0 0.0
      %v2577 = vand.u32 %v2489, 4294901760
      %v2578 = vsub.f32 %v2489, %v2577
      %v2579 = vand.u32 %v2578, 4294901760
      %v2580 = vsub.f32 %v2578, %v2579
      %v2581 = vand.u32 %v2580, 4294901760
      %2582 = vmatmul.mubr.f32.gmra.mrb[0].mxu0 %v2581
      %v2583 = vpop.f32.mrb[0].mxu0
      %v2584 = vadd.f32 0.0, %v2583
      %v2585 = vpop.f32.mrb[0].mxu0
      %2586 = vdwg.mxu0
      %2587 = vmatprep.subr.mxu0 0.0
      %v2588 = vand.u32 %v2480, 4294901760
      %v2589 = vsub.f32 %v2480, %v2588
      %v2590 = vand.u32 %v2589, 4294901760
      %v2591 = vsub.f32 %v2589, %v2590
      %v2592 = vand.u32 %v2591, 4294901760
      %2593 = vmatpush1.msra.mxu0 %v2592
      %2594 = vmatprep.subr.mxu0 0.0
      %2595 = vmatpush1.msra.mxu0 0.0
      %2596 = vmatprep.subr.mxu0 0.0
      %2597 = vmatpush1.msra.mxu0 0.0
      %2598 = vmatprep.subr.mxu0 0.0
      %2599 = vmatpush1.msra.mxu0 0.0
      %2600 = vmatprep.subr.mxu0 0.0
      %2601 = vmatpush1.msra.mxu0 0.0
      %2602 = vmatprep.subr.mxu0 0.0
      %2603 = vmatpush1.msra.mxu0 0.0
      %2604 = vmatprep.subr.mxu0 0.0
      %2605 = vmatpush1.msra.mxu0 0.0
      %2606 = vmatprep.subr.mxu0 0.0
      %2607 = vmatpush1.msra.mxu0 0.0
      %2608 = vmatprep.subr.mxu0 0.0
      %2609 = vmatpush1.msra.mxu0 0.0
      %2610 = vmatprep.subr.mxu0 0.0
      %2611 = vmatpush1.msra.mxu0 0.0
      %2612 = vmatprep.subr.mxu0 0.0
      %2613 = vmatpush1.msra.mxu0 0.0
      %2614 = vmatprep.subr.mxu0 0.0
      %2615 = vmatpush1.msra.mxu0 0.0
      %2616 = vmatprep.subr.mxu0 0.0
      %2617 = vmatpush1.msra.mxu0 0.0
      %2618 = vmatprep.subr.mxu0 0.0
      %2619 = vmatpush1.msra.mxu0 0.0
      %2620 = vmatprep.subr.mxu0 0.0
      %2621 = vmatpush1.msra.mxu0 0.0
      %2622 = vmatprep.subr.mxu0 0.0
      %2623 = vmatpush1.msra.mxu0 0.0
      %2624 = vmatprep.subr.mxu0 0.0
      %2625 = vmatpush1.msra.mxu0 0.0
      %2626 = vmatprep.subr.mxu0 0.0
      %2627 = vmatpush1.msra.mxu0 0.0
      %2628 = vmatprep.subr.mxu0 0.0
      %2629 = vmatpush1.msra.mxu0 0.0
      %2630 = vmatprep.subr.mxu0 0.0
      %2631 = vmatpush1.msra.mxu0 0.0
      %2632 = vmatprep.subr.mxu0 0.0
      %2633 = vmatpush1.msra.mxu0 0.0
      %2634 = vmatprep.subr.mxu0 0.0
      %2635 = vmatpush1.msra.mxu0 0.0
      %2636 = vmatprep.subr.mxu0 0.0
      %2637 = vmatpush1.msra.mxu0 0.0
      %2638 = vmatprep.subr.mxu0 0.0
      %2639 = vmatpush1.msra.mxu0 0.0
      %2640 = vmatprep.subr.mxu0 0.0
      %2641 = vmatpush1.msra.mxu0 0.0
      %2642 = vmatprep.subr.mxu0 0.0
      %2643 = vmatpush1.msra.mxu0 0.0
      %2644 = vmatprep.subr.mxu0 0.0
      %2645 = vmatpush1.msra.mxu0 0.0
      %2646 = vmatprep.subr.mxu0 0.0
      %2647 = vmatpush1.msra.mxu0 0.0
      %2648 = vmatprep.subr.mxu0 0.0
      %2649 = vmatpush1.msra.mxu0 0.0
      %2650 = vmatprep.subr.mxu0 0.0
      %2651 = vmatpush1.msra.mxu0 0.0
      %2652 = vmatprep.subr.mxu0 0.0
      %2653 = vmatpush1.msra.mxu0 0.0
      %2654 = vmatprep.subr.mxu0 0.0
      %2655 = vmatpush1.msra.mxu0 0.0
      %2656 = vmatprep.mubr.f32.mxu0 0.0
      %v2657 = vand.u32 %v2483, 4294901760
      %2658 = vmatmul.mubr.f32.gmra.mrb[0].mxu0 %v2657
      %v2659 = vpop.f32.mrb[0].mxu0
      %v2660 = vadd.f32 %v2564, %v2659
      %v2661 = vpop.f32.mrb[0].mxu0
      %2662 = vmatprep.mubr.f32.mxu0 0.0
      %v2663 = vand.u32 %v2486, 4294901760
      %2664 = vmatmul.mubr.f32.gmra.mrb[0].mxu0 %v2663
      %v2665 = vpop.f32.mrb[0].mxu0
      %v2666 = vadd.f32 %v2574, %v2665
      %v2667 = vpop.f32.mrb[0].mxu0
      %2668 = vmatprep.mubr.f32.mxu0 0.0
      %v2669 = vand.u32 %v2489, 4294901760
      %2670 = vmatmul.mubr.f32.gmra.mrb[0].mxu0 %v2669
      %v2671 = vpop.f32.mrb[0].mxu0
      %v2672 = vadd.f32 %v2584, %v2671
      %v2673 = vpop.f32.mrb[0].mxu0
      %2674 = vdwg.mxu0
      %2675 = vmatprep.subr.mxu0 0.0
      %v2676 = vand.u32 %v2480, 4294901760
      %v2677 = vsub.f32 %v2480, %v2676
      %2678 = vmatpush1.msra.mxu0 %v2677
      %2679 = vmatprep.subr.mxu0 0.0
      %2680 = vmatpush1.msra.mxu0 0.0
      %2681 = vmatprep.subr.mxu0 0.0
      %2682 = vmatpush1.msra.mxu0 0.0
      %2683 = vmatprep.subr.mxu0 0.0
      %2684 = vmatpush1.msra.mxu0 0.0
      %2685 = vmatprep.subr.mxu0 0.0
      %2686 = vmatpush1.msra.mxu0 0.0
      %2687 = vmatprep.subr.mxu0 0.0
      %2688 = vmatpush1.msra.mxu0 0.0
      %2689 = vmatprep.subr.mxu0 0.0
      %2690 = vmatpush1.msra.mxu0 0.0
      %2691 = vmatprep.subr.mxu0 0.0
      %2692 = vmatpush1.msra.mxu0 0.0
      %2693 = vmatprep.subr.mxu0 0.0
      %2694 = vmatpush1.msra.mxu0 0.0
      %2695 = vmatprep.subr.mxu0 0.0
      %2696 = vmatpush1.msra.mxu0 0.0
      %2697 = vmatprep.subr.mxu0 0.0
      %2698 = vmatpush1.msra.mxu0 0.0
      %2699 = vmatprep.subr.mxu0 0.0
      %2700 = vmatpush1.msra.mxu0 0.0
      %2701 = vmatprep.subr.mxu0 0.0
      %2702 = vmatpush1.msra.mxu0 0.0
      %2703 = vmatprep.subr.mxu0 0.0
      %2704 = vmatpush1.msra.mxu0 0.0
      %2705 = vmatprep.subr.mxu0 0.0
      %2706 = vmatpush1.msra.mxu0 0.0
      %2707 = vmatprep.subr.mxu0 0.0
      %2708 = vmatpush1.msra.mxu0 0.0
      %2709 = vmatprep.subr.mxu0 0.0
      %2710 = vmatpush1.msra.mxu0 0.0
      %2711 = vmatprep.subr.mxu0 0.0
      %2712 = vmatpush1.msra.mxu0 0.0
      %2713 = vmatprep.subr.mxu0 0.0
      %2714 = vmatpush1.msra.mxu0 0.0
      %2715 = vmatprep.subr.mxu0 0.0
      %2716 = vmatpush1.msra.mxu0 0.0
      %2717 = vmatprep.subr.mxu0 0.0
      %2718 = vmatpush1.msra.mxu0 0.0
      %2719 = vmatprep.subr.mxu0 0.0
      %2720 = vmatpush1.msra.mxu0 0.0
      %2721 = vmatprep.subr.mxu0 0.0
      %2722 = vmatpush1.msra.mxu0 0.0
      %2723 = vmatprep.subr.mxu0 0.0
      %2724 = vmatpush1.msra.mxu0 0.0
      %2725 = vmatprep.subr.mxu0 0.0
      %2726 = vmatpush1.msra.mxu0 0.0
      %2727 = vmatprep.subr.mxu0 0.0
      %2728 = vmatpush1.msra.mxu0 0.0
      %2729 = vmatprep.subr.mxu0 0.0
      %2730 = vmatpush1.msra.mxu0 0.0
      %2731 = vmatprep.subr.mxu0 0.0
      %2732 = vmatpush1.msra.mxu0 0.0
      %2733 = vmatprep.subr.mxu0 0.0
      %2734 = vmatpush1.msra.mxu0 0.0
      %2735 = vmatprep.subr.mxu0 0.0
      %2736 = vmatpush1.msra.mxu0 0.0
      %2737 = vmatprep.subr.mxu0 0.0
      %2738 = vmatpush1.msra.mxu0 0.0
      %2739 = vmatprep.subr.mxu0 0.0
      %2740 = vmatpush1.msra.mxu0 0.0
      %2741 = vmatprep.mubr.f32.mxu0 0.0
      %v2742 = vand.u32 %v2483, 4294901760
      %v2743 = vsub.f32 %v2483, %v2742
      %2744 = vmatmul.mubr.f32.gmra.mrb[0].mxu0 %v2743
      %v2745 = vpop.f32.mrb[0].mxu0
      %v2746 = vadd.f32 %v2660, %v2745
      %v2747 = vpop.f32.mrb[0].mxu0
      %2748 = vmatprep.mubr.f32.mxu0 0.0
      %v2749 = vand.u32 %v2486, 4294901760
      %v2750 = vsub.f32 %v2486, %v2749
      %2751 = vmatmul.mubr.f32.gmra.mrb[0].mxu0 %v2750
      %v2752 = vpop.f32.mrb[0].mxu0
      %v2753 = vadd.f32 %v2666, %v2752
      %v2754 = vpop.f32.mrb[0].mxu0
      %2755 = vmatprep.mubr.f32.mxu0 0.0
      %v2756 = vand.u32 %v2489, 4294901760
      %v2757 = vsub.f32 %v2489, %v2756
      %2758 = vmatmul.mubr.f32.gmra.mrb[0].mxu0 %v2757
      %v2759 = vpop.f32.mrb[0].mxu0
      %v2760 = vadd.f32 %v2672, %v2759
      %v2761 = vpop.f32.mrb[0].mxu0
      %2762 = vdwg.mxu0
      %2763 = vmatprep.subr.mxu0 0.0
      %v2764 = vand.u32 %v2480, 4294901760
      %2765 = vmatpush1.msra.mxu0 %v2764
      %2766 = vmatprep.subr.mxu0 0.0
      %2767 = vmatpush1.msra.mxu0 0.0
      %2768 = vmatprep.subr.mxu0 0.0
      %2769 = vmatpush1.msra.mxu0 0.0
      %2770 = vmatprep.subr.mxu0 0.0
      %2771 = vmatpush1.msra.mxu0 0.0
      %2772 = vmatprep.subr.mxu0 0.0
      %2773 = vmatpush1.msra.mxu0 0.0
      %2774 = vmatprep.subr.mxu0 0.0
      %2775 = vmatpush1.msra.mxu0 0.0
      %2776 = vmatprep.subr.mxu0 0.0
      %2777 = vmatpush1.msra.mxu0 0.0
      %2778 = vmatprep.subr.mxu0 0.0
      %2779 = vmatpush1.msra.mxu0 0.0
      %2780 = vmatprep.subr.mxu0 0.0
      %2781 = vmatpush1.msra.mxu0 0.0
      %2782 = vmatprep.subr.mxu0 0.0
      %2783 = vmatpush1.msra.mxu0 0.0
      %2784 = vmatprep.subr.mxu0 0.0
      %2785 = vmatpush1.msra.mxu0 0.0
      %2786 = vmatprep.subr.mxu0 0.0
      %2787 = vmatpush1.msra.mxu0 0.0
      %2788 = vmatprep.subr.mxu0 0.0
      %2789 = vmatpush1.msra.mxu0 0.0
      %2790 = vmatprep.subr.mxu0 0.0
      %2791 = vmatpush1.msra.mxu0 0.0
      %2792 = vmatprep.subr.mxu0 0.0
      %2793 = vmatpush1.msra.mxu0 0.0
      %2794 = vmatprep.subr.mxu0 0.0
      %2795 = vmatpush1.msra.mxu0 0.0
      %2796 = vmatprep.subr.mxu0 0.0
      %2797 = vmatpush1.msra.mxu0 0.0
      %2798 = vmatprep.subr.mxu0 0.0
      %2799 = vmatpush1.msra.mxu0 0.0
      %2800 = vmatprep.subr.mxu0 0.0
      %2801 = vmatpush1.msra.mxu0 0.0
      %2802 = vmatprep.subr.mxu0 0.0
      %2803 = vmatpush1.msra.mxu0 0.0
      %2804 = vmatprep.subr.mxu0 0.0
      %2805 = vmatpush1.msra.mxu0 0.0
      %2806 = vmatprep.subr.mxu0 0.0
      %2807 = vmatpush1.msra.mxu0 0.0
      %2808 = vmatprep.subr.mxu0 0.0
      %2809 = vmatpush1.msra.mxu0 0.0
      %2810 = vmatprep.subr.mxu0 0.0
      %2811 = vmatpush1.msra.mxu0 0.0
      %2812 = vmatprep.subr.mxu0 0.0
      %2813 = vmatpush1.msra.mxu0 0.0
      %2814 = vmatprep.subr.mxu0 0.0
      %2815 = vmatpush1.msra.mxu0 0.0
      %2816 = vmatprep.subr.mxu0 0.0
      %2817 = vmatpush1.msra.mxu0 0.0
      %2818 = vmatprep.subr.mxu0 0.0
      %2819 = vmatpush1.msra.mxu0 0.0
      %2820 = vmatprep.subr.mxu0 0.0
      %2821 = vmatpush1.msra.mxu0 0.0
      %2822 = vmatprep.subr.mxu0 0.0
      %2823 = vmatpush1.msra.mxu0 0.0
      %2824 = vmatprep.subr.mxu0 0.0
      %2825 = vmatpush1.msra.mxu0 0.0
      %2826 = vmatprep.subr.mxu0 0.0
      %2827 = vmatpush1.msra.mxu0 0.0
      %2828 = vmatprep.mubr.f32.mxu0 0.0
      %v2829 = vand.u32 %v2483, 4294901760
      %v2830 = vsub.f32 %v2483, %v2829
      %v2831 = vand.u32 %v2830, 4294901760
      %2832 = vmatmul.mubr.f32.gmra.mrb[0].mxu0 %v2831
      %v2833 = vpop.f32.mrb[0].mxu0
      %v2834 = vadd.f32 %v2746, %v2833
      %v2835 = vpop.f32.mrb[0].mxu0
      %2836 = vmatprep.mubr.f32.mxu0 0.0
      %v2837 = vand.u32 %v2486, 4294901760
      %v2838 = vsub.f32 %v2486, %v2837
      %v2839 = vand.u32 %v2838, 4294901760
      %2840 = vmatmul.mubr.f32.gmra.mrb[0].mxu0 %v2839
      %v2841 = vpop.f32.mrb[0].mxu0
      %v2842 = vadd.f32 %v2753, %v2841
      %v2843 = vpop.f32.mrb[0].mxu0
      %2844 = vmatprep.mubr.f32.mxu0 0.0
      %v2845 = vand.u32 %v2489, 4294901760
      %v2846 = vsub.f32 %v2489, %v2845
      %v2847 = vand.u32 %v2846, 4294901760
      %2848 = vmatmul.mubr.f32.gmra.mrb[0].mxu0 %v2847
      %v2849 = vpop.f32.mrb[0].mxu0
      %v2850 = vadd.f32 %v2760, %v2849
      %v2851 = vpop.f32.mrb[0].mxu0
      %2852 = vdwg.mxu0
      %2853 = vmatprep.subr.mxu0 0.0
      %v2854 = vand.u32 %v2480, 4294901760
      %v2855 = vsub.f32 %v2480, %v2854
      %v2856 = vand.u32 %v2855, 4294901760
      %2857 = vmatpush1.msra.mxu0 %v2856
      %2858 = vmatprep.subr.mxu0 0.0
      %2859 = vmatpush1.msra.mxu0 0.0
      %2860 = vmatprep.subr.mxu0 0.0
      %2861 = vmatpush1.msra.mxu0 0.0
      %2862 = vmatprep.subr.mxu0 0.0
      %2863 = vmatpush1.msra.mxu0 0.0
      %2864 = vmatprep.subr.mxu0 0.0
      %2865 = vmatpush1.msra.mxu0 0.0
      %2866 = vmatprep.subr.mxu0 0.0
      %2867 = vmatpush1.msra.mxu0 0.0
      %2868 = vmatprep.subr.mxu0 0.0
      %2869 = vmatpush1.msra.mxu0 0.0
      %2870 = vmatprep.subr.mxu0 0.0
      %2871 = vmatpush1.msra.mxu0 0.0
      %2872 = vmatprep.subr.mxu0 0.0
      %2873 = vmatpush1.msra.mxu0 0.0
      %2874 = vmatprep.subr.mxu0 0.0
      %2875 = vmatpush1.msra.mxu0 0.0
      %2876 = vmatprep.subr.mxu0 0.0
      %2877 = vmatpush1.msra.mxu0 0.0
      %2878 = vmatprep.subr.mxu0 0.0
      %2879 = vmatpush1.msra.mxu0 0.0
      %2880 = vmatprep.subr.mxu0 0.0
      %2881 = vmatpush1.msra.mxu0 0.0
      %2882 = vmatprep.subr.mxu0 0.0
      %2883 = vmatpush1.msra.mxu0 0.0
      %2884 = vmatprep.subr.mxu0 0.0
      %2885 = vmatpush1.msra.mxu0 0.0
      %2886 = vmatprep.subr.mxu0 0.0
      %2887 = vmatpush1.msra.mxu0 0.0
      %2888 = vmatprep.subr.mxu0 0.0
      %2889 = vmatpush1.msra.mxu0 0.0
      %2890 = vmatprep.subr.mxu0 0.0
      %2891 = vmatpush1.msra.mxu0 0.0
      %2892 = vmatprep.subr.mxu0 0.0
      %2893 = vmatpush1.msra.mxu0 0.0
      %2894 = vmatprep.subr.mxu0 0.0
      %2895 = vmatpush1.msra.mxu0 0.0
      %2896 = vmatprep.subr.mxu0 0.0
      %2897 = vmatpush1.msra.mxu0 0.0
      %2898 = vmatprep.subr.mxu0 0.0
      %2899 = vmatpush1.msra.mxu0 0.0
      %2900 = vmatprep.subr.mxu0 0.0
      %2901 = vmatpush1.msra.mxu0 0.0
      %2902 = vmatprep.subr.mxu0 0.0
      %2903 = vmatpush1.msra.mxu0 0.0
      %2904 = vmatprep.subr.mxu0 0.0
      %2905 = vmatpush1.msra.mxu0 0.0
      %2906 = vmatprep.subr.mxu0 0.0
      %2907 = vmatpush1.msra.mxu0 0.0
      %2908 = vmatprep.subr.mxu0 0.0
      %2909 = vmatpush1.msra.mxu0 0.0
      %2910 = vmatprep.subr.mxu0 0.0
      %2911 = vmatpush1.msra.mxu0 0.0
      %2912 = vmatprep.subr.mxu0 0.0
      %2913 = vmatpush1.msra.mxu0 0.0
      %2914 = vmatprep.subr.mxu0 0.0
      %2915 = vmatpush1.msra.mxu0 0.0
      %2916 = vmatprep.subr.mxu0 0.0
      %2917 = vmatpush1.msra.mxu0 0.0
      %2918 = vmatprep.subr.mxu0 0.0
      %2919 = vmatpush1.msra.mxu0 0.0
      %2920 = vmatprep.mubr.f32.mxu0 0.0
      %v2921 = vand.u32 %v2483, 4294901760
      %2922 = vmatmul.mubr.f32.gmra.mrb[0].mxu0 %v2921
      %v2923 = vpop.f32.mrb[0].mxu0
      %v2924 = vadd.f32 %v2834, %v2923
      %v2925 = vpop.f32.mrb[0].mxu0
      %2926 = vmatprep.mubr.f32.mxu0 0.0
      %v2927 = vand.u32 %v2486, 4294901760
      %2928 = vmatmul.mubr.f32.gmra.mrb[0].mxu0 %v2927
      %v2929 = vpop.f32.mrb[0].mxu0
      %v2930 = vadd.f32 %v2842, %v2929
      %v2931 = vpop.f32.mrb[0].mxu0
      %2932 = vmatprep.mubr.f32.mxu0 0.0
      %v2933 = vand.u32 %v2489, 4294901760
      %2934 = vmatmul.mubr.f32.gmra.mrb[0].mxu0 %v2933
      %v2935 = vpop.f32.mrb[0].mxu0
      %v2936 = vadd.f32 %v2850, %v2935
      %v2937 = vpop.f32.mrb[0].mxu0
      %2938 = vdwg.mxu0
      %2939 = vmatprep.subr.mxu0 0.0
      %v2940 = vand.u32 %v2480, 4294901760
      %2941 = vmatpush1.msra.mxu0 %v2940
      %2942 = vmatprep.subr.mxu0 0.0
      %2943 = vmatpush1.msra.mxu0 0.0
      %2944 = vmatprep.subr.mxu0 0.0
      %2945 = vmatpush1.msra.mxu0 0.0
      %2946 = vmatprep.subr.mxu0 0.0
      %2947 = vmatpush1.msra.mxu0 0.0
      %2948 = vmatprep.subr.mxu0 0.0
      %2949 = vmatpush1.msra.mxu0 0.0
      %2950 = vmatprep.subr.mxu0 0.0
      %2951 = vmatpush1.msra.mxu0 0.0
      %2952 = vmatprep.subr.mxu0 0.0
      %2953 = vmatpush1.msra.mxu0 0.0
      %2954 = vmatprep.subr.mxu0 0.0
      %2955 = vmatpush1.msra.mxu0 0.0
      %2956 = vmatprep.subr.mxu0 0.0
      %2957 = vmatpush1.msra.mxu0 0.0
      %2958 = vmatprep.subr.mxu0 0.0
      %2959 = vmatpush1.msra.mxu0 0.0
      %2960 = vmatprep.subr.mxu0 0.0
      %2961 = vmatpush1.msra.mxu0 0.0
      %2962 = vmatprep.subr.mxu0 0.0
      %2963 = vmatpush1.msra.mxu0 0.0
      %2964 = vmatprep.subr.mxu0 0.0
      %2965 = vmatpush1.msra.mxu0 0.0
      %2966 = vmatprep.subr.mxu0 0.0
      %2967 = vmatpush1.msra.mxu0 0.0
      %2968 = vmatprep.subr.mxu0 0.0
      %2969 = vmatpush1.msra.mxu0 0.0
      %2970 = vmatprep.subr.mxu0 0.0
      %2971 = vmatpush1.msra.mxu0 0.0
      %2972 = vmatprep.subr.mxu0 0.0
      %2973 = vmatpush1.msra.mxu0 0.0
      %2974 = vmatprep.subr.mxu0 0.0
      %2975 = vmatpush1.msra.mxu0 0.0
      %2976 = vmatprep.subr.mxu0 0.0
      %2977 = vmatpush1.msra.mxu0 0.0
      %2978 = vmatprep.subr.mxu0 0.0
      %2979 = vmatpush1.msra.mxu0 0.0
      %2980 = vmatprep.subr.mxu0 0.0
      %2981 = vmatpush1.msra.mxu0 0.0
      %2982 = vmatprep.subr.mxu0 0.0
      %2983 = vmatpush1.msra.mxu0 0.0
      %2984 = vmatprep.subr.mxu0 0.0
      %2985 = vmatpush1.msra.mxu0 0.0
      %2986 = vmatprep.subr.mxu0 0.0
      %2987 = vmatpush1.msra.mxu0 0.0
      %2988 = vmatprep.subr.mxu0 0.0
      %2989 = vmatpush1.msra.mxu0 0.0
      %2990 = vmatprep.subr.mxu0 0.0
      %2991 = vmatpush1.msra.mxu0 0.0
      %2992 = vmatprep.subr.mxu0 0.0
      %2993 = vmatpush1.msra.mxu0 0.0
      %2994 = vmatprep.subr.mxu0 0.0
      %2995 = vmatpush1.msra.mxu0 0.0
      %2996 = vmatprep.subr.mxu0 0.0
      %2997 = vmatpush1.msra.mxu0 0.0
      %2998 = vmatprep.subr.mxu0 0.0
      %2999 = vmatpush1.msra.mxu0 0.0
      %3000 = vmatprep.subr.mxu0 0.0
      %3001 = vmatpush1.msra.mxu0 0.0
      %3002 = vmatprep.subr.mxu0 0.0
      %3003 = vmatpush1.msra.mxu0 0.0
      %3004 = vmatprep.mubr.f32.mxu0 0.0
      %v3005 = vand.u32 %v2483, 4294901760
      %3006 = vmatmul.mubr.f32.gmra.mrb[0].mxu0 %v3005
      %v3007 = vpop.f32.mrb[0].mxu0
      %v3008 = vadd.f32 %v2924, %v3007
      %v3009 = vpop.f32.mrb[0].mxu0
      %3010 = vmatprep.mubr.f32.mxu0 0.0
      %v3011 = vand.u32 %v2486, 4294901760
      %3012 = vmatmul.mubr.f32.gmra.mrb[0].mxu0 %v3011
      %v3013 = vpop.f32.mrb[0].mxu0
      %v3014 = vadd.f32 %v2930, %v3013
      %v3015 = vpop.f32.mrb[0].mxu0
      %3016 = vmatprep.mubr.f32.mxu0 0.0
      %v3017 = vand.u32 %v2489, 4294901760
      %3018 = vmatmul.mubr.f32.gmra.mrb[0].mxu0 %v3017
      %v3019 = vpop.f32.mrb[0].mxu0
      %v3020 = vadd.f32 %v2936, %v3019
      %v3021 = vpop.f32.mrb[0].mxu0
      %3022 = vdwg.mxu0
      %v3023 = vadd.f32 %v2472, %v3008
      %v3024 = vadd.f32 %v2473, %v3014
      %v3025 = vadd.f32 %v2474, %v3020
      %s3026 = scalar_lea.vmem %s2, 120
      %v3027 = vld [vmem:[%s3026] sm:$0xff]
      %v3028 = vld [vmem:[%s3026 + $0x8] sm:$0xff]
      %v3029 = vld [vmem:[%s3026 + $0x10] sm:$0xff]
      %3030 = vrot.lane.b32.xlu0 %v278, 123
      %v3031 = vpop.permute.xlu0 %3030
      %v3034 = vsel %vm290, %v3027, 0
      %v3037 = vsel %vm290, %v3028, 0
      %v3040 = vsel %vm290, %v3029, 0
      %3042 = vmatprep.subr.mxu0 0.0
      %v3043 = vand.u32 %v3031, 4294901760
      %3044 = vmatpush1.msra.mxu0 %v3043
      %3045 = vmatprep.subr.mxu0 0.0
      %3046 = vmatpush1.msra.mxu0 0.0
      %3047 = vmatprep.subr.mxu0 0.0
      %3048 = vmatpush1.msra.mxu0 0.0
      %3049 = vmatprep.subr.mxu0 0.0
      %3050 = vmatpush1.msra.mxu0 0.0
      %3051 = vmatprep.subr.mxu0 0.0
      %3052 = vmatpush1.msra.mxu0 0.0
      %3053 = vmatprep.subr.mxu0 0.0
      %3054 = vmatpush1.msra.mxu0 0.0
      %3055 = vmatprep.subr.mxu0 0.0
      %3056 = vmatpush1.msra.mxu0 0.0
      %3057 = vmatprep.subr.mxu0 0.0
      %3058 = vmatpush1.msra.mxu0 0.0
      %3059 = vmatprep.subr.mxu0 0.0
      %3060 = vmatpush1.msra.mxu0 0.0
      %3061 = vmatprep.subr.mxu0 0.0
      %3062 = vmatpush1.msra.mxu0 0.0
      %3063 = vmatprep.subr.mxu0 0.0
      %3064 = vmatpush1.msra.mxu0 0.0
      %3065 = vmatprep.subr.mxu0 0.0
      %3066 = vmatpush1.msra.mxu0 0.0
      %3067 = vmatprep.subr.mxu0 0.0
      %3068 = vmatpush1.msra.mxu0 0.0
      %3069 = vmatprep.subr.mxu0 0.0
      %3070 = vmatpush1.msra.mxu0 0.0
      %3071 = vmatprep.subr.mxu0 0.0
      %3072 = vmatpush1.msra.mxu0 0.0
      %3073 = vmatprep.subr.mxu0 0.0
      %3074 = vmatpush1.msra.mxu0 0.0
      %3075 = vmatprep.subr.mxu0 0.0
      %3076 = vmatpush1.msra.mxu0 0.0
      %3077 = vmatprep.subr.mxu0 0.0
      %3078 = vmatpush1.msra.mxu0 0.0
      %3079 = vmatprep.subr.mxu0 0.0
      %3080 = vmatpush1.msra.mxu0 0.0
      %3081 = vmatprep.subr.mxu0 0.0
      %3082 = vmatpush1.msra.mxu0 0.0
      %3083 = vmatprep.subr.mxu0 0.0
      %3084 = vmatpush1.msra.mxu0 0.0
      %3085 = vmatprep.subr.mxu0 0.0
      %3086 = vmatpush1.msra.mxu0 0.0
      %3087 = vmatprep.subr.mxu0 0.0
      %3088 = vmatpush1.msra.mxu0 0.0
      %3089 = vmatprep.subr.mxu0 0.0
      %3090 = vmatpush1.msra.mxu0 0.0
      %3091 = vmatprep.subr.mxu0 0.0
      %3092 = vmatpush1.msra.mxu0 0.0
      %3093 = vmatprep.subr.mxu0 0.0
      %3094 = vmatpush1.msra.mxu0 0.0
      %3095 = vmatprep.subr.mxu0 0.0
      %3096 = vmatpush1.msra.mxu0 0.0
      %3097 = vmatprep.subr.mxu0 0.0
      %3098 = vmatpush1.msra.mxu0 0.0
      %3099 = vmatprep.subr.mxu0 0.0
      %3100 = vmatpush1.msra.mxu0 0.0
      %3101 = vmatprep.subr.mxu0 0.0
      %3102 = vmatpush1.msra.mxu0 0.0
      %3103 = vmatprep.subr.mxu0 0.0
      %3104 = vmatpush1.msra.mxu0 0.0
      %3105 = vmatprep.subr.mxu0 0.0
      %3106 = vmatpush1.msra.mxu0 0.0
      %3107 = vmatprep.mubr.f32.mxu0 0.0
      %v3108 = vand.u32 %v3034, 4294901760
      %v3109 = vsub.f32 %v3034, %v3108
      %v3110 = vand.u32 %v3109, 4294901760
      %v3111 = vsub.f32 %v3109, %v3110
      %v3112 = vand.u32 %v3111, 4294901760
      %3113 = vmatmul.mubr.f32.gmra.mrb[0].mxu0 %v3112
      %v3114 = vpop.f32.mrb[0].mxu0
      %v3115 = vadd.f32 0.0, %v3114
      %v3116 = vpop.f32.mrb[0].mxu0
      %3117 = vmatprep.mubr.f32.mxu0 0.0
      %v3118 = vand.u32 %v3037, 4294901760
      %v3119 = vsub.f32 %v3037, %v3118
      %v3120 = vand.u32 %v3119, 4294901760
      %v3121 = vsub.f32 %v3119, %v3120
      %v3122 = vand.u32 %v3121, 4294901760
      %3123 = vmatmul.mubr.f32.gmra.mrb[0].mxu0 %v3122
      %v3124 = vpop.f32.mrb[0].mxu0
      %v3125 = vadd.f32 0.0, %v3124
      %v3126 = vpop.f32.mrb[0].mxu0
      %3127 = vmatprep.mubr.f32.mxu0 0.0
      %v3128 = vand.u32 %v3040, 4294901760
      %v3129 = vsub.f32 %v3040, %v3128
      %v3130 = vand.u32 %v3129, 4294901760
      %v3131 = vsub.f32 %v3129, %v3130
      %v3132 = vand.u32 %v3131, 4294901760
      %3133 = vmatmul.mubr.f32.gmra.mrb[0].mxu0 %v3132
      %v3134 = vpop.f32.mrb[0].mxu0
      %v3135 = vadd.f32 0.0, %v3134
      %v3136 = vpop.f32.mrb[0].mxu0
      %3137 = vdwg.mxu0
      %3138 = vmatprep.subr.mxu0 0.0
      %v3139 = vand.u32 %v3031, 4294901760
      %v3140 = vsub.f32 %v3031, %v3139
      %v3141 = vand.u32 %v3140, 4294901760
      %v3142 = vsub.f32 %v3140, %v3141
      %v3143 = vand.u32 %v3142, 4294901760
      %3144 = vmatpush1.msra.mxu0 %v3143
      %3145 = vmatprep.subr.mxu0 0.0
      %3146 = vmatpush1.msra.mxu0 0.0
      %3147 = vmatprep.subr.mxu0 0.0
      %3148 = vmatpush1.msra.mxu0 0.0
      %3149 = vmatprep.subr.mxu0 0.0
      %3150 = vmatpush1.msra.mxu0 0.0
      %3151 = vmatprep.subr.mxu0 0.0
      %3152 = vmatpush1.msra.mxu0 0.0
      %3153 = vmatprep.subr.mxu0 0.0
      %3154 = vmatpush1.msra.mxu0 0.0
      %3155 = vmatprep.subr.mxu0 0.0
      %3156 = vmatpush1.msra.mxu0 0.0
      %3157 = vmatprep.subr.mxu0 0.0
      %3158 = vmatpush1.msra.mxu0 0.0
      %3159 = vmatprep.subr.mxu0 0.0
      %3160 = vmatpush1.msra.mxu0 0.0
      %3161 = vmatprep.subr.mxu0 0.0
      %3162 = vmatpush1.msra.mxu0 0.0
      %3163 = vmatprep.subr.mxu0 0.0
      %3164 = vmatpush1.msra.mxu0 0.0
      %3165 = vmatprep.subr.mxu0 0.0
      %3166 = vmatpush1.msra.mxu0 0.0
      %3167 = vmatprep.subr.mxu0 0.0
      %3168 = vmatpush1.msra.mxu0 0.0
      %3169 = vmatprep.subr.mxu0 0.0
      %3170 = vmatpush1.msra.mxu0 0.0
      %3171 = vmatprep.subr.mxu0 0.0
      %3172 = vmatpush1.msra.mxu0 0.0
      %3173 = vmatprep.subr.mxu0 0.0
      %3174 = vmatpush1.msra.mxu0 0.0
      %3175 = vmatprep.subr.mxu0 0.0
      %3176 = vmatpush1.msra.mxu0 0.0
      %3177 = vmatprep.subr.mxu0 0.0
      %3178 = vmatpush1.msra.mxu0 0.0
      %3179 = vmatprep.subr.mxu0 0.0
      %3180 = vmatpush1.msra.mxu0 0.0
      %3181 = vmatprep.subr.mxu0 0.0
      %3182 = vmatpush1.msra.mxu0 0.0
      %3183 = vmatprep.subr.mxu0 0.0
      %3184 = vmatpush1.msra.mxu0 0.0
      %3185 = vmatprep.subr.mxu0 0.0
      %3186 = vmatpush1.msra.mxu0 0.0
      %3187 = vmatprep.subr.mxu0 0.0
      %3188 = vmatpush1.msra.mxu0 0.0
      %3189 = vmatprep.subr.mxu0 0.0
      %3190 = vmatpush1.msra.mxu0 0.0
      %3191 = vmatprep.subr.mxu0 0.0
      %3192 = vmatpush1.msra.mxu0 0.0
      %3193 = vmatprep.subr.mxu0 0.0
      %3194 = vmatpush1.msra.mxu0 0.0
      %3195 = vmatprep.subr.mxu0 0.0
      %3196 = vmatpush1.msra.mxu0 0.0
      %3197 = vmatprep.subr.mxu0 0.0
      %3198 = vmatpush1.msra.mxu0 0.0
      %3199 = vmatprep.subr.mxu0 0.0
      %3200 = vmatpush1.msra.mxu0 0.0
      %3201 = vmatprep.subr.mxu0 0.0
      %3202 = vmatpush1.msra.mxu0 0.0
      %3203 = vmatprep.subr.mxu0 0.0
      %3204 = vmatpush1.msra.mxu0 0.0
      %3205 = vmatprep.subr.mxu0 0.0
      %3206 = vmatpush1.msra.mxu0 0.0
      %3207 = vmatprep.mubr.f32.mxu0 0.0
      %v3208 = vand.u32 %v3034, 4294901760
      %3209 = vmatmul.mubr.f32.gmra.mrb[0].mxu0 %v3208
      %v3210 = vpop.f32.mrb[0].mxu0
      %v3211 = vadd.f32 %v3115, %v3210
      %v3212 = vpop.f32.mrb[0].mxu0
      %3213 = vmatprep.mubr.f32.mxu0 0.0
      %v3214 = vand.u32 %v3037, 4294901760
      %3215 = vmatmul.mubr.f32.gmra.mrb[0].mxu0 %v3214
      %v3216 = vpop.f32.mrb[0].mxu0
      %v3217 = vadd.f32 %v3125, %v3216
      %v3218 = vpop.f32.mrb[0].mxu0
      %3219 = vmatprep.mubr.f32.mxu0 0.0
      %v3220 = vand.u32 %v3040, 4294901760
      %3221 = vmatmul.mubr.f32.gmra.mrb[0].mxu0 %v3220
      %v3222 = vpop.f32.mrb[0].mxu0
      %v3223 = vadd.f32 %v3135, %v3222
      %v3224 = vpop.f32.mrb[0].mxu0
      %3225 = vdwg.mxu0
      %3226 = vmatprep.subr.mxu0 0.0
      %v3227 = vand.u32 %v3031, 4294901760
      %v3228 = vsub.f32 %v3031, %v3227
      %3229 = vmatpush1.msra.mxu0 %v3228
      %3230 = vmatprep.subr.mxu0 0.0
      %3231 = vmatpush1.msra.mxu0 0.0
      %3232 = vmatprep.subr.mxu0 0.0
      %3233 = vmatpush1.msra.mxu0 0.0
      %3234 = vmatprep.subr.mxu0 0.0
      %3235 = vmatpush1.msra.mxu0 0.0
      %3236 = vmatprep.subr.mxu0 0.0
      %3237 = vmatpush1.msra.mxu0 0.0
      %3238 = vmatprep.subr.mxu0 0.0
      %3239 = vmatpush1.msra.mxu0 0.0
      %3240 = vmatprep.subr.mxu0 0.0
      %3241 = vmatpush1.msra.mxu0 0.0
      %3242 = vmatprep.subr.mxu0 0.0
      %3243 = vmatpush1.msra.mxu0 0.0
      %3244 = vmatprep.subr.mxu0 0.0
      %3245 = vmatpush1.msra.mxu0 0.0
      %3246 = vmatprep.subr.mxu0 0.0
      %3247 = vmatpush1.msra.mxu0 0.0
      %3248 = vmatprep.subr.mxu0 0.0
      %3249 = vmatpush1.msra.mxu0 0.0
      %3250 = vmatprep.subr.mxu0 0.0
      %3251 = vmatpush1.msra.mxu0 0.0
      %3252 = vmatprep.subr.mxu0 0.0
      %3253 = vmatpush1.msra.mxu0 0.0
      %3254 = vmatprep.subr.mxu0 0.0
      %3255 = vmatpush1.msra.mxu0 0.0
      %3256 = vmatprep.subr.mxu0 0.0
      %3257 = vmatpush1.msra.mxu0 0.0
      %3258 = vmatprep.subr.mxu0 0.0
      %3259 = vmatpush1.msra.mxu0 0.0
      %3260 = vmatprep.subr.mxu0 0.0
      %3261 = vmatpush1.msra.mxu0 0.0
      %3262 = vmatprep.subr.mxu0 0.0
      %3263 = vmatpush1.msra.mxu0 0.0
      %3264 = vmatprep.subr.mxu0 0.0
      %3265 = vmatpush1.msra.mxu0 0.0
      %3266 = vmatprep.subr.mxu0 0.0
      %3267 = vmatpush1.msra.mxu0 0.0
      %3268 = vmatprep.subr.mxu0 0.0
      %3269 = vmatpush1.msra.mxu0 0.0
      %3270 = vmatprep.subr.mxu0 0.0
      %3271 = vmatpush1.msra.mxu0 0.0
      %3272 = vmatprep.subr.mxu0 0.0
      %3273 = vmatpush1.msra.mxu0 0.0
      %3274 = vmatprep.subr.mxu0 0.0
      %3275 = vmatpush1.msra.mxu0 0.0
      %3276 = vmatprep.subr.mxu0 0.0
      %3277 = vmatpush1.msra.mxu0 0.0
      %3278 = vmatprep.subr.mxu0 0.0
      %3279 = vmatpush1.msra.mxu0 0.0
      %3280 = vmatprep.subr.mxu0 0.0
      %3281 = vmatpush1.msra.mxu0 0.0
      %3282 = vmatprep.subr.mxu0 0.0
      %3283 = vmatpush1.msra.mxu0 0.0
      %3284 = vmatprep.subr.mxu0 0.0
      %3285 = vmatpush1.msra.mxu0 0.0
      %3286 = vmatprep.subr.mxu0 0.0
      %3287 = vmatpush1.msra.mxu0 0.0
      %3288 = vmatprep.subr.mxu0 0.0
      %3289 = vmatpush1.msra.mxu0 0.0
      %3290 = vmatprep.subr.mxu0 0.0
      %3291 = vmatpush1.msra.mxu0 0.0
      %3292 = vmatprep.mubr.f32.mxu0 0.0
      %v3293 = vand.u32 %v3034, 4294901760
      %v3294 = vsub.f32 %v3034, %v3293
      %3295 = vmatmul.mubr.f32.gmra.mrb[0].mxu0 %v3294
      %v3296 = vpop.f32.mrb[0].mxu0
      %v3297 = vadd.f32 %v3211, %v3296
      %v3298 = vpop.f32.mrb[0].mxu0
      %3299 = vmatprep.mubr.f32.mxu0 0.0
      %v3300 = vand.u32 %v3037, 4294901760
      %v3301 = vsub.f32 %v3037, %v3300
      %3302 = vmatmul.mubr.f32.gmra.mrb[0].mxu0 %v3301
      %v3303 = vpop.f32.mrb[0].mxu0
      %v3304 = vadd.f32 %v3217, %v3303
      %v3305 = vpop.f32.mrb[0].mxu0
      %3306 = vmatprep.mubr.f32.mxu0 0.0
      %v3307 = vand.u32 %v3040, 4294901760
      %v3308 = vsub.f32 %v3040, %v3307
      %3309 = vmatmul.mubr.f32.gmra.mrb[0].mxu0 %v3308
      %v3310 = vpop.f32.mrb[0].mxu0
      %v3311 = vadd.f32 %v3223, %v3310
      %v3312 = vpop.f32.mrb[0].mxu0
      %3313 = vdwg.mxu0
      %3314 = vmatprep.subr.mxu0 0.0
      %v3315 = vand.u32 %v3031, 4294901760
      %3316 = vmatpush1.msra.mxu0 %v3315
      %3317 = vmatprep.subr.mxu0 0.0
      %3318 = vmatpush1.msra.mxu0 0.0
      %3319 = vmatprep.subr.mxu0 0.0
      %3320 = vmatpush1.msra.mxu0 0.0
      %3321 = vmatprep.subr.mxu0 0.0
      %3322 = vmatpush1.msra.mxu0 0.0
      %3323 = vmatprep.subr.mxu0 0.0
      %3324 = vmatpush1.msra.mxu0 0.0
      %3325 = vmatprep.subr.mxu0 0.0
      %3326 = vmatpush1.msra.mxu0 0.0
      %3327 = vmatprep.subr.mxu0 0.0
      %3328 = vmatpush1.msra.mxu0 0.0
      %3329 = vmatprep.subr.mxu0 0.0
      %3330 = vmatpush1.msra.mxu0 0.0
      %3331 = vmatprep.subr.mxu0 0.0
      %3332 = vmatpush1.msra.mxu0 0.0
      %3333 = vmatprep.subr.mxu0 0.0
      %3334 = vmatpush1.msra.mxu0 0.0
      %3335 = vmatprep.subr.mxu0 0.0
      %3336 = vmatpush1.msra.mxu0 0.0
      %3337 = vmatprep.subr.mxu0 0.0
      %3338 = vmatpush1.msra.mxu0 0.0
      %3339 = vmatprep.subr.mxu0 0.0
      %3340 = vmatpush1.msra.mxu0 0.0
      %3341 = vmatprep.subr.mxu0 0.0
      %3342 = vmatpush1.msra.mxu0 0.0
      %3343 = vmatprep.subr.mxu0 0.0
      %3344 = vmatpush1.msra.mxu0 0.0
      %3345 = vmatprep.subr.mxu0 0.0
      %3346 = vmatpush1.msra.mxu0 0.0
      %3347 = vmatprep.subr.mxu0 0.0
      %3348 = vmatpush1.msra.mxu0 0.0
      %3349 = vmatprep.subr.mxu0 0.0
      %3350 = vmatpush1.msra.mxu0 0.0
      %3351 = vmatprep.subr.mxu0 0.0
      %3352 = vmatpush1.msra.mxu0 0.0
      %3353 = vmatprep.subr.mxu0 0.0
      %3354 = vmatpush1.msra.mxu0 0.0
      %3355 = vmatprep.subr.mxu0 0.0
      %3356 = vmatpush1.msra.mxu0 0.0
      %3357 = vmatprep.subr.mxu0 0.0
      %3358 = vmatpush1.msra.mxu0 0.0
      %3359 = vmatprep.subr.mxu0 0.0
      %3360 = vmatpush1.msra.mxu0 0.0
      %3361 = vmatprep.subr.mxu0 0.0
      %3362 = vmatpush1.msra.mxu0 0.0
      %3363 = vmatprep.subr.mxu0 0.0
      %3364 = vmatpush1.msra.mxu0 0.0
      %3365 = vmatprep.subr.mxu0 0.0
      %3366 = vmatpush1.msra.mxu0 0.0
      %3367 = vmatprep.subr.mxu0 0.0
      %3368 = vmatpush1.msra.mxu0 0.0
      %3369 = vmatprep.subr.mxu0 0.0
      %3370 = vmatpush1.msra.mxu0 0.0
      %3371 = vmatprep.subr.mxu0 0.0
      %3372 = vmatpush1.msra.mxu0 0.0
      %3373 = vmatprep.subr.mxu0 0.0
      %3374 = vmatpush1.msra.mxu0 0.0
      %3375 = vmatprep.subr.mxu0 0.0
      %3376 = vmatpush1.msra.mxu0 0.0
      %3377 = vmatprep.subr.mxu0 0.0
      %3378 = vmatpush1.msra.mxu0 0.0
      %3379 = vmatprep.mubr.f32.mxu0 0.0
      %v3380 = vand.u32 %v3034, 4294901760
      %v3381 = vsub.f32 %v3034, %v3380
      %v3382 = vand.u32 %v3381, 4294901760
      %3383 = vmatmul.mubr.f32.gmra.mrb[0].mxu0 %v3382
      %v3384 = vpop.f32.mrb[0].mxu0
      %v3385 = vadd.f32 %v3297, %v3384
      %v3386 = vpop.f32.mrb[0].mxu0
      %3387 = vmatprep.mubr.f32.mxu0 0.0
      %v3388 = vand.u32 %v3037, 4294901760
      %v3389 = vsub.f32 %v3037, %v3388
      %v3390 = vand.u32 %v3389, 4294901760
      %3391 = vmatmul.mubr.f32.gmra.mrb[0].mxu0 %v3390
      %v3392 = vpop.f32.mrb[0].mxu0
      %v3393 = vadd.f32 %v3304, %v3392
      %v3394 = vpop.f32.mrb[0].mxu0
      %3395 = vmatprep.mubr.f32.mxu0 0.0
      %v3396 = vand.u32 %v3040, 4294901760
      %v3397 = vsub.f32 %v3040, %v3396
      %v3398 = vand.u32 %v3397, 4294901760
      %3399 = vmatmul.mubr.f32.gmra.mrb[0].mxu0 %v3398
      %v3400 = vpop.f32.mrb[0].mxu0
      %v3401 = vadd.f32 %v3311, %v3400
      %v3402 = vpop.f32.mrb[0].mxu0
      %3403 = vdwg.mxu0
      %3404 = vmatprep.subr.mxu0 0.0
      %v3405 = vand.u32 %v3031, 4294901760
      %v3406 = vsub.f32 %v3031, %v3405
      %v3407 = vand.u32 %v3406, 4294901760
      %3408 = vmatpush1.msra.mxu0 %v3407
      %3409 = vmatprep.subr.mxu0 0.0
      %3410 = vmatpush1.msra.mxu0 0.0
      %3411 = vmatprep.subr.mxu0 0.0
      %3412 = vmatpush1.msra.mxu0 0.0
      %3413 = vmatprep.subr.mxu0 0.0
      %3414 = vmatpush1.msra.mxu0 0.0
      %3415 = vmatprep.subr.mxu0 0.0
      %3416 = vmatpush1.msra.mxu0 0.0
      %3417 = vmatprep.subr.mxu0 0.0
      %3418 = vmatpush1.msra.mxu0 0.0
      %3419 = vmatprep.subr.mxu0 0.0
      %3420 = vmatpush1.msra.mxu0 0.0
      %3421 = vmatprep.subr.mxu0 0.0
      %3422 = vmatpush1.msra.mxu0 0.0
      %3423 = vmatprep.subr.mxu0 0.0
      %3424 = vmatpush1.msra.mxu0 0.0
      %3425 = vmatprep.subr.mxu0 0.0
      %3426 = vmatpush1.msra.mxu0 0.0
      %3427 = vmatprep.subr.mxu0 0.0
      %3428 = vmatpush1.msra.mxu0 0.0
      %3429 = vmatprep.subr.mxu0 0.0
      %3430 = vmatpush1.msra.mxu0 0.0
      %3431 = vmatprep.subr.mxu0 0.0
      %3432 = vmatpush1.msra.mxu0 0.0
      %3433 = vmatprep.subr.mxu0 0.0
      %3434 = vmatpush1.msra.mxu0 0.0
      %3435 = vmatprep.subr.mxu0 0.0
      %3436 = vmatpush1.msra.mxu0 0.0
      %3437 = vmatprep.subr.mxu0 0.0
      %3438 = vmatpush1.msra.mxu0 0.0
      %3439 = vmatprep.subr.mxu0 0.0
      %3440 = vmatpush1.msra.mxu0 0.0
      %3441 = vmatprep.subr.mxu0 0.0
      %3442 = vmatpush1.msra.mxu0 0.0
      %3443 = vmatprep.subr.mxu0 0.0
      %3444 = vmatpush1.msra.mxu0 0.0
      %3445 = vmatprep.subr.mxu0 0.0
      %3446 = vmatpush1.msra.mxu0 0.0
      %3447 = vmatprep.subr.mxu0 0.0
      %3448 = vmatpush1.msra.mxu0 0.0
      %3449 = vmatprep.subr.mxu0 0.0
      %3450 = vmatpush1.msra.mxu0 0.0
      %3451 = vmatprep.subr.mxu0 0.0
      %3452 = vmatpush1.msra.mxu0 0.0
      %3453 = vmatprep.subr.mxu0 0.0
      %3454 = vmatpush1.msra.mxu0 0.0
      %3455 = vmatprep.subr.mxu0 0.0
      %3456 = vmatpush1.msra.mxu0 0.0
      %3457 = vmatprep.subr.mxu0 0.0
      %3458 = vmatpush1.msra.mxu0 0.0
      %3459 = vmatprep.subr.mxu0 0.0
      %3460 = vmatpush1.msra.mxu0 0.0
      %3461 = vmatprep.subr.mxu0 0.0
      %3462 = vmatpush1.msra.mxu0 0.0
      %3463 = vmatprep.subr.mxu0 0.0
      %3464 = vmatpush1.msra.mxu0 0.0
      %3465 = vmatprep.subr.mxu0 0.0
      %3466 = vmatpush1.msra.mxu0 0.0
      %3467 = vmatprep.subr.mxu0 0.0
      %3468 = vmatpush1.msra.mxu0 0.0
      %3469 = vmatprep.subr.mxu0 0.0
      %3470 = vmatpush1.msra.mxu0 0.0
      %3471 = vmatprep.mubr.f32.mxu0 0.0
      %v3472 = vand.u32 %v3034, 4294901760
      %3473 = vmatmul.mubr.f32.gmra.mrb[0].mxu0 %v3472
      %v3474 = vpop.f32.mrb[0].mxu0
      %v3475 = vadd.f32 %v3385, %v3474
      %v3476 = vpop.f32.mrb[0].mxu0
      %3477 = vmatprep.mubr.f32.mxu0 0.0
      %v3478 = vand.u32 %v3037, 4294901760
      %3479 = vmatmul.mubr.f32.gmra.mrb[0].mxu0 %v3478
      %v3480 = vpop.f32.mrb[0].mxu0
      %v3481 = vadd.f32 %v3393, %v3480
      %v3482 = vpop.f32.mrb[0].mxu0
      %3483 = vmatprep.mubr.f32.mxu0 0.0
      %v3484 = vand.u32 %v3040, 4294901760
      %3485 = vmatmul.mubr.f32.gmra.mrb[0].mxu0 %v3484
      %v3486 = vpop.f32.mrb[0].mxu0
      %v3487 = vadd.f32 %v3401, %v3486
      %v3488 = vpop.f32.mrb[0].mxu0
      %3489 = vdwg.mxu0
      %3490 = vmatprep.subr.mxu0 0.0
      %v3491 = vand.u32 %v3031, 4294901760
      %3492 = vmatpush1.msra.mxu0 %v3491
      %3493 = vmatprep.subr.mxu0 0.0
      %3494 = vmatpush1.msra.mxu0 0.0
      %3495 = vmatprep.subr.mxu0 0.0
      %3496 = vmatpush1.msra.mxu0 0.0
      %3497 = vmatprep.subr.mxu0 0.0
      %3498 = vmatpush1.msra.mxu0 0.0
      %3499 = vmatprep.subr.mxu0 0.0
      %3500 = vmatpush1.msra.mxu0 0.0
      %3501 = vmatprep.subr.mxu0 0.0
      %3502 = vmatpush1.msra.mxu0 0.0
      %3503 = vmatprep.subr.mxu0 0.0
      %3504 = vmatpush1.msra.mxu0 0.0
      %3505 = vmatprep.subr.mxu0 0.0
      %3506 = vmatpush1.msra.mxu0 0.0
      %3507 = vmatprep.subr.mxu0 0.0
      %3508 = vmatpush1.msra.mxu0 0.0
      %3509 = vmatprep.subr.mxu0 0.0
      %3510 = vmatpush1.msra.mxu0 0.0
      %3511 = vmatprep.subr.mxu0 0.0
      %3512 = vmatpush1.msra.mxu0 0.0
      %3513 = vmatprep.subr.mxu0 0.0
      %3514 = vmatpush1.msra.mxu0 0.0
      %3515 = vmatprep.subr.mxu0 0.0
      %3516 = vmatpush1.msra.mxu0 0.0
      %3517 = vmatprep.subr.mxu0 0.0
      %3518 = vmatpush1.msra.mxu0 0.0
      %3519 = vmatprep.subr.mxu0 0.0
      %3520 = vmatpush1.msra.mxu0 0.0
      %3521 = vmatprep.subr.mxu0 0.0
      %3522 = vmatpush1.msra.mxu0 0.0
      %3523 = vmatprep.subr.mxu0 0.0
      %3524 = vmatpush1.msra.mxu0 0.0
      %3525 = vmatprep.subr.mxu0 0.0
      %3526 = vmatpush1.msra.mxu0 0.0
      %3527 = vmatprep.subr.mxu0 0.0
      %3528 = vmatpush1.msra.mxu0 0.0
      %3529 = vmatprep.subr.mxu0 0.0
      %3530 = vmatpush1.msra.mxu0 0.0
      %3531 = vmatprep.subr.mxu0 0.0
      %3532 = vmatpush1.msra.mxu0 0.0
      %3533 = vmatprep.subr.mxu0 0.0
      %3534 = vmatpush1.msra.mxu0 0.0
      %3535 = vmatprep.subr.mxu0 0.0
      %3536 = vmatpush1.msra.mxu0 0.0
      %3537 = vmatprep.subr.mxu0 0.0
      %3538 = vmatpush1.msra.mxu0 0.0
      %3539 = vmatprep.subr.mxu0 0.0
      %3540 = vmatpush1.msra.mxu0 0.0
      %3541 = vmatprep.subr.mxu0 0.0
      %3542 = vmatpush1.msra.mxu0 0.0
      %3543 = vmatprep.subr.mxu0 0.0
      %3544 = vmatpush1.msra.mxu0 0.0
      %3545 = vmatprep.subr.mxu0 0.0
      %3546 = vmatpush1.msra.mxu0 0.0
      %3547 = vmatprep.subr.mxu0 0.0
      %3548 = vmatpush1.msra.mxu0 0.0
      %3549 = vmatprep.subr.mxu0 0.0
      %3550 = vmatpush1.msra.mxu0 0.0
      %3551 = vmatprep.subr.mxu0 0.0
      %3552 = vmatpush1.msra.mxu0 0.0
      %3553 = vmatprep.subr.mxu0 0.0
      %3554 = vmatpush1.msra.mxu0 0.0
      %3555 = vmatprep.mubr.f32.mxu0 0.0
      %v3556 = vand.u32 %v3034, 4294901760
      %3557 = vmatmul.mubr.f32.gmra.mrb[0].mxu0 %v3556
      %v3558 = vpop.f32.mrb[0].mxu0
      %v3559 = vadd.f32 %v3475, %v3558
      %v3560 = vpop.f32.mrb[0].mxu0
      %3561 = vmatprep.mubr.f32.mxu0 0.0
      %v3562 = vand.u32 %v3037, 4294901760
      %3563 = vmatmul.mubr.f32.gmra.mrb[0].mxu0 %v3562
      %v3564 = vpop.f32.mrb[0].mxu0
      %v3565 = vadd.f32 %v3481, %v3564
      %v3566 = vpop.f32.mrb[0].mxu0
      %3567 = vmatprep.mubr.f32.mxu0 0.0
      %v3568 = vand.u32 %v3040, 4294901760
      %3569 = vmatmul.mubr.f32.gmra.mrb[0].mxu0 %v3568
      %v3570 = vpop.f32.mrb[0].mxu0
      %v3571 = vadd.f32 %v3487, %v3570
      %v3572 = vpop.f32.mrb[0].mxu0
      %3573 = vdwg.mxu0
      %v3574 = vadd.f32 %v3023, %v3559
      %v3575 = vadd.f32 %v3024, %v3565
      %v3576 = vadd.f32 %v3025, %v3571
      %s3577 = scalar_lea.vmem %s2, 144
      %v3578 = vld [vmem:[%s3577] sm:$0xff]
      %v3579 = vld [vmem:[%s3577 + $0x8] sm:$0xff]
      %v3580 = vld [vmem:[%s3577 + $0x10] sm:$0xff]
      %3581 = vrot.lane.b32.xlu0 %v278, 122
      %v3582 = vpop.permute.xlu0 %3581
      %v3585 = vsel %vm290, %v3578, 0
      %v3588 = vsel %vm290, %v3579, 0
      %v3591 = vsel %vm290, %v3580, 0
      %3593 = vmatprep.subr.mxu0 0.0
      %v3594 = vand.u32 %v3582, 4294901760
      %3595 = vmatpush1.msra.mxu0 %v3594
      %3596 = vmatprep.subr.mxu0 0.0
      %3597 = vmatpush1.msra.mxu0 0.0
      %3598 = vmatprep.subr.mxu0 0.0
      %3599 = vmatpush1.msra.mxu0 0.0
      %3600 = vmatprep.subr.mxu0 0.0
      %3601 = vmatpush1.msra.mxu0 0.0
      %3602 = vmatprep.subr.mxu0 0.0
      %3603 = vmatpush1.msra.mxu0 0.0
      %3604 = vmatprep.subr.mxu0 0.0
      %3605 = vmatpush1.msra.mxu0 0.0
      %3606 = vmatprep.subr.mxu0 0.0
      %3607 = vmatpush1.msra.mxu0 0.0
      %3608 = vmatprep.subr.mxu0 0.0
      %3609 = vmatpush1.msra.mxu0 0.0
      %3610 = vmatprep.subr.mxu0 0.0
      %3611 = vmatpush1.msra.mxu0 0.0
      %3612 = vmatprep.subr.mxu0 0.0
      %3613 = vmatpush1.msra.mxu0 0.0
      %3614 = vmatprep.subr.mxu0 0.0
      %3615 = vmatpush1.msra.mxu0 0.0
      %3616 = vmatprep.subr.mxu0 0.0
      %3617 = vmatpush1.msra.mxu0 0.0
      %3618 = vmatprep.subr.mxu0 0.0
      %3619 = vmatpush1.msra.mxu0 0.0
      %3620 = vmatprep.subr.mxu0 0.0
      %3621 = vmatpush1.msra.mxu0 0.0
      %3622 = vmatprep.subr.mxu0 0.0
      %3623 = vmatpush1.msra.mxu0 0.0
      %3624 = vmatprep.subr.mxu0 0.0
      %3625 = vmatpush1.msra.mxu0 0.0
      %3626 = vmatprep.subr.mxu0 0.0
      %3627 = vmatpush1.msra.mxu0 0.0
      %3628 = vmatprep.subr.mxu0 0.0
      %3629 = vmatpush1.msra.mxu0 0.0
      %3630 = vmatprep.subr.mxu0 0.0
      %3631 = vmatpush1.msra.mxu0 0.0
      %3632 = vmatprep.subr.mxu0 0.0
      %3633 = vmatpush1.msra.mxu0 0.0
      %3634 = vmatprep.subr.mxu0 0.0
      %3635 = vmatpush1.msra.mxu0 0.0
      %3636 = vmatprep.subr.mxu0 0.0
      %3637 = vmatpush1.msra.mxu0 0.0
      %3638 = vmatprep.subr.mxu0 0.0
      %3639 = vmatpush1.msra.mxu0 0.0
      %3640 = vmatprep.subr.mxu0 0.0
      %3641 = vmatpush1.msra.mxu0 0.0
      %3642 = vmatprep.subr.mxu0 0.0
      %3643 = vmatpush1.msra.mxu0 0.0
      %3644 = vmatprep.subr.mxu0 0.0
      %3645 = vmatpush1.msra.mxu0 0.0
      %3646 = vmatprep.subr.mxu0 0.0
      %3647 = vmatpush1.msra.mxu0 0.0
      %3648 = vmatprep.subr.mxu0 0.0
      %3649 = vmatpush1.msra.mxu0 0.0
      %3650 = vmatprep.subr.mxu0 0.0
      %3651 = vmatpush1.msra.mxu0 0.0
      %3652 = vmatprep.subr.mxu0 0.0
      %3653 = vmatpush1.msra.mxu0 0.0
      %3654 = vmatprep.subr.mxu0 0.0
      %3655 = vmatpush1.msra.mxu0 0.0
      %3656 = vmatprep.subr.mxu0 0.0
      %3657 = vmatpush1.msra.mxu0 0.0
      %3658 = vmatprep.mubr.f32.mxu0 0.0
      %v3659 = vand.u32 %v3585, 4294901760
      %v3660 = vsub.f32 %v3585, %v3659
      %v3661 = vand.u32 %v3660, 4294901760
      %v3662 = vsub.f32 %v3660, %v3661
      %v3663 = vand.u32 %v3662, 4294901760
      %3664 = vmatmul.mubr.f32.gmra.mrb[0].mxu0 %v3663
      %v3665 = vpop.f32.mrb[0].mxu0
      %v3666 = vadd.f32 0.0, %v3665
      %v3667 = vpop.f32.mrb[0].mxu0
      %3668 = vmatprep.mubr.f32.mxu0 0.0
      %v3669 = vand.u32 %v3588, 4294901760
      %v3670 = vsub.f32 %v3588, %v3669
      %v3671 = vand.u32 %v3670, 4294901760
      %v3672 = vsub.f32 %v3670, %v3671
      %v3673 = vand.u32 %v3672, 4294901760
      %3674 = vmatmul.mubr.f32.gmra.mrb[0].mxu0 %v3673
      %v3675 = vpop.f32.mrb[0].mxu0
      %v3676 = vadd.f32 0.0, %v3675
      %v3677 = vpop.f32.mrb[0].mxu0
      %3678 = vmatprep.mubr.f32.mxu0 0.0
      %v3679 = vand.u32 %v3591, 4294901760
      %v3680 = vsub.f32 %v3591, %v3679
      %v3681 = vand.u32 %v3680, 4294901760
      %v3682 = vsub.f32 %v3680, %v3681
      %v3683 = vand.u32 %v3682, 4294901760
      %3684 = vmatmul.mubr.f32.gmra.mrb[0].mxu0 %v3683
      %v3685 = vpop.f32.mrb[0].mxu0
      %v3686 = vadd.f32 0.0, %v3685
      %v3687 = vpop.f32.mrb[0].mxu0
      %3688 = vdwg.mxu0
      %3689 = vmatprep.subr.mxu0 0.0
      %v3690 = vand.u32 %v3582, 4294901760
      %v3691 = vsub.f32 %v3582, %v3690
      %v3692 = vand.u32 %v3691, 4294901760
      %v3693 = vsub.f32 %v3691, %v3692
      %v3694 = vand.u32 %v3693, 4294901760
      %3695 = vmatpush1.msra.mxu0 %v3694
      %3696 = vmatprep.subr.mxu0 0.0
      %3697 = vmatpush1.msra.mxu0 0.0
      %3698 = vmatprep.subr.mxu0 0.0
      %3699 = vmatpush1.msra.mxu0 0.0
      %3700 = vmatprep.subr.mxu0 0.0
      %3701 = vmatpush1.msra.mxu0 0.0
      %3702 = vmatprep.subr.mxu0 0.0
      %3703 = vmatpush1.msra.mxu0 0.0
      %3704 = vmatprep.subr.mxu0 0.0
      %3705 = vmatpush1.msra.mxu0 0.0
      %3706 = vmatprep.subr.mxu0 0.0
      %3707 = vmatpush1.msra.mxu0 0.0
      %3708 = vmatprep.subr.mxu0 0.0
      %3709 = vmatpush1.msra.mxu0 0.0
      %3710 = vmatprep.subr.mxu0 0.0
      %3711 = vmatpush1.msra.mxu0 0.0
      %3712 = vmatprep.subr.mxu0 0.0
      %3713 = vmatpush1.msra.mxu0 0.0
      %3714 = vmatprep.subr.mxu0 0.0
      %3715 = vmatpush1.msra.mxu0 0.0
      %3716 = vmatprep.subr.mxu0 0.0
      %3717 = vmatpush1.msra.mxu0 0.0
      %3718 = vmatprep.subr.mxu0 0.0
      %3719 = vmatpush1.msra.mxu0 0.0
      %3720 = vmatprep.subr.mxu0 0.0
      %3721 = vmatpush1.msra.mxu0 0.0
      %3722 = vmatprep.subr.mxu0 0.0
      %3723 = vmatpush1.msra.mxu0 0.0
      %3724 = vmatprep.subr.mxu0 0.0
      %3725 = vmatpush1.msra.mxu0 0.0
      %3726 = vmatprep.subr.mxu0 0.0
      %3727 = vmatpush1.msra.mxu0 0.0
      %3728 = vmatprep.subr.mxu0 0.0
      %3729 = vmatpush1.msra.mxu0 0.0
      %3730 = vmatprep.subr.mxu0 0.0
      %3731 = vmatpush1.msra.mxu0 0.0
      %3732 = vmatprep.subr.mxu0 0.0
      %3733 = vmatpush1.msra.mxu0 0.0
      %3734 = vmatprep.subr.mxu0 0.0
      %3735 = vmatpush1.msra.mxu0 0.0
      %3736 = vmatprep.subr.mxu0 0.0
      %3737 = vmatpush1.msra.mxu0 0.0
      %3738 = vmatprep.subr.mxu0 0.0
      %3739 = vmatpush1.msra.mxu0 0.0
      %3740 = vmatprep.subr.mxu0 0.0
      %3741 = vmatpush1.msra.mxu0 0.0
      %3742 = vmatprep.subr.mxu0 0.0
      %3743 = vmatpush1.msra.mxu0 0.0
      %3744 = vmatprep.subr.mxu0 0.0
      %3745 = vmatpush1.msra.mxu0 0.0
      %3746 = vmatprep.subr.mxu0 0.0
      %3747 = vmatpush1.msra.mxu0 0.0
      %3748 = vmatprep.subr.mxu0 0.0
      %3749 = vmatpush1.msra.mxu0 0.0
      %3750 = vmatprep.subr.mxu0 0.0
      %3751 = vmatpush1.msra.mxu0 0.0
      %3752 = vmatprep.subr.mxu0 0.0
      %3753 = vmatpush1.msra.mxu0 0.0
      %3754 = vmatprep.subr.mxu0 0.0
      %3755 = vmatpush1.msra.mxu0 0.0
      %3756 = vmatprep.subr.mxu0 0.0
      %3757 = vmatpush1.msra.mxu0 0.0
      %3758 = vmatprep.mubr.f32.mxu0 0.0
      %v3759 = vand.u32 %v3585, 4294901760
      %3760 = vmatmul.mubr.f32.gmra.mrb[0].mxu0 %v3759
      %v3761 = vpop.f32.mrb[0].mxu0
      %v3762 = vadd.f32 %v3666, %v3761
      %v3763 = vpop.f32.mrb[0].mxu0
      %3764 = vmatprep.mubr.f32.mxu0 0.0
      %v3765 = vand.u32 %v3588, 4294901760
      %3766 = vmatmul.mubr.f32.gmra.mrb[0].mxu0 %v3765
      %v3767 = vpop.f32.mrb[0].mxu0
      %v3768 = vadd.f32 %v3676, %v3767
      %v3769 = vpop.f32.mrb[0].mxu0
      %3770 = vmatprep.mubr.f32.mxu0 0.0
      %v3771 = vand.u32 %v3591, 4294901760
      %3772 = vmatmul.mubr.f32.gmra.mrb[0].mxu0 %v3771
      %v3773 = vpop.f32.mrb[0].mxu0
      %v3774 = vadd.f32 %v3686, %v3773
      %v3775 = vpop.f32.mrb[0].mxu0
      %3776 = vdwg.mxu0
      %3777 = vmatprep.subr.mxu0 0.0
      %v3778 = vand.u32 %v3582, 4294901760
      %v3779 = vsub.f32 %v3582, %v3778
      %3780 = vmatpush1.msra.mxu0 %v3779
      %3781 = vmatprep.subr.mxu0 0.0
      %3782 = vmatpush1.msra.mxu0 0.0
      %3783 = vmatprep.subr.mxu0 0.0
      %3784 = vmatpush1.msra.mxu0 0.0
      %3785 = vmatprep.subr.mxu0 0.0
      %3786 = vmatpush1.msra.mxu0 0.0
      %3787 = vmatprep.subr.mxu0 0.0
      %3788 = vmatpush1.msra.mxu0 0.0
      %3789 = vmatprep.subr.mxu0 0.0
      %3790 = vmatpush1.msra.mxu0 0.0
      %3791 = vmatprep.subr.mxu0 0.0
      %3792 = vmatpush1.msra.mxu0 0.0
      %3793 = vmatprep.subr.mxu0 0.0
      %3794 = vmatpush1.msra.mxu0 0.0
      %3795 = vmatprep.subr.mxu0 0.0
      %3796 = vmatpush1.msra.mxu0 0.0
      %3797 = vmatprep.subr.mxu0 0.0
      %3798 = vmatpush1.msra.mxu0 0.0
      %3799 = vmatprep.subr.mxu0 0.0
      %3800 = vmatpush1.msra.mxu0 0.0
      %3801 = vmatprep.subr.mxu0 0.0
      %3802 = vmatpush1.msra.mxu0 0.0
      %3803 = vmatprep.subr.mxu0 0.0
      %3804 = vmatpush1.msra.mxu0 0.0
      %3805 = vmatprep.subr.mxu0 0.0
      %3806 = vmatpush1.msra.mxu0 0.0
      %3807 = vmatprep.subr.mxu0 0.0
      %3808 = vmatpush1.msra.mxu0 0.0
      %3809 = vmatprep.subr.mxu0 0.0
      %3810 = vmatpush1.msra.mxu0 0.0
      %3811 = vmatprep.subr.mxu0 0.0
      %3812 = vmatpush1.msra.mxu0 0.0
      %3813 = vmatprep.subr.mxu0 0.0
      %3814 = vmatpush1.msra.mxu0 0.0
      %3815 = vmatprep.subr.mxu0 0.0
      %3816 = vmatpush1.msra.mxu0 0.0
      %3817 = vmatprep.subr.mxu0 0.0
      %3818 = vmatpush1.msra.mxu0 0.0
      %3819 = vmatprep.subr.mxu0 0.0
      %3820 = vmatpush1.msra.mxu0 0.0
      %3821 = vmatprep.subr.mxu0 0.0
      %3822 = vmatpush1.msra.mxu0 0.0
      %3823 = vmatprep.subr.mxu0 0.0
      %3824 = vmatpush1.msra.mxu0 0.0
      %3825 = vmatprep.subr.mxu0 0.0
      %3826 = vmatpush1.msra.mxu0 0.0
      %3827 = vmatprep.subr.mxu0 0.0
      %3828 = vmatpush1.msra.mxu0 0.0
      %3829 = vmatprep.subr.mxu0 0.0
      %3830 = vmatpush1.msra.mxu0 0.0
      %3831 = vmatprep.subr.mxu0 0.0
      %3832 = vmatpush1.msra.mxu0 0.0
      %3833 = vmatprep.subr.mxu0 0.0
      %3834 = vmatpush1.msra.mxu0 0.0
      %3835 = vmatprep.subr.mxu0 0.0
      %3836 = vmatpush1.msra.mxu0 0.0
      %3837 = vmatprep.subr.mxu0 0.0
      %3838 = vmatpush1.msra.mxu0 0.0
      %3839 = vmatprep.subr.mxu0 0.0
      %3840 = vmatpush1.msra.mxu0 0.0
      %3841 = vmatprep.subr.mxu0 0.0
      %3842 = vmatpush1.msra.mxu0 0.0
      %3843 = vmatprep.mubr.f32.mxu0 0.0
      %v3844 = vand.u32 %v3585, 4294901760
      %v3845 = vsub.f32 %v3585, %v3844
      %3846 = vmatmul.mubr.f32.gmra.mrb[0].mxu0 %v3845
      %v3847 = vpop.f32.mrb[0].mxu0
      %v3848 = vadd.f32 %v3762, %v3847
      %v3849 = vpop.f32.mrb[0].mxu0
      %3850 = vmatprep.mubr.f32.mxu0 0.0
      %v3851 = vand.u32 %v3588, 4294901760
      %v3852 = vsub.f32 %v3588, %v3851
      %3853 = vmatmul.mubr.f32.gmra.mrb[0].mxu0 %v3852
      %v3854 = vpop.f32.mrb[0].mxu0
      %v3855 = vadd.f32 %v3768, %v3854
      %v3856 = vpop.f32.mrb[0].mxu0
      %3857 = vmatprep.mubr.f32.mxu0 0.0
      %v3858 = vand.u32 %v3591, 4294901760
      %v3859 = vsub.f32 %v3591, %v3858
      %3860 = vmatmul.mubr.f32.gmra.mrb[0].mxu0 %v3859
      %v3861 = vpop.f32.mrb[0].mxu0
      %v3862 = vadd.f32 %v3774, %v3861
      %v3863 = vpop.f32.mrb[0].mxu0
      %3864 = vdwg.mxu0
      %3865 = vmatprep.subr.mxu0 0.0
      %v3866 = vand.u32 %v3582, 4294901760
      %3867 = vmatpush1.msra.mxu0 %v3866
      %3868 = vmatprep.subr.mxu0 0.0
      %3869 = vmatpush1.msra.mxu0 0.0
      %3870 = vmatprep.subr.mxu0 0.0
      %3871 = vmatpush1.msra.mxu0 0.0
      %3872 = vmatprep.subr.mxu0 0.0
      %3873 = vmatpush1.msra.mxu0 0.0
      %3874 = vmatprep.subr.mxu0 0.0
      %3875 = vmatpush1.msra.mxu0 0.0
      %3876 = vmatprep.subr.mxu0 0.0
      %3877 = vmatpush1.msra.mxu0 0.0
      %3878 = vmatprep.subr.mxu0 0.0
      %3879 = vmatpush1.msra.mxu0 0.0
      %3880 = vmatprep.subr.mxu0 0.0
      %3881 = vmatpush1.msra.mxu0 0.0
      %3882 = vmatprep.subr.mxu0 0.0
      %3883 = vmatpush1.msra.mxu0 0.0
      %3884 = vmatprep.subr.mxu0 0.0
      %3885 = vmatpush1.msra.mxu0 0.0
      %3886 = vmatprep.subr.mxu0 0.0
      %3887 = vmatpush1.msra.mxu0 0.0
      %3888 = vmatprep.subr.mxu0 0.0
      %3889 = vmatpush1.msra.mxu0 0.0
      %3890 = vmatprep.subr.mxu0 0.0
      %3891 = vmatpush1.msra.mxu0 0.0
      %3892 = vmatprep.subr.mxu0 0.0
      %3893 = vmatpush1.msra.mxu0 0.0
      %3894 = vmatprep.subr.mxu0 0.0
      %3895 = vmatpush1.msra.mxu0 0.0
      %3896 = vmatprep.subr.mxu0 0.0
      %3897 = vmatpush1.msra.mxu0 0.0
      %3898 = vmatprep.subr.mxu0 0.0
      %3899 = vmatpush1.msra.mxu0 0.0
      %3900 = vmatprep.subr.mxu0 0.0
      %3901 = vmatpush1.msra.mxu0 0.0
      %3902 = vmatprep.subr.mxu0 0.0
      %3903 = vmatpush1.msra.mxu0 0.0
      %3904 = vmatprep.subr.mxu0 0.0
      %3905 = vmatpush1.msra.mxu0 0.0
      %3906 = vmatprep.subr.mxu0 0.0
      %3907 = vmatpush1.msra.mxu0 0.0
      %3908 = vmatprep.subr.mxu0 0.0
      %3909 = vmatpush1.msra.mxu0 0.0
      %3910 = vmatprep.subr.mxu0 0.0
      %3911 = vmatpush1.msra.mxu0 0.0
      %3912 = vmatprep.subr.mxu0 0.0
      %3913 = vmatpush1.msra.mxu0 0.0
      %3914 = vmatprep.subr.mxu0 0.0
      %3915 = vmatpush1.msra.mxu0 0.0
      %3916 = vmatprep.subr.mxu0 0.0
      %3917 = vmatpush1.msra.mxu0 0.0
      %3918 = vmatprep.subr.mxu0 0.0
      %3919 = vmatpush1.msra.mxu0 0.0
      %3920 = vmatprep.subr.mxu0 0.0
      %3921 = vmatpush1.msra.mxu0 0.0
      %3922 = vmatprep.subr.mxu0 0.0
      %3923 = vmatpush1.msra.mxu0 0.0
      %3924 = vmatprep.subr.mxu0 0.0
      %3925 = vmatpush1.msra.mxu0 0.0
      %3926 = vmatprep.subr.mxu0 0.0
      %3927 = vmatpush1.msra.mxu0 0.0
      %3928 = vmatprep.subr.mxu0 0.0
      %3929 = vmatpush1.msra.mxu0 0.0
      %3930 = vmatprep.mubr.f32.mxu0 0.0
      %v3931 = vand.u32 %v3585, 4294901760
      %v3932 = vsub.f32 %v3585, %v3931
      %v3933 = vand.u32 %v3932, 4294901760
      %3934 = vmatmul.mubr.f32.gmra.mrb[0].mxu0 %v3933
      %v3935 = vpop.f32.mrb[0].mxu0
      %v3936 = vadd.f32 %v3848, %v3935
      %v3937 = vpop.f32.mrb[0].mxu0
      %3938 = vmatprep.mubr.f32.mxu0 0.0
      %v3939 = vand.u32 %v3588, 4294901760
      %v3940 = vsub.f32 %v3588, %v3939
      %v3941 = vand.u32 %v3940, 4294901760
      %3942 = vmatmul.mubr.f32.gmra.mrb[0].mxu0 %v3941
      %v3943 = vpop.f32.mrb[0].mxu0
      %v3944 = vadd.f32 %v3855, %v3943
      %v3945 = vpop.f32.mrb[0].mxu0
      %3946 = vmatprep.mubr.f32.mxu0 0.0
      %v3947 = vand.u32 %v3591, 4294901760
      %v3948 = vsub.f32 %v3591, %v3947
      %v3949 = vand.u32 %v3948, 4294901760
      %3950 = vmatmul.mubr.f32.gmra.mrb[0].mxu0 %v3949
      %v3951 = vpop.f32.mrb[0].mxu0
      %v3952 = vadd.f32 %v3862, %v3951
      %v3953 = vpop.f32.mrb[0].mxu0
      %3954 = vdwg.mxu0
      %3955 = vmatprep.subr.mxu0 0.0
      %v3956 = vand.u32 %v3582, 4294901760
      %v3957 = vsub.f32 %v3582, %v3956
      %v3958 = vand.u32 %v3957, 4294901760
      %3959 = vmatpush1.msra.mxu0 %v3958
      %3960 = vmatprep.subr.mxu0 0.0
      %3961 = vmatpush1.msra.mxu0 0.0
      %3962 = vmatprep.subr.mxu0 0.0
      %3963 = vmatpush1.msra.mxu0 0.0
      %3964 = vmatprep.subr.mxu0 0.0
      %3965 = vmatpush1.msra.mxu0 0.0
      %3966 = vmatprep.subr.mxu0 0.0
      %3967 = vmatpush1.msra.mxu0 0.0
      %3968 = vmatprep.subr.mxu0 0.0
      %3969 = vmatpush1.msra.mxu0 0.0
      %3970 = vmatprep.subr.mxu0 0.0
      %3971 = vmatpush1.msra.mxu0 0.0
      %3972 = vmatprep.subr.mxu0 0.0
      %3973 = vmatpush1.msra.mxu0 0.0
      %3974 = vmatprep.subr.mxu0 0.0
      %3975 = vmatpush1.msra.mxu0 0.0
      %3976 = vmatprep.subr.mxu0 0.0
      %3977 = vmatpush1.msra.mxu0 0.0
      %3978 = vmatprep.subr.mxu0 0.0
      %3979 = vmatpush1.msra.mxu0 0.0
      %3980 = vmatprep.subr.mxu0 0.0
      %3981 = vmatpush1.msra.mxu0 0.0
      %3982 = vmatprep.subr.mxu0 0.0
      %3983 = vmatpush1.msra.mxu0 0.0
      %3984 = vmatprep.subr.mxu0 0.0
      %3985 = vmatpush1.msra.mxu0 0.0
      %3986 = vmatprep.subr.mxu0 0.0
      %3987 = vmatpush1.msra.mxu0 0.0
      %3988 = vmatprep.subr.mxu0 0.0
      %3989 = vmatpush1.msra.mxu0 0.0
      %3990 = vmatprep.subr.mxu0 0.0
      %3991 = vmatpush1.msra.mxu0 0.0
      %3992 = vmatprep.subr.mxu0 0.0
      %3993 = vmatpush1.msra.mxu0 0.0
      %3994 = vmatprep.subr.mxu0 0.0
      %3995 = vmatpush1.msra.mxu0 0.0
      %3996 = vmatprep.subr.mxu0 0.0
      %3997 = vmatpush1.msra.mxu0 0.0
      %3998 = vmatprep.subr.mxu0 0.0
      %3999 = vmatpush1.msra.mxu0 0.0
      %4000 = vmatprep.subr.mxu0 0.0
      %4001 = vmatpush1.msra.mxu0 0.0
      %4002 = vmatprep.subr.mxu0 0.0
      %4003 = vmatpush1.msra.mxu0 0.0
      %4004 = vmatprep.subr.mxu0 0.0
      %4005 = vmatpush1.msra.mxu0 0.0
      %4006 = vmatprep.subr.mxu0 0.0
      %4007 = vmatpush1.msra.mxu0 0.0
      %4008 = vmatprep.subr.mxu0 0.0
      %4009 = vmatpush1.msra.mxu0 0.0
      %4010 = vmatprep.subr.mxu0 0.0
      %4011 = vmatpush1.msra.mxu0 0.0
      %4012 = vmatprep.subr.mxu0 0.0
      %4013 = vmatpush1.msra.mxu0 0.0
      %4014 = vmatprep.subr.mxu0 0.0
      %4015 = vmatpush1.msra.mxu0 0.0
      %4016 = vmatprep.subr.mxu0 0.0
      %4017 = vmatpush1.msra.mxu0 0.0
      %4018 = vmatprep.subr.mxu0 0.0
      %4019 = vmatpush1.msra.mxu0 0.0
      %4020 = vmatprep.subr.mxu0 0.0
      %4021 = vmatpush1.msra.mxu0 0.0
      %4022 = vmatprep.mubr.f32.mxu0 0.0
      %v4023 = vand.u32 %v3585, 4294901760
      %4024 = vmatmul.mubr.f32.gmra.mrb[0].mxu0 %v4023
      %v4025 = vpop.f32.mrb[0].mxu0
      %v4026 = vadd.f32 %v3936, %v4025
      %v4027 = vpop.f32.mrb[0].mxu0
      %4028 = vmatprep.mubr.f32.mxu0 0.0
      %v4029 = vand.u32 %v3588, 4294901760
      %4030 = vmatmul.mubr.f32.gmra.mrb[0].mxu0 %v4029
      %v4031 = vpop.f32.mrb[0].mxu0
      %v4032 = vadd.f32 %v3944, %v4031
      %v4033 = vpop.f32.mrb[0].mxu0
      %4034 = vmatprep.mubr.f32.mxu0 0.0
      %v4035 = vand.u32 %v3591, 4294901760
      %4036 = vmatmul.mubr.f32.gmra.mrb[0].mxu0 %v4035
      %v4037 = vpop.f32.mrb[0].mxu0
      %v4038 = vadd.f32 %v3952, %v4037
      %v4039 = vpop.f32.mrb[0].mxu0
      %4040 = vdwg.mxu0
      %4041 = vmatprep.subr.mxu0 0.0
      %v4042 = vand.u32 %v3582, 4294901760
      %4043 = vmatpush1.msra.mxu0 %v4042
      %4044 = vmatprep.subr.mxu0 0.0
      %4045 = vmatpush1.msra.mxu0 0.0
      %4046 = vmatprep.subr.mxu0 0.0
      %4047 = vmatpush1.msra.mxu0 0.0
      %4048 = vmatprep.subr.mxu0 0.0
      %4049 = vmatpush1.msra.mxu0 0.0
      %4050 = vmatprep.subr.mxu0 0.0
      %4051 = vmatpush1.msra.mxu0 0.0
      %4052 = vmatprep.subr.mxu0 0.0
      %4053 = vmatpush1.msra.mxu0 0.0
      %4054 = vmatprep.subr.mxu0 0.0
      %4055 = vmatpush1.msra.mxu0 0.0
      %4056 = vmatprep.subr.mxu0 0.0
      %4057 = vmatpush1.msra.mxu0 0.0
      %4058 = vmatprep.subr.mxu0 0.0
      %4059 = vmatpush1.msra.mxu0 0.0
      %4060 = vmatprep.subr.mxu0 0.0
      %4061 = vmatpush1.msra.mxu0 0.0
      %4062 = vmatprep.subr.mxu0 0.0
      %4063 = vmatpush1.msra.mxu0 0.0
      %4064 = vmatprep.subr.mxu0 0.0
      %4065 = vmatpush1.msra.mxu0 0.0
      %4066 = vmatprep.subr.mxu0 0.0
      %4067 = vmatpush1.msra.mxu0 0.0
      %4068 = vmatprep.subr.mxu0 0.0
      %4069 = vmatpush1.msra.mxu0 0.0
      %4070 = vmatprep.subr.mxu0 0.0
      %4071 = vmatpush1.msra.mxu0 0.0
      %4072 = vmatprep.subr.mxu0 0.0
      %4073 = vmatpush1.msra.mxu0 0.0
      %4074 = vmatprep.subr.mxu0 0.0
      %4075 = vmatpush1.msra.mxu0 0.0
      %4076 = vmatprep.subr.mxu0 0.0
      %4077 = vmatpush1.msra.mxu0 0.0
      %4078 = vmatprep.subr.mxu0 0.0
      %4079 = vmatpush1.msra.mxu0 0.0
      %4080 = vmatprep.subr.mxu0 0.0
      %4081 = vmatpush1.msra.mxu0 0.0
      %4082 = vmatprep.subr.mxu0 0.0
      %4083 = vmatpush1.msra.mxu0 0.0
      %4084 = vmatprep.subr.mxu0 0.0
      %4085 = vmatpush1.msra.mxu0 0.0
      %4086 = vmatprep.subr.mxu0 0.0
      %4087 = vmatpush1.msra.mxu0 0.0
      %4088 = vmatprep.subr.mxu0 0.0
      %4089 = vmatpush1.msra.mxu0 0.0
      %4090 = vmatprep.subr.mxu0 0.0
      %4091 = vmatpush1.msra.mxu0 0.0
      %4092 = vmatprep.subr.mxu0 0.0
      %4093 = vmatpush1.msra.mxu0 0.0
      %4094 = vmatprep.subr.mxu0 0.0
      %4095 = vmatpush1.msra.mxu0 0.0
      %4096 = vmatprep.subr.mxu0 0.0
      %4097 = vmatpush1.msra.mxu0 0.0
      %4098 = vmatprep.subr.mxu0 0.0
      %4099 = vmatpush1.msra.mxu0 0.0
      %4100 = vmatprep.subr.mxu0 0.0
      %4101 = vmatpush1.msra.mxu0 0.0
      %4102 = vmatprep.subr.mxu0 0.0
      %4103 = vmatpush1.msra.mxu0 0.0
      %4104 = vmatprep.subr.mxu0 0.0
      %4105 = vmatpush1.msra.mxu0 0.0
      %4106 = vmatprep.mubr.f32.mxu0 0.0
      %v4107 = vand.u32 %v3585, 4294901760
      %4108 = vmatmul.mubr.f32.gmra.mrb[0].mxu0 %v4107
      %v4109 = vpop.f32.mrb[0].mxu0
      %v4110 = vadd.f32 %v4026, %v4109
      %v4111 = vpop.f32.mrb[0].mxu0
      %4112 = vmatprep.mubr.f32.mxu0 0.0
      %v4113 = vand.u32 %v3588, 4294901760
      %4114 = vmatmul.mubr.f32.gmra.mrb[0].mxu0 %v4113
      %v4115 = vpop.f32.mrb[0].mxu0
      %v4116 = vadd.f32 %v4032, %v4115
      %v4117 = vpop.f32.mrb[0].mxu0
      %4118 = vmatprep.mubr.f32.mxu0 0.0
      %v4119 = vand.u32 %v3591, 4294901760
      %4120 = vmatmul.mubr.f32.gmra.mrb[0].mxu0 %v4119
      %v4121 = vpop.f32.mrb[0].mxu0
      %v4122 = vadd.f32 %v4038, %v4121
      %v4123 = vpop.f32.mrb[0].mxu0
      %4124 = vdwg.mxu0
      %v4125 = vadd.f32 %v3574, %v4110
      %v4126 = vadd.f32 %v3575, %v4116
      %v4127 = vadd.f32 %v3576, %v4122
      %v4128 = vld [vmem:[%s3] sm:$0xff]
      %v4129 = vld [vmem:[%s3 + $0x8] sm:$0xff]
      %v4130 = vld [vmem:[%s3 + $0x10] sm:$0xff]
      %4132 = vset.pattern.permute.xlu0 0
      %4133 = vperm.xlu0 %4132, %v4128
      %v4134 = vpop.permute.xlu0 %4133
      %4137 = vset.pattern.permute.xlu0 0
      %4138 = vperm.xlu0 %4137, %v4129
      %v4139 = vpop.permute.xlu0 %4138
      %4142 = vset.pattern.permute.xlu0 0
      %4143 = vperm.xlu0 %4142, %v4130
      %v4144 = vpop.permute.xlu0 %4143
      %v4146 = vadd.f32 %v4125, %v4134
      %v4147 = vadd.f32 %v4126, %v4139
      %v4148 = vadd.f32 %v4127, %v4144
      %v4149 = vmax.f32 %v4146, 0.0
      %v4150 = vmax.f32 %v4147, 0.0
      %v4151 = vmax.f32 %v4148, 0.0
      %v4152 = vld [vmem:[%s4] sm:$0xff]
      %v4153 = vld [vmem:[%s4 + $0x8] sm:$0xff]
      %v4154 = vld [vmem:[%s4 + $0x10] sm:$0xff]
      %v4155 = vmul.f32 %v4149, %v4152
      %v4156 = vmul.f32 %v4150, %v4153
      %v4157 = vmul.f32 %v4151, %v4154
      %vm4158 = vcmask 130048
      %v4159 = vsel %vm4158, %v4155, 0.0
      %4160 = vadd.xlane.f32.xlu0 %v4159
      %v4161 = vpop.xlane.xlu0 %4160
      %v4162 = vsel %vm4158, %v4156, 0.0
      %4163 = vadd.xlane.f32.xlu0 %v4162
      %v4164 = vpop.xlane.xlu0 %4163
      %v4165 = vsel %vm4158, %v4157, 0.0
      %4166 = vadd.xlane.f32.xlu0 %v4165
      %v4167 = vpop.xlane.xlu0 %4166
      %v4168 = vadd.f32 %v4161, %v4164
      %v4169 = vadd.f32 %v4168, %v4167
      %v4170 = vrot.slane %v4169, 4
      %v4171 = vadd.f32 %v4169, %v4170
      %v4172 = vrot.slane %v4171, 2
      %v4173 = vadd.f32 %v4171, %v4172
      %v4174 = vrot.slane %v4173, 1
      %v4175 = vadd.f32 %v4173, %v4174
      %v4176 = vld [vmem:[#allocation2] sm:$0x1]
      %v4177 = vadd.f32 %v4175, %v4176
      %vm4178 = vcmask 0
      %4179 = vst.msk [vmem:[%s263] sm:$0x1] %vm4178, %v4177
      %p4180 = scmp.lt.s32.totalorder %s19, 1
      %s4181 = scalar_select %p4180, %s19, 1
      %s4182 = scalar_lea.vmem %s6, %s4181
      // Predicated region
      $region45: #{multi_input_cnn_forward.1} parent=43 // pred_check
        %p4183 = pneg %p173
      $region46: #{multi_input_cnn_forward.1} parent=43 // pred_check_branch
        %4185 = sbr.rel (%p4183) target = $region48
      $region47: #{multi_input_cnn_forward.1} parent=43 // pred_region
        _
      $region48: #{multi_input_cnn_forward.1} parent=43 // pred_fallthru
        _
    $region44: #{multi_input_cnn_forward.1} parent=5 // pred_fallthru
      _
    %p4186 = scmp.le.s32.totalorder 2, %s14
    // Predicated region
    $region49: #{multi_input_cnn_forward.1} parent=5 // pred_check
      %p4187 = pneg %p4186
    $region50: #{multi_input_cnn_forward.1} parent=5 // pred_check_branch
      %4189 = sbr.rel (%p4187) target = $region52
    $region51: #{multi_input_cnn_forward.1} parent=5 // pred_region
      %s4190 = ssub.s32 %s14, 2
      // Predicated region
      $region53: #{multi_input_cnn_forward.1} parent=51 // pred_check
        %p4191 = pneg %p179
      $region54: #{multi_input_cnn_forward.1} parent=51 // pred_check_branch
        %4193 = sbr.rel (%p4191) target = $region56
      $region55: #{multi_input_cnn_forward.1} parent=51 // pred_region
        %p4194 = scmp.lt.s32.totalorder %s20, 1
        %s4195 = scalar_select %p4194, %s20, 1
        %s4196 = scalar_lea.vmem %s6, %s4195
      $region56: #{multi_input_cnn_forward.1} parent=51 // pred_fallthru
        _
    $region52: #{multi_input_cnn_forward.1} parent=5 // pred_fallthru
      _
  $region6: #{multi_input_cnn_forward.1} parent=0 // loop_footer
    %s18 = sadd.s32 1, %s14
  $region7: #{multi_input_cnn_forward.1} parent=0 // loop_footer_branch
    %13 = sbr.rel target = $region3
  $region8: #{multi_input_cnn_forward.1} parent=0 // loop_exit
    _

</llo_original>
